<compile_context>
chip_gen: v6e
topology: v6e:2x2x1
jax: 0.10.0
libtpu: 0.0.40
codegen_flags: <defaults>
</compile_context>

<pallas_src>
import functools

import jax
import jax.numpy as jnp
from jax.experimental import pallas as pl
from jax.experimental.pallas import tpu as pltpu


# ----------------------------- hyper-params ---------------------------------
N_VOCAB = 64
N_EMBED = 32
N_HIDDEN_E = 32
N_HIDDEN_G = 32
N_Z = 16
N_HIGHWAY_LAYERS = 2
N_LAYERS_E = 1          # kernel implements single-layer (bi)LSTM
N_LAYERS_G = 1
BATCH = 2
SEQ = 8

B_PAD = 8                                   # sublane-dense batch rows inside the kernel
V_PAD = ((N_VOCAB + 127) // 128) * 128      # lane-dense logits width (64 -> 128)


# ----------------------------- kernel helpers --------------------------------
def _sigmoid(v):
    # exp on the EUP + approx reciprocal on the EUP vrcp slot (keeps the divide
    # off the VALU path of the serial gate chain).
    return pl.reciprocal(1.0 + jnp.exp(-v), approx=True)


def _gate_consts(rows, H):
    """Hoisted lane constants for the fused gate nonlinearity.
    Non-g lanes: sigmoid(x).  g lanes [2H,3H): tanh(x) = 2*sigmoid(2x) - 1."""
    lane = jax.lax.broadcasted_iota(jnp.int32, (rows, 4 * H), 1)
    is_g = (lane >= 2 * H) & (lane < 3 * H)
    scale = jnp.where(is_g, 2.0, 1.0).astype(jnp.float32)   # pre- and post-scale
    off = jnp.where(is_g, 1.0, 0.0).astype(jnp.float32)     # post-offset
    return scale, off


def _lstm_act(pre, scale, off):
    # single sigmoid pass over all 4H lanes (halved EUP work vs tanh+sigmoid)
    return _sigmoid(pre * scale) * scale - off


def _highway(x, hw_w_ref, hw_b_ref, E, n_layers):
    """x: (N, E). hw_w: (L, E, >=3E) packed [gate | non_linear | linear] (lane padded)."""
    for l in range(n_layers):                 # static unrolled, L is small
        pre = jnp.dot(x, hw_w_ref[l], preferred_element_type=jnp.float32) + hw_b_ref[l]
        gate = _sigmoid(pre[:, 0:E])
        non_linear = jnp.maximum(pre[:, E:2 * E], 0.0)
        linear = pre[:, 2 * E:3 * E]
        x = gate * non_linear + (1.0 - gate) * linear
    return x


def _generator_body(g_emb_flat, z, h0, c0, we, wz, whh, b, fc_w, fc_b, gen_h_ref):
    """Generator LSTM + fused (lane-padded) vocab projection.
    g_emb_flat: (S*B, E) time-major (row = t*B + b); z: (B, n_z); h0/c0: (B, H).
    Per-step hidden states go into the VMEM scratch gen_h_ref (S*B, H)."""
    B, H = h0.shape
    S = g_emb_flat.shape[0] // B
    scale, off = _gate_consts(B, H)                                          # hoisted
    # hoisted input projection (one matmul for all timesteps) + constant z/bias term
    pre_emb = jnp.dot(g_emb_flat, we, preferred_element_type=jnp.float32)    # (S*B, 4H)
    pre_zb = jnp.dot(z, wz, preferred_element_type=jnp.float32) + b          # (B, 4H)
    h, c = h0, c0
    for t in range(S):                                                       # static unroll
        pre = (pre_emb[t * B:(t + 1) * B, :] + pre_zb
               + jnp.dot(h, whh, preferred_element_type=jnp.float32))
        act = _lstm_act(pre, scale, off)
        i = act[:, 0:H]
        f = act[:, H:2 * H]
        g = act[:, 2 * H:3 * H]
        o = act[:, 3 * H:4 * H]
        c = f * c + i * g
        h = o * jnp.tanh(c)
        gen_h_ref[t * B:(t + 1) * B, :] = h     # bounded live ranges, no epilogue concat
    logits = jnp.dot(gen_h_ref[...], fc_w, preferred_element_type=jnp.float32) + fc_b
    return logits, h, c


# ----------------------------- Pallas kernels --------------------------------
def vae_fused_kernel(
    n_real,
    x_emb_ref, g_emb_ref, eps_ref, gh0_ref, gc0_ref,
    hw_w_ref, hw_b_ref,
    enc_wih_ref, enc_whh_ref, enc_b_ref,
    wmulv_ref, bmulv_ref,
    gen_we_ref, gen_wz_ref, gen_whh_ref, gen_b_ref,
    fc_w_ref, fc_b_ref,
    logit_ref, misc_ref,
    enc_prex_ref, gen_h_ref,
):
    B = eps_ref.shape[0]                      # padded batch rows (8)
    S = x_emb_ref.shape[0] // B
    E = x_emb_ref.shape[1]
    HE = enc_whh_ref.shape[0] // 2
    NZ = eps_ref.shape[1]
    HG = gen_whh_ref.shape[0]

    # ---- highway on encoder embeddings (S*B, E) ----
    xh = _highway(x_emb_ref[...], hw_w_ref, hw_b_ref, E, hw_w_ref.shape[0])

    # ---- encoder bi-LSTM ----
    # fwd|bwd input projections fused into ONE (S*B,E)x(E,8HE) matmul
    pre_all = (jnp.dot(xh, enc_wih_ref[...], preferred_element_type=jnp.float32)
               + enc_b_ref[...])                                             # (S*B, 8HE)
    # one-time prologue reorder (off the serial chain): per-step contiguous
    # [fwd(t) ; bwd(S-1-t)] blocks written into VMEM scratch.
    for t in range(S):
        r = t * 2 * B
        enc_prex_ref[r:r + B, :] = pre_all[t * B:(t + 1) * B, 0:4 * HE]
        enc_prex_ref[r + B:r + 2 * B, :] = pre_all[(S - 1 - t) * B:(S - t) * B, 4 * HE:8 * HE]

    scale_e, off_e = _gate_consts(2 * B, HE)                                 # hoisted
    # direction mask: fwd state lives in cols [0:HE) of rows [0:B),
    #                 bwd state lives in cols [HE:2HE) of rows [B:2B)
    rr = jax.lax.broadcasted_iota(jnp.int32, (2 * B, 2 * HE), 0)
    cc = jax.lax.broadcasted_iota(jnp.int32, (2 * B, 2 * HE), 1)
    dir_mask = jnp.where(((rr < B) & (cc < HE)) | ((rr >= B) & (cc >= HE)),
                         1.0, 0.0).astype(jnp.float32)

    whh = enc_whh_ref[...]                    # (2HE, 4HE) = [whh_fwd ; whh_bwd]
    h_wide = jnp.zeros((2 * B, 2 * HE), jnp.float32)
    c = jnp.zeros((2 * B, HE), jnp.float32)
    for t in range(S):                        # static unroll; one fused dot per step
        r = t * 2 * B
        pre = enc_prex_ref[r:r + 2 * B, :] + jnp.dot(
            h_wide, whh, preferred_element_type=jnp.float32)                 # (2B, 4HE)
        act = _lstm_act(pre, scale_e, off_e)
        i = act[:, 0:HE]
        f = act[:, HE:2 * HE]
        g = act[:, 2 * HE:3 * HE]
        o = act[:, 3 * HE:4 * HE]
        c = f * c + i * g
        h_new = o * jnp.tanh(c)                                              # (2B, HE)
        h_wide = jnp.concatenate([h_new, h_new], axis=1) * dir_mask
    # [h_fwd_final | h_bwd_final]: complementary halves of h_wide are zero
    e_hidden = h_wide[0:B, :] + h_wide[B:2 * B, :]                           # (B, 2HE)

    # ---- latent head (mu|logvar fused into one matmul) + reparam + KLD ----
    mulv = (jnp.dot(e_hidden, wmulv_ref[...], preferred_element_type=jnp.float32)
            + bmulv_ref[...])                                                # (B, 2NZ)
    mu = mulv[:, 0:NZ]
    logvar = mulv[:, NZ:2 * NZ]
    z = mu + eps_ref[...] * jnp.exp(0.5 * logvar)
    term = logvar - mu * mu - jnp.exp(logvar) + 1.0
    row = jax.lax.broadcasted_iota(jnp.int32, (B, NZ), 0)
    term = jnp.where(row < n_real, term, 0.0)      # exclude batch-pad rows from the mean
    kld11 = jnp.sum(jnp.sum(term, axis=1, keepdims=True),
                    axis=0, keepdims=True) * (-0.5 / n_real)                 # (1, 1)

    # ---- generator LSTM + fused vocab projection ----
    logits, hT, cT = _generator_body(
        g_emb_ref[...], z, gh0_ref[...], gc0_ref[...],
        gen_we_ref[...], gen_wz_ref[...], gen_whh_ref[...], gen_b_ref[...],
        fc_w_ref[...], fc_b_ref[...], gen_h_ref)
    logit_ref[...] = logits
    # lane-dense packed epilogue output: [hT | cT | KLD | 0] -> single (B,128) store
    misc_ref[...] = jnp.concatenate(
        [hT, cT, jnp.broadcast_to(kld11, (B, HG)),
         jnp.zeros((B, HG), jnp.float32)], axis=1)


def generator_kernel(g_emb_ref, z_ref, gh0_ref, gc0_ref,
                     gen_we_ref, gen_wz_ref, gen_whh_ref, gen_b_ref,
                     fc_w_ref, fc_b_ref,
                     logit_ref, misc_ref, gen_h_ref):
    B, HG = gh0_ref.shape
    logits, hT, cT = _generator_body(
        g_emb_ref[...], z_ref[...], gh0_ref[...], gc0_ref[...],
        gen_we_ref[...], gen_wz_ref[...], gen_whh_ref[...], gen_b_ref[...],
        fc_w_ref[...], fc_b_ref[...], gen_h_ref)
    logit_ref[...] = logits
    misc_ref[...] = jnp.concatenate(
        [hT, cT, jnp.zeros((B, 2 * HG), jnp.float32)], axis=1)


# ----------------------------- wrapper ----------------------------------------
def _pad_rows(a, rows):
    return jnp.pad(a, ((0, rows - a.shape[0]),) + ((0, 0),) * (a.ndim - 1))


def vae_forward(params, x_tokens, g_inp_tokens, eps, z=None, g_hidden=None):
    emb = params["embedding"]
    B, S = g_inp_tokens.shape
    Bp = B_PAD
    # pad the cheap int32 token arrays to a full 8-row sublane tile, gather time-major
    g_tok = jnp.pad(g_inp_tokens, ((0, Bp - B), (0, 0)))
    g_emb_flat = emb[g_tok.T].reshape(S * Bp, N_EMBED)

    if g_hidden is None:
        gh0 = jnp.zeros((Bp, N_HIDDEN_G), jnp.float32)
        gc0 = jnp.zeros((Bp, N_HIDDEN_G), jnp.float32)
    else:
        gh0 = _pad_rows(g_hidden[0][0], Bp)
        gc0 = _pad_rows(g_hidden[1][0], Bp)

    if z is None:
        x_tok = jnp.pad(x_tokens, ((0, Bp - B), (0, 0)))
        x_emb_flat = emb[x_tok.T].reshape(S * Bp, N_EMBED)
        eps_p = _pad_rows(eps, Bp)
        logit_pad, misc = pl.pallas_call(
            functools.partial(vae_fused_kernel, B),
            out_shape=(jax.ShapeDtypeStruct((S * Bp, V_PAD), jnp.float32),
                       jax.ShapeDtypeStruct((Bp, 4 * N_HIDDEN_G), jnp.float32)),
            scratch_shapes=[pltpu.VMEM((S * 2 * Bp, 4 * N_HIDDEN_E), jnp.float32),
                            pltpu.VMEM((S * Bp, N_HIDDEN_G), jnp.float32)],
        )(x_emb_flat, g_emb_flat, eps_p, gh0, gc0,
          params["hw_w"], params["hw_b"],
          params["enc_wih"], params["enc_whh"], params["enc_b"],
          params["wmulv"], params["bmulv"],
          params["gen_we"], params["gen_wz"], params["gen_whh"], params["gen_b"],
          params["fc_w"], params["fc_b"])
        kld = misc[0, 2 * N_HIDDEN_G]
    else:
        z_p = _pad_rows(z, Bp)
        logit_pad, misc = pl.pallas_call(
            generator_kernel,
            out_shape=(jax.ShapeDtypeStruct((S * Bp, V_PAD), jnp.float32),
                       jax.ShapeDtypeStruct((Bp, 4 * N_HIDDEN_G), jnp.float32)),
            scratch_shapes=[pltpu.VMEM((S * Bp, N_HIDDEN_G), jnp.float32)],
        )(g_emb_flat, z_p, gh0, gc0,
          params["gen_we"], params["gen_wz"], params["gen_whh"], params["gen_b"],
          params["fc_w"], params["fc_b"])
        kld = None

    # slice off lane/batch padding (tiny XLA glue)
    hT = misc[:B, 0:N_HIDDEN_G]
    cT = misc[:B, N_HIDDEN_G:2 * N_HIDDEN_G]
    logit = (logit_pad[:, :N_VOCAB].reshape(S, Bp, N_VOCAB)[:, :B]
             .transpose(1, 0, 2))
    return logit, (hT[None], cT[None]), kld


# ----------------------------- param init -------------------------------------
def _pad_lanes(a, width):
    pad = width - a.shape[-1]
    if pad <= 0:
        return a
    return jnp.pad(a, [(0, 0)] * (a.ndim - 1) + [(0, pad)])


def init_params(key):
    ks = iter(jax.random.split(key, 32))
    s = 0.1

    def rnd(shape):
        return (s * jax.random.normal(next(ks), shape)).astype(jnp.float32)

    E, HE, HG, NZ, V, L = N_EMBED, N_HIDDEN_E, N_HIDDEN_G, N_Z, N_VOCAB, N_HIGHWAY_LAYERS
    return {
        "embedding": rnd((V, E)),
        # highway weights packed per layer as [gate | non_linear | linear], lane-padded to 128
        "hw_w": _pad_lanes(rnd((L, E, 3 * E)), 128),
        "hw_b": _pad_lanes(rnd((L, 1, 3 * E)), 128),
        # encoder bi-LSTM (single layer), gate order i,f,g,o (PyTorch):
        #   W_ih both directions packed as (E, 8*HE) = [fwd 4HE | bwd 4HE]
        #   W_hh stacked block-row-wise as (2*HE, 4*HE) = [whh_fwd ; whh_bwd]
        "enc_wih": rnd((E, 8 * HE)),
        "enc_b": rnd((1, 8 * HE)),
        "enc_whh": rnd((2 * HE, 4 * HE)),
        # latent heads fused into one matmul: [W_mu | W_logvar]
        "wmulv": rnd((2 * HE, 2 * NZ)),
        "bmulv": rnd((1, 2 * NZ)),
        # generator LSTM: input weight split into embedding part and z part
        "gen_we": rnd((E, 4 * HG)), "gen_wz": rnd((NZ, 4 * HG)),
        "gen_whh": rnd((HG, 4 * HG)), "gen_b": rnd((1, 4 * HG)),
        # vocab projection, lane-padded so logit stores are unmasked/lane-dense
        "fc_w": _pad_lanes(rnd((HG, V)), V_PAD),
        "fc_b": _pad_lanes(rnd((1, V)), V_PAD),
    }


# ----------------------------- main --------------------------------------------
if __name__ == "__main__":
    key = jax.random.PRNGKey(0)
    kp, kx, kg, ke = jax.random.split(key, 4)

    params = init_params(kp)
    x_tokens = jax.random.randint(kx, (BATCH, SEQ), 0, N_VOCAB, dtype=jnp.int32)
    g_inp_tokens = jax.random.randint(kg, (BATCH, SEQ), 0, N_VOCAB, dtype=jnp.int32)
    # TODO(synk): torch.randn RNG stream is not reproducible in JAX; deterministic
    # jax.random.normal noise is used for the reparameterization instead.
    eps = jax.random.normal(ke, (BATCH, N_Z), dtype=jnp.float32)

    fwd = jax.jit(functools.partial(vae_forward, params))
    logit, g_hidden, kld = fwd(x_tokens, g_inp_tokens, eps)
    jax.block_until_ready((logit, g_hidden, kld))

    assert logit.shape == (BATCH, SEQ, N_VOCAB)
    assert g_hidden[0].shape == (N_LAYERS_G, BATCH, N_HIDDEN_G)
    assert g_hidden[1].shape == (N_LAYERS_G, BATCH, N_HIDDEN_G)
    assert kld.shape == ()
    assert bool(jnp.all(jnp.isfinite(logit))) and bool(jnp.isfinite(kld))

    # also exercise the z-provided / decode path (generator-only fused kernel)
    logit2, g_hidden2, kld2 = vae_forward(params, x_tokens, g_inp_tokens, eps,
                                          z=eps, g_hidden=g_hidden)
    jax.block_until_ready((logit2, g_hidden2))
    assert logit2.shape == (BATCH, SEQ, N_VOCAB)
    assert kld2 is None
    assert bool(jnp.all(jnp.isfinite(logit2)))

    print("KERNEL_OK")
</pallas_src>

<mosaic_0001>
module attributes {stable_mosaic.version = 11 : i64} {
  func.func @vae_fused_kernel(%arg0: memref<64x32xf32, #tpu.memory_space<vmem>>, %arg1: memref<64x32xf32, #tpu.memory_space<vmem>>, %arg2: memref<8x16xf32, #tpu.memory_space<vmem>>, %arg3: memref<8x32xf32, #tpu.memory_space<vmem>>, %arg4: memref<8x32xf32, #tpu.memory_space<vmem>>, %arg5: memref<2x32x128xf32, #tpu.memory_space<vmem>>, %arg6: memref<2x1x128xf32, #tpu.memory_space<vmem>>, %arg7: memref<32x256xf32, #tpu.memory_space<vmem>>, %arg8: memref<64x128xf32, #tpu.memory_space<vmem>>, %arg9: memref<1x256xf32, #tpu.memory_space<vmem>>, %arg10: memref<64x32xf32, #tpu.memory_space<vmem>>, %arg11: memref<1x32xf32, #tpu.memory_space<vmem>>, %arg12: memref<32x128xf32, #tpu.memory_space<vmem>>, %arg13: memref<16x128xf32, #tpu.memory_space<vmem>>, %arg14: memref<32x128xf32, #tpu.memory_space<vmem>>, %arg15: memref<1x128xf32, #tpu.memory_space<vmem>>, %arg16: memref<32x128xf32, #tpu.memory_space<vmem>>, %arg17: memref<1x128xf32, #tpu.memory_space<vmem>>, %arg18: memref<64x128xf32, #tpu.memory_space<vmem>>, %arg19: memref<8x128xf32, #tpu.memory_space<vmem>>, %arg20: memref<128x128xf32, #tpu.memory_space<vmem>>, %arg21: memref<64x32xf32, #tpu.memory_space<vmem>>) attributes {dimension_semantics = [], scalar_prefetch = 0 : i64, scratch_operands = 2 : i64, tpu.core_type = #tpu.core_type<tc>} {
    %c0 = arith.constant 0 : index
    %c0_0 = arith.constant 0 : index
    %0 = vector.load %arg0[%c0, %c0_0] : memref<64x32xf32, #tpu.memory_space<vmem>>, vector<64x32xf32>
    %c0_1 = arith.constant 0 : index
    %c0_2 = arith.constant 0 : index
    %c0_3 = arith.constant 0 : index
    %1 = vector.load %arg5[%c0_1, %c0_2, %c0_3] : memref<2x32x128xf32, #tpu.memory_space<vmem>>, vector<1x32x128xf32>
    %2 = vector.shape_cast %1 : vector<1x32x128xf32> to vector<32x128xf32>
    %cst = arith.constant dense<0.000000e+00> : vector<64x128xf32>
    %3 = tpu.matmul %0, %2, %cst {dimension_numbers = #tpu.dot_dimension_numbers<[1], [0], [0], [1], [0, 0, 1, 1], [], []>} : vector<64x32xf32>, vector<32x128xf32>, vector<64x128xf32> -> vector<64x128xf32>
    %c0_4 = arith.constant 0 : index
    %c0_5 = arith.constant 0 : index
    %c0_6 = arith.constant 0 : index
    %4 = vector.load %arg6[%c0_4, %c0_5, %c0_6] : memref<2x1x128xf32, #tpu.memory_space<vmem>>, vector<1x1x128xf32>
    %5 = vector.shape_cast %4 : vector<1x1x128xf32> to vector<1x128xf32>
    %6 = vector.broadcast %5 : vector<1x128xf32> to vector<64x128xf32>
    %7 = arith.addf %3, %6 : vector<64x128xf32>
    %8 = vector.extract_strided_slice %7 {offsets = [0, 0], sizes = [64, 32], strides = [1, 1]} : vector<64x128xf32> to vector<64x32xf32>
    %cst_7 = arith.constant 0.000000e+00 : f32
    %9 = vector.broadcast %cst_7 : f32 to vector<64x32xf32>
    %10 = arith.subf %9, %8 : vector<64x32xf32>
    %11 = math.exp %10 : vector<64x32xf32>
    %cst_8 = arith.constant 1.000000e+00 : f32
    %12 = vector.broadcast %cst_8 : f32 to vector<64x32xf32>
    %13 = arith.addf %12, %11 : vector<64x32xf32>
    %14 = tpu.reciprocal %13 {approx = true} : vector<64x32xf32> -> vector<64x32xf32>
    %15 = vector.extract_strided_slice %7 {offsets = [0, 32], sizes = [64, 32], strides = [1, 1]} : vector<64x128xf32> to vector<64x32xf32>
    %cst_9 = arith.constant 0.000000e+00 : f32
    %16 = vector.broadcast %cst_9 : f32 to vector<64x32xf32>
    %17 = arith.maximumf %15, %16 : vector<64x32xf32>
    %18 = vector.extract_strided_slice %7 {offsets = [0, 64], sizes = [64, 32], strides = [1, 1]} : vector<64x128xf32> to vector<64x32xf32>
    %19 = arith.mulf %14, %17 : vector<64x32xf32>
    %cst_10 = arith.constant 1.000000e+00 : f32
    %20 = vector.broadcast %cst_10 : f32 to vector<64x32xf32>
    %21 = arith.subf %20, %14 : vector<64x32xf32>
    %22 = arith.mulf %21, %18 : vector<64x32xf32>
    %23 = arith.addf %19, %22 : vector<64x32xf32>
    %c1 = arith.constant 1 : index
    %c0_11 = arith.constant 0 : index
    %c0_12 = arith.constant 0 : index
    %24 = vector.load %arg5[%c1, %c0_11, %c0_12] : memref<2x32x128xf32, #tpu.memory_space<vmem>>, vector<1x32x128xf32>
    %25 = vector.shape_cast %24 : vector<1x32x128xf32> to vector<32x128xf32>
    %cst_13 = arith.constant dense<0.000000e+00> : vector<64x128xf32>
    %26 = tpu.matmul %23, %25, %cst_13 {dimension_numbers = #tpu.dot_dimension_numbers<[1], [0], [0], [1], [0, 0, 1, 1], [], []>} : vector<64x32xf32>, vector<32x128xf32>, vector<64x128xf32> -> vector<64x128xf32>
    %c1_14 = arith.constant 1 : index
    %c0_15 = arith.constant 0 : index
    %c0_16 = arith.constant 0 : index
    %27 = vector.load %arg6[%c1_14, %c0_15, %c0_16] : memref<2x1x128xf32, #tpu.memory_space<vmem>>, vector<1x1x128xf32>
    %28 = vector.shape_cast %27 : vector<1x1x128xf32> to vector<1x128xf32>
    %29 = vector.broadcast %28 : vector<1x128xf32> to vector<64x128xf32>
    %30 = arith.addf %26, %29 : vector<64x128xf32>
    %31 = vector.extract_strided_slice %30 {offsets = [0, 0], sizes = [64, 32], strides = [1, 1]} : vector<64x128xf32> to vector<64x32xf32>
    %cst_17 = arith.constant 0.000000e+00 : f32
    %32 = vector.broadcast %cst_17 : f32 to vector<64x32xf32>
    %33 = arith.subf %32, %31 : vector<64x32xf32>
    %34 = math.exp %33 : vector<64x32xf32>
    %cst_18 = arith.constant 1.000000e+00 : f32
    %35 = vector.broadcast %cst_18 : f32 to vector<64x32xf32>
    %36 = arith.addf %35, %34 : vector<64x32xf32>
    %37 = tpu.reciprocal %36 {approx = true} : vector<64x32xf32> -> vector<64x32xf32>
    %38 = vector.extract_strided_slice %30 {offsets = [0, 32], sizes = [64, 32], strides = [1, 1]} : vector<64x128xf32> to vector<64x32xf32>
    %cst_19 = arith.constant 0.000000e+00 : f32
    %39 = vector.broadcast %cst_19 : f32 to vector<64x32xf32>
    %40 = arith.maximumf %38, %39 : vector<64x32xf32>
    %41 = vector.extract_strided_slice %30 {offsets = [0, 64], sizes = [64, 32], strides = [1, 1]} : vector<64x128xf32> to vector<64x32xf32>
    %42 = arith.mulf %37, %40 : vector<64x32xf32>
    %cst_20 = arith.constant 1.000000e+00 : f32
    %43 = vector.broadcast %cst_20 : f32 to vector<64x32xf32>
    %44 = arith.subf %43, %37 : vector<64x32xf32>
    %45 = arith.mulf %44, %41 : vector<64x32xf32>
    %46 = arith.addf %42, %45 : vector<64x32xf32>
    %c0_21 = arith.constant 0 : index
    %c0_22 = arith.constant 0 : index
    %47 = vector.load %arg7[%c0_21, %c0_22] : memref<32x256xf32, #tpu.memory_space<vmem>>, vector<32x256xf32>
    %cst_23 = arith.constant dense<0.000000e+00> : vector<64x256xf32>
    %48 = tpu.matmul %46, %47, %cst_23 {dimension_numbers = #tpu.dot_dimension_numbers<[1], [0], [0], [1], [0, 0, 1, 1], [], []>} : vector<64x32xf32>, vector<32x256xf32>, vector<64x256xf32> -> vector<64x256xf32>
    %c0_24 = arith.constant 0 : index
    %c0_25 = arith.constant 0 : index
    %49 = vector.load %arg9[%c0_24, %c0_25] : memref<1x256xf32, #tpu.memory_space<vmem>>, vector<1x256xf32>
    %50 = vector.broadcast %49 : vector<1x256xf32> to vector<64x256xf32>
    %51 = arith.addf %48, %50 : vector<64x256xf32>
    %52 = vector.extract_strided_slice %51 {offsets = [0, 0], sizes = [8, 128], strides = [1, 1]} : vector<64x256xf32> to vector<8x128xf32>
    %c0_26 = arith.constant 0 : index
    %c0_27 = arith.constant 0 : index
    %53 = vector.load %arg20[%c0_26, %c0_27] : memref<128x128xf32, #tpu.memory_space<vmem>>, vector<8x128xf32>
    tpu.vector_store %arg20[%c0_26, %c0_27], %52 {strides = array<i32>} : memref<128x128xf32, #tpu.memory_space<vmem>>, vector<8x128xf32>,
    %54 = vector.extract_strided_slice %51 {offsets = [56, 128], sizes = [8, 128], strides = [1, 1]} : vector<64x256xf32> to vector<8x128xf32>
    %c8 = arith.constant 8 : index
    %c0_28 = arith.constant 0 : index
    %55 = vector.load %arg20[%c8, %c0_28] : memref<128x128xf32, #tpu.memory_space<vmem>>, vector<8x128xf32>
    tpu.vector_store %arg20[%c8, %c0_28], %54 {strides = array<i32>} : memref<128x128xf32, #tpu.memory_space<vmem>>, vector<8x128xf32>,
    %56 = vector.extract_strided_slice %51 {offsets = [8, 0], sizes = [8, 128], strides = [1, 1]} : vector<64x256xf32> to vector<8x128xf32>
    %c16 = arith.constant 16 : index
    %c0_29 = arith.constant 0 : index
    %57 = vector.load %arg20[%c16, %c0_29] : memref<128x128xf32, #tpu.memory_space<vmem>>, vector<8x128xf32>
    tpu.vector_store %arg20[%c16, %c0_29], %56 {strides = array<i32>} : memref<128x128xf32, #tpu.memory_space<vmem>>, vector<8x128xf32>,
    %58 = vector.extract_strided_slice %51 {offsets = [48, 128], sizes = [8, 128], strides = [1, 1]} : vector<64x256xf32> to vector<8x128xf32>
    %c24 = arith.constant 24 : index
    %c0_30 = arith.constant 0 : index
    %59 = vector.load %arg20[%c24, %c0_30] : memref<128x128xf32, #tpu.memory_space<vmem>>, vector<8x128xf32>
    tpu.vector_store %arg20[%c24, %c0_30], %58 {strides = array<i32>} : memref<128x128xf32, #tpu.memory_space<vmem>>, vector<8x128xf32>,
    %60 = vector.extract_strided_slice %51 {offsets = [16, 0], sizes = [8, 128], strides = [1, 1]} : vector<64x256xf32> to vector<8x128xf32>
    %c32 = arith.constant 32 : index
    %c0_31 = arith.constant 0 : index
    %61 = vector.load %arg20[%c32, %c0_31] : memref<128x128xf32, #tpu.memory_space<vmem>>, vector<8x128xf32>
    tpu.vector_store %arg20[%c32, %c0_31], %60 {strides = array<i32>} : memref<128x128xf32, #tpu.memory_space<vmem>>, vector<8x128xf32>,
    %62 = vector.extract_strided_slice %51 {offsets = [40, 128], sizes = [8, 128], strides = [1, 1]} : vector<64x256xf32> to vector<8x128xf32>
    %c40 = arith.constant 40 : index
    %c0_32 = arith.constant 0 : index
    %63 = vector.load %arg20[%c40, %c0_32] : memref<128x128xf32, #tpu.memory_space<vmem>>, vector<8x128xf32>
    tpu.vector_store %arg20[%c40, %c0_32], %62 {strides = array<i32>} : memref<128x128xf32, #tpu.memory_space<vmem>>, vector<8x128xf32>,
    %64 = vector.extract_strided_slice %51 {offsets = [24, 0], sizes = [8, 128], strides = [1, 1]} : vector<64x256xf32> to vector<8x128xf32>
    %c48 = arith.constant 48 : index
    %c0_33 = arith.constant 0 : index
    %65 = vector.load %arg20[%c48, %c0_33] : memref<128x128xf32, #tpu.memory_space<vmem>>, vector<8x128xf32>
    tpu.vector_store %arg20[%c48, %c0_33], %64 {strides = array<i32>} : memref<128x128xf32, #tpu.memory_space<vmem>>, vector<8x128xf32>,
    %66 = vector.extract_strided_slice %51 {offsets = [32, 128], sizes = [8, 128], strides = [1, 1]} : vector<64x256xf32> to vector<8x128xf32>
    %c56 = arith.constant 56 : index
    %c0_34 = arith.constant 0 : index
    %67 = vector.load %arg20[%c56, %c0_34] : memref<128x128xf32, #tpu.memory_space<vmem>>, vector<8x128xf32>
    tpu.vector_store %arg20[%c56, %c0_34], %66 {strides = array<i32>} : memref<128x128xf32, #tpu.memory_space<vmem>>, vector<8x128xf32>,
    %68 = vector.extract_strided_slice %51 {offsets = [32, 0], sizes = [8, 128], strides = [1, 1]} : vector<64x256xf32> to vector<8x128xf32>
    %c64 = arith.constant 64 : index
    %c0_35 = arith.constant 0 : index
    %69 = vector.load %arg20[%c64, %c0_35] : memref<128x128xf32, #tpu.memory_space<vmem>>, vector<8x128xf32>
    tpu.vector_store %arg20[%c64, %c0_35], %68 {strides = array<i32>} : memref<128x128xf32, #tpu.memory_space<vmem>>, vector<8x128xf32>,
    %70 = vector.extract_strided_slice %51 {offsets = [24, 128], sizes = [8, 128], strides = [1, 1]} : vector<64x256xf32> to vector<8x128xf32>
    %c72 = arith.constant 72 : index
    %c0_36 = arith.constant 0 : index
    %71 = vector.load %arg20[%c72, %c0_36] : memref<128x128xf32, #tpu.memory_space<vmem>>, vector<8x128xf32>
    tpu.vector_store %arg20[%c72, %c0_36], %70 {strides = array<i32>} : memref<128x128xf32, #tpu.memory_space<vmem>>, vector<8x128xf32>,
    %72 = vector.extract_strided_slice %51 {offsets = [40, 0], sizes = [8, 128], strides = [1, 1]} : vector<64x256xf32> to vector<8x128xf32>
    %c80 = arith.constant 80 : index
    %c0_37 = arith.constant 0 : index
    %73 = vector.load %arg20[%c80, %c0_37] : memref<128x128xf32, #tpu.memory_space<vmem>>, vector<8x128xf32>
    tpu.vector_store %arg20[%c80, %c0_37], %72 {strides = array<i32>} : memref<128x128xf32, #tpu.memory_space<vmem>>, vector<8x128xf32>,
    %74 = vector.extract_strided_slice %51 {offsets = [16, 128], sizes = [8, 128], strides = [1, 1]} : vector<64x256xf32> to vector<8x128xf32>
    %c88 = arith.constant 88 : index
    %c0_38 = arith.constant 0 : index
    %75 = vector.load %arg20[%c88, %c0_38] : memref<128x128xf32, #tpu.memory_space<vmem>>, vector<8x128xf32>
    tpu.vector_store %arg20[%c88, %c0_38], %74 {strides = array<i32>} : memref<128x128xf32, #tpu.memory_space<vmem>>, vector<8x128xf32>,
    %76 = vector.extract_strided_slice %51 {offsets = [48, 0], sizes = [8, 128], strides = [1, 1]} : vector<64x256xf32> to vector<8x128xf32>
    %c96 = arith.constant 96 : index
    %c0_39 = arith.constant 0 : index
    %77 = vector.load %arg20[%c96, %c0_39] : memref<128x128xf32, #tpu.memory_space<vmem>>, vector<8x128xf32>
    tpu.vector_store %arg20[%c96, %c0_39], %76 {strides = array<i32>} : memref<128x128xf32, #tpu.memory_space<vmem>>, vector<8x128xf32>,
    %78 = vector.extract_strided_slice %51 {offsets = [8, 128], sizes = [8, 128], strides = [1, 1]} : vector<64x256xf32> to vector<8x128xf32>
    %c104 = arith.constant 104 : index
    %c0_40 = arith.constant 0 : index
    %79 = vector.load %arg20[%c104, %c0_40] : memref<128x128xf32, #tpu.memory_space<vmem>>, vector<8x128xf32>
    tpu.vector_store %arg20[%c104, %c0_40], %78 {strides = array<i32>} : memref<128x128xf32, #tpu.memory_space<vmem>>, vector<8x128xf32>,
    %80 = vector.extract_strided_slice %51 {offsets = [56, 0], sizes = [8, 128], strides = [1, 1]} : vector<64x256xf32> to vector<8x128xf32>
    %c112 = arith.constant 112 : index
    %c0_41 = arith.constant 0 : index
    %81 = vector.load %arg20[%c112, %c0_41] : memref<128x128xf32, #tpu.memory_space<vmem>>, vector<8x128xf32>
    tpu.vector_store %arg20[%c112, %c0_41], %80 {strides = array<i32>} : memref<128x128xf32, #tpu.memory_space<vmem>>, vector<8x128xf32>,
    %82 = vector.extract_strided_slice %51 {offsets = [0, 128], sizes = [8, 128], strides = [1, 1]} : vector<64x256xf32> to vector<8x128xf32>
    %c120 = arith.constant 120 : index
    %c0_42 = arith.constant 0 : index
    %83 = vector.load %arg20[%c120, %c0_42] : memref<128x128xf32, #tpu.memory_space<vmem>>, vector<8x128xf32>
    tpu.vector_store %arg20[%c120, %c0_42], %82 {strides = array<i32>} : memref<128x128xf32, #tpu.memory_space<vmem>>, vector<8x128xf32>,
    %84 = tpu.iota {dimensions = array<i32: 1>} : vector<16x128xi32>
    %c64_i32 = arith.constant 64 : i32
    %85 = vector.broadcast %c64_i32 : i32 to vector<16x128xi32>
    %86 = arith.cmpi sge, %84, %85 : vector<16x128xi32>
    %c96_i32 = arith.constant 96 : i32
    %87 = vector.broadcast %c96_i32 : i32 to vector<16x128xi32>
    %88 = arith.cmpi slt, %84, %87 : vector<16x128xi32>
    %89 = arith.andi %86, %88 : vector<16x128xi1>
    %cst_43 = arith.constant 2.000000e+00 : f32
    %cst_44 = arith.constant 1.000000e+00 : f32
    %90 = vector.broadcast %cst_43 : f32 to vector<16x128xf32>
    %91 = vector.broadcast %cst_44 : f32 to vector<16x128xf32>
    %92 = arith.select %89, %90, %91 : vector<16x128xi1>, vector<16x128xf32>
    %cst_45 = arith.constant 1.000000e+00 : f32
    %cst_46 = arith.constant 0.000000e+00 : f32
    %93 = vector.broadcast %cst_45 : f32 to vector<16x128xf32>
    %94 = vector.broadcast %cst_46 : f32 to vector<16x128xf32>
    %95 = arith.select %89, %93, %94 : vector<16x128xi1>, vector<16x128xf32>
    %96 = tpu.iota {dimensions = array<i32: 0>} : vector<16x64xi32>
    %97 = tpu.iota {dimensions = array<i32: 1>} : vector<16x64xi32>
    %c8_i32 = arith.constant 8 : i32
    %98 = vector.broadcast %c8_i32 : i32 to vector<16x64xi32>
    %99 = arith.cmpi slt, %96, %98 : vector<16x64xi32>
    %c32_i32 = arith.constant 32 : i32
    %100 = vector.broadcast %c32_i32 : i32 to vector<16x64xi32>
    %101 = arith.cmpi slt, %97, %100 : vector<16x64xi32>
    %102 = arith.andi %99, %101 : vector<16x64xi1>
    %c8_i32_47 = arith.constant 8 : i32
    %103 = vector.broadcast %c8_i32_47 : i32 to vector<16x64xi32>
    %104 = arith.cmpi sge, %96, %103 : vector<16x64xi32>
    %c32_i32_48 = arith.constant 32 : i32
    %105 = vector.broadcast %c32_i32_48 : i32 to vector<16x64xi32>
    %106 = arith.cmpi sge, %97, %105 : vector<16x64xi32>
    %107 = arith.andi %104, %106 : vector<16x64xi1>
    %108 = arith.ori %102, %107 : vector<16x64xi1>
    %cst_49 = arith.constant 1.000000e+00 : f32
    %cst_50 = arith.constant 0.000000e+00 : f32
    %109 = vector.broadcast %cst_49 : f32 to vector<16x64xf32>
    %110 = vector.broadcast %cst_50 : f32 to vector<16x64xf32>
    %111 = arith.select %108, %109, %110 : vector<16x64xi1>, vector<16x64xf32>
    %c0_51 = arith.constant 0 : index
    %c0_52 = arith.constant 0 : index
    %112 = vector.load %arg8[%c0_51, %c0_52] : memref<64x128xf32, #tpu.memory_space<vmem>>, vector<64x128xf32>
    %cst_53 = arith.constant 0.000000e+00 : f32
    %113 = vector.broadcast %cst_53 : f32 to vector<16x64xf32>
    %cst_54 = arith.constant 0.000000e+00 : f32
    %114 = vector.broadcast %cst_54 : f32 to vector<16x32xf32>
    %c0_55 = arith.constant 0 : index
    %c0_56 = arith.constant 0 : index
    %115 = vector.load %arg20[%c0_55, %c0_56] : memref<128x128xf32, #tpu.memory_space<vmem>>, vector<16x128xf32>
    %cst_57 = arith.constant dense<0.000000e+00> : vector<16x128xf32>
    %116 = tpu.matmul %113, %112, %cst_57 {dimension_numbers = #tpu.dot_dimension_numbers<[1], [0], [0], [1], [0, 0, 1, 1], [], []>} : vector<16x64xf32>, vector<64x128xf32>, vector<16x128xf32> -> vector<16x128xf32>
    %117 = arith.addf %115, %116 : vector<16x128xf32>
    %118 = arith.mulf %117, %92 : vector<16x128xf32>
    %cst_58 = arith.constant 0.000000e+00 : f32
    %119 = vector.broadcast %cst_58 : f32 to vector<16x128xf32>
    %120 = arith.subf %119, %118 : vector<16x128xf32>
    %121 = math.exp %120 : vector<16x128xf32>
    %cst_59 = arith.constant 1.000000e+00 : f32
    %122 = vector.broadcast %cst_59 : f32 to vector<16x128xf32>
    %123 = arith.addf %122, %121 : vector<16x128xf32>
    %124 = tpu.reciprocal %123 {approx = true} : vector<16x128xf32> -> vector<16x128xf32>
    %125 = arith.mulf %124, %92 : vector<16x128xf32>
    %126 = arith.subf %125, %95 : vector<16x128xf32>
    %127 = vector.extract_strided_slice %126 {offsets = [0, 0], sizes = [16, 32], strides = [1, 1]} : vector<16x128xf32> to vector<16x32xf32>
    %128 = vector.extract_strided_slice %126 {offsets = [0, 32], sizes = [16, 32], strides = [1, 1]} : vector<16x128xf32> to vector<16x32xf32>
    %129 = vector.extract_strided_slice %126 {offsets = [0, 64], sizes = [16, 32], strides = [1, 1]} : vector<16x128xf32> to vector<16x32xf32>
    %130 = vector.extract_strided_slice %126 {offsets = [0, 96], sizes = [16, 32], strides = [1, 1]} : vector<16x128xf32> to vector<16x32xf32>
    %131 = arith.mulf %128, %114 : vector<16x32xf32>
    %132 = arith.mulf %127, %129 : vector<16x32xf32>
    %133 = arith.addf %131, %132 : vector<16x32xf32>
    %134 = math.tanh %133 : vector<16x32xf32>
    %135 = arith.mulf %130, %134 : vector<16x32xf32>
    %136 = tpu.concatenate %135, %135 in 1 : vector<16x32xf32>, vector<16x32xf32> -> vector<16x64xf32>
    %137 = arith.mulf %136, %111 : vector<16x64xf32>
    %c16_60 = arith.constant 16 : index
    %c0_61 = arith.constant 0 : index
    %138 = vector.load %arg20[%c16_60, %c0_61] : memref<128x128xf32, #tpu.memory_space<vmem>>, vector<16x128xf32>
    %cst_62 = arith.constant dense<0.000000e+00> : vector<16x128xf32>
    %139 = tpu.matmul %137, %112, %cst_62 {dimension_numbers = #tpu.dot_dimension_numbers<[1], [0], [0], [1], [0, 0, 1, 1], [], []>} : vector<16x64xf32>, vector<64x128xf32>, vector<16x128xf32> -> vector<16x128xf32>
    %140 = arith.addf %138, %139 : vector<16x128xf32>
    %141 = arith.mulf %140, %92 : vector<16x128xf32>
    %cst_63 = arith.constant 0.000000e+00 : f32
    %142 = vector.broadcast %cst_63 : f32 to vector<16x128xf32>
    %143 = arith.subf %142, %141 : vector<16x128xf32>
    %144 = math.exp %143 : vector<16x128xf32>
    %cst_64 = arith.constant 1.000000e+00 : f32
    %145 = vector.broadcast %cst_64 : f32 to vector<16x128xf32>
    %146 = arith.addf %145, %144 : vector<16x128xf32>
    %147 = tpu.reciprocal %146 {approx = true} : vector<16x128xf32> -> vector<16x128xf32>
    %148 = arith.mulf %147, %92 : vector<16x128xf32>
    %149 = arith.subf %148, %95 : vector<16x128xf32>
    %150 = vector.extract_strided_slice %149 {offsets = [0, 0], sizes = [16, 32], strides = [1, 1]} : vector<16x128xf32> to vector<16x32xf32>
    %151 = vector.extract_strided_slice %149 {offsets = [0, 32], sizes = [16, 32], strides = [1, 1]} : vector<16x128xf32> to vector<16x32xf32>
    %152 = vector.extract_strided_slice %149 {offsets = [0, 64], sizes = [16, 32], strides = [1, 1]} : vector<16x128xf32> to vector<16x32xf32>
    %153 = vector.extract_strided_slice %149 {offsets = [0, 96], sizes = [16, 32], strides = [1, 1]} : vector<16x128xf32> to vector<16x32xf32>
    %154 = arith.mulf %151, %133 : vector<16x32xf32>
    %155 = arith.mulf %150, %152 : vector<16x32xf32>
    %156 = arith.addf %154, %155 : vector<16x32xf32>
    %157 = math.tanh %156 : vector<16x32xf32>
    %158 = arith.mulf %153, %157 : vector<16x32xf32>
    %159 = tpu.concatenate %158, %158 in 1 : vector<16x32xf32>, vector<16x32xf32> -> vector<16x64xf32>
    %160 = arith.mulf %159, %111 : vector<16x64xf32>
    %c32_65 = arith.constant 32 : index
    %c0_66 = arith.constant 0 : index
    %161 = vector.load %arg20[%c32_65, %c0_66] : memref<128x128xf32, #tpu.memory_space<vmem>>, vector<16x128xf32>
    %cst_67 = arith.constant dense<0.000000e+00> : vector<16x128xf32>
    %162 = tpu.matmul %160, %112, %cst_67 {dimension_numbers = #tpu.dot_dimension_numbers<[1], [0], [0], [1], [0, 0, 1, 1], [], []>} : vector<16x64xf32>, vector<64x128xf32>, vector<16x128xf32> -> vector<16x128xf32>
    %163 = arith.addf %161, %162 : vector<16x128xf32>
    %164 = arith.mulf %163, %92 : vector<16x128xf32>
    %cst_68 = arith.constant 0.000000e+00 : f32
    %165 = vector.broadcast %cst_68 : f32 to vector<16x128xf32>
    %166 = arith.subf %165, %164 : vector<16x128xf32>
    %167 = math.exp %166 : vector<16x128xf32>
    %cst_69 = arith.constant 1.000000e+00 : f32
    %168 = vector.broadcast %cst_69 : f32 to vector<16x128xf32>
    %169 = arith.addf %168, %167 : vector<16x128xf32>
    %170 = tpu.reciprocal %169 {approx = true} : vector<16x128xf32> -> vector<16x128xf32>
    %171 = arith.mulf %170, %92 : vector<16x128xf32>
    %172 = arith.subf %171, %95 : vector<16x128xf32>
    %173 = vector.extract_strided_slice %172 {offsets = [0, 0], sizes = [16, 32], strides = [1, 1]} : vector<16x128xf32> to vector<16x32xf32>
    %174 = vector.extract_strided_slice %172 {offsets = [0, 32], sizes = [16, 32], strides = [1, 1]} : vector<16x128xf32> to vector<16x32xf32>
    %175 = vector.extract_strided_slice %172 {offsets = [0, 64], sizes = [16, 32], strides = [1, 1]} : vector<16x128xf32> to vector<16x32xf32>
    %176 = vector.extract_strided_slice %172 {offsets = [0, 96], sizes = [16, 32], strides = [1, 1]} : vector<16x128xf32> to vector<16x32xf32>
    %177 = arith.mulf %174, %156 : vector<16x32xf32>
    %178 = arith.mulf %173, %175 : vector<16x32xf32>
    %179 = arith.addf %177, %178 : vector<16x32xf32>
    %180 = math.tanh %179 : vector<16x32xf32>
    %181 = arith.mulf %176, %180 : vector<16x32xf32>
    %182 = tpu.concatenate %181, %181 in 1 : vector<16x32xf32>, vector<16x32xf32> -> vector<16x64xf32>
    %183 = arith.mulf %182, %111 : vector<16x64xf32>
    %c48_70 = arith.constant 48 : index
    %c0_71 = arith.constant 0 : index
    %184 = vector.load %arg20[%c48_70, %c0_71] : memref<128x128xf32, #tpu.memory_space<vmem>>, vector<16x128xf32>
    %cst_72 = arith.constant dense<0.000000e+00> : vector<16x128xf32>
    %185 = tpu.matmul %183, %112, %cst_72 {dimension_numbers = #tpu.dot_dimension_numbers<[1], [0], [0], [1], [0, 0, 1, 1], [], []>} : vector<16x64xf32>, vector<64x128xf32>, vector<16x128xf32> -> vector<16x128xf32>
    %186 = arith.addf %184, %185 : vector<16x128xf32>
    %187 = arith.mulf %186, %92 : vector<16x128xf32>
    %cst_73 = arith.constant 0.000000e+00 : f32
    %188 = vector.broadcast %cst_73 : f32 to vector<16x128xf32>
    %189 = arith.subf %188, %187 : vector<16x128xf32>
    %190 = math.exp %189 : vector<16x128xf32>
    %cst_74 = arith.constant 1.000000e+00 : f32
    %191 = vector.broadcast %cst_74 : f32 to vector<16x128xf32>
    %192 = arith.addf %191, %190 : vector<16x128xf32>
    %193 = tpu.reciprocal %192 {approx = true} : vector<16x128xf32> -> vector<16x128xf32>
    %194 = arith.mulf %193, %92 : vector<16x128xf32>
    %195 = arith.subf %194, %95 : vector<16x128xf32>
    %196 = vector.extract_strided_slice %195 {offsets = [0, 0], sizes = [16, 32], strides = [1, 1]} : vector<16x128xf32> to vector<16x32xf32>
    %197 = vector.extract_strided_slice %195 {offsets = [0, 32], sizes = [16, 32], strides = [1, 1]} : vector<16x128xf32> to vector<16x32xf32>
    %198 = vector.extract_strided_slice %195 {offsets = [0, 64], sizes = [16, 32], strides = [1, 1]} : vector<16x128xf32> to vector<16x32xf32>
    %199 = vector.extract_strided_slice %195 {offsets = [0, 96], sizes = [16, 32], strides = [1, 1]} : vector<16x128xf32> to vector<16x32xf32>
    %200 = arith.mulf %197, %179 : vector<16x32xf32>
    %201 = arith.mulf %196, %198 : vector<16x32xf32>
    %202 = arith.addf %200, %201 : vector<16x32xf32>
    %203 = math.tanh %202 : vector<16x32xf32>
    %204 = arith.mulf %199, %203 : vector<16x32xf32>
    %205 = tpu.concatenate %204, %204 in 1 : vector<16x32xf32>, vector<16x32xf32> -> vector<16x64xf32>
    %206 = arith.mulf %205, %111 : vector<16x64xf32>
    %c64_75 = arith.constant 64 : index
    %c0_76 = arith.constant 0 : index
    %207 = vector.load %arg20[%c64_75, %c0_76] : memref<128x128xf32, #tpu.memory_space<vmem>>, vector<16x128xf32>
    %cst_77 = arith.constant dense<0.000000e+00> : vector<16x128xf32>
    %208 = tpu.matmul %206, %112, %cst_77 {dimension_numbers = #tpu.dot_dimension_numbers<[1], [0], [0], [1], [0, 0, 1, 1], [], []>} : vector<16x64xf32>, vector<64x128xf32>, vector<16x128xf32> -> vector<16x128xf32>
    %209 = arith.addf %207, %208 : vector<16x128xf32>
    %210 = arith.mulf %209, %92 : vector<16x128xf32>
    %cst_78 = arith.constant 0.000000e+00 : f32
    %211 = vector.broadcast %cst_78 : f32 to vector<16x128xf32>
    %212 = arith.subf %211, %210 : vector<16x128xf32>
    %213 = math.exp %212 : vector<16x128xf32>
    %cst_79 = arith.constant 1.000000e+00 : f32
    %214 = vector.broadcast %cst_79 : f32 to vector<16x128xf32>
    %215 = arith.addf %214, %213 : vector<16x128xf32>
    %216 = tpu.reciprocal %215 {approx = true} : vector<16x128xf32> -> vector<16x128xf32>
    %217 = arith.mulf %216, %92 : vector<16x128xf32>
    %218 = arith.subf %217, %95 : vector<16x128xf32>
    %219 = vector.extract_strided_slice %218 {offsets = [0, 0], sizes = [16, 32], strides = [1, 1]} : vector<16x128xf32> to vector<16x32xf32>
    %220 = vector.extract_strided_slice %218 {offsets = [0, 32], sizes = [16, 32], strides = [1, 1]} : vector<16x128xf32> to vector<16x32xf32>
    %221 = vector.extract_strided_slice %218 {offsets = [0, 64], sizes = [16, 32], strides = [1, 1]} : vector<16x128xf32> to vector<16x32xf32>
    %222 = vector.extract_strided_slice %218 {offsets = [0, 96], sizes = [16, 32], strides = [1, 1]} : vector<16x128xf32> to vector<16x32xf32>
    %223 = arith.mulf %220, %202 : vector<16x32xf32>
    %224 = arith.mulf %219, %221 : vector<16x32xf32>
    %225 = arith.addf %223, %224 : vector<16x32xf32>
    %226 = math.tanh %225 : vector<16x32xf32>
    %227 = arith.mulf %222, %226 : vector<16x32xf32>
    %228 = tpu.concatenate %227, %227 in 1 : vector<16x32xf32>, vector<16x32xf32> -> vector<16x64xf32>
    %229 = arith.mulf %228, %111 : vector<16x64xf32>
    %c80_80 = arith.constant 80 : index
    %c0_81 = arith.constant 0 : index
    %230 = vector.load %arg20[%c80_80, %c0_81] : memref<128x128xf32, #tpu.memory_space<vmem>>, vector<16x128xf32>
    %cst_82 = arith.constant dense<0.000000e+00> : vector<16x128xf32>
    %231 = tpu.matmul %229, %112, %cst_82 {dimension_numbers = #tpu.dot_dimension_numbers<[1], [0], [0], [1], [0, 0, 1, 1], [], []>} : vector<16x64xf32>, vector<64x128xf32>, vector<16x128xf32> -> vector<16x128xf32>
    %232 = arith.addf %230, %231 : vector<16x128xf32>
    %233 = arith.mulf %232, %92 : vector<16x128xf32>
    %cst_83 = arith.constant 0.000000e+00 : f32
    %234 = vector.broadcast %cst_83 : f32 to vector<16x128xf32>
    %235 = arith.subf %234, %233 : vector<16x128xf32>
    %236 = math.exp %235 : vector<16x128xf32>
    %cst_84 = arith.constant 1.000000e+00 : f32
    %237 = vector.broadcast %cst_84 : f32 to vector<16x128xf32>
    %238 = arith.addf %237, %236 : vector<16x128xf32>
    %239 = tpu.reciprocal %238 {approx = true} : vector<16x128xf32> -> vector<16x128xf32>
    %240 = arith.mulf %239, %92 : vector<16x128xf32>
    %241 = arith.subf %240, %95 : vector<16x128xf32>
    %242 = vector.extract_strided_slice %241 {offsets = [0, 0], sizes = [16, 32], strides = [1, 1]} : vector<16x128xf32> to vector<16x32xf32>
    %243 = vector.extract_strided_slice %241 {offsets = [0, 32], sizes = [16, 32], strides = [1, 1]} : vector<16x128xf32> to vector<16x32xf32>
    %244 = vector.extract_strided_slice %241 {offsets = [0, 64], sizes = [16, 32], strides = [1, 1]} : vector<16x128xf32> to vector<16x32xf32>
    %245 = vector.extract_strided_slice %241 {offsets = [0, 96], sizes = [16, 32], strides = [1, 1]} : vector<16x128xf32> to vector<16x32xf32>
    %246 = arith.mulf %243, %225 : vector<16x32xf32>
    %247 = arith.mulf %242, %244 : vector<16x32xf32>
    %248 = arith.addf %246, %247 : vector<16x32xf32>
    %249 = math.tanh %248 : vector<16x32xf32>
    %250 = arith.mulf %245, %249 : vector<16x32xf32>
    %251 = tpu.concatenate %250, %250 in 1 : vector<16x32xf32>, vector<16x32xf32> -> vector<16x64xf32>
    %252 = arith.mulf %251, %111 : vector<16x64xf32>
    %c96_85 = arith.constant 96 : index
    %c0_86 = arith.constant 0 : index
    %253 = vector.load %arg20[%c96_85, %c0_86] : memref<128x128xf32, #tpu.memory_space<vmem>>, vector<16x128xf32>
    %cst_87 = arith.constant dense<0.000000e+00> : vector<16x128xf32>
    %254 = tpu.matmul %252, %112, %cst_87 {dimension_numbers = #tpu.dot_dimension_numbers<[1], [0], [0], [1], [0, 0, 1, 1], [], []>} : vector<16x64xf32>, vector<64x128xf32>, vector<16x128xf32> -> vector<16x128xf32>
    %255 = arith.addf %253, %254 : vector<16x128xf32>
    %256 = arith.mulf %255, %92 : vector<16x128xf32>
    %cst_88 = arith.constant 0.000000e+00 : f32
    %257 = vector.broadcast %cst_88 : f32 to vector<16x128xf32>
    %258 = arith.subf %257, %256 : vector<16x128xf32>
    %259 = math.exp %258 : vector<16x128xf32>
    %cst_89 = arith.constant 1.000000e+00 : f32
    %260 = vector.broadcast %cst_89 : f32 to vector<16x128xf32>
    %261 = arith.addf %260, %259 : vector<16x128xf32>
    %262 = tpu.reciprocal %261 {approx = true} : vector<16x128xf32> -> vector<16x128xf32>
    %263 = arith.mulf %262, %92 : vector<16x128xf32>
    %264 = arith.subf %263, %95 : vector<16x128xf32>
    %265 = vector.extract_strided_slice %264 {offsets = [0, 0], sizes = [16, 32], strides = [1, 1]} : vector<16x128xf32> to vector<16x32xf32>
    %266 = vector.extract_strided_slice %264 {offsets = [0, 32], sizes = [16, 32], strides = [1, 1]} : vector<16x128xf32> to vector<16x32xf32>
    %267 = vector.extract_strided_slice %264 {offsets = [0, 64], sizes = [16, 32], strides = [1, 1]} : vector<16x128xf32> to vector<16x32xf32>
    %268 = vector.extract_strided_slice %264 {offsets = [0, 96], sizes = [16, 32], strides = [1, 1]} : vector<16x128xf32> to vector<16x32xf32>
    %269 = arith.mulf %266, %248 : vector<16x32xf32>
    %270 = arith.mulf %265, %267 : vector<16x32xf32>
    %271 = arith.addf %269, %270 : vector<16x32xf32>
    %272 = math.tanh %271 : vector<16x32xf32>
    %273 = arith.mulf %268, %272 : vector<16x32xf32>
    %274 = tpu.concatenate %273, %273 in 1 : vector<16x32xf32>, vector<16x32xf32> -> vector<16x64xf32>
    %275 = arith.mulf %274, %111 : vector<16x64xf32>
    %c112_90 = arith.constant 112 : index
    %c0_91 = arith.constant 0 : index
    %276 = vector.load %arg20[%c112_90, %c0_91] : memref<128x128xf32, #tpu.memory_space<vmem>>, vector<16x128xf32>
    %cst_92 = arith.constant dense<0.000000e+00> : vector<16x128xf32>
    %277 = tpu.matmul %275, %112, %cst_92 {dimension_numbers = #tpu.dot_dimension_numbers<[1], [0], [0], [1], [0, 0, 1, 1], [], []>} : vector<16x64xf32>, vector<64x128xf32>, vector<16x128xf32> -> vector<16x128xf32>
    %278 = arith.addf %276, %277 : vector<16x128xf32>
    %279 = arith.mulf %278, %92 : vector<16x128xf32>
    %cst_93 = arith.constant 0.000000e+00 : f32
    %280 = vector.broadcast %cst_93 : f32 to vector<16x128xf32>
    %281 = arith.subf %280, %279 : vector<16x128xf32>
    %282 = math.exp %281 : vector<16x128xf32>
    %cst_94 = arith.constant 1.000000e+00 : f32
    %283 = vector.broadcast %cst_94 : f32 to vector<16x128xf32>
    %284 = arith.addf %283, %282 : vector<16x128xf32>
    %285 = tpu.reciprocal %284 {approx = true} : vector<16x128xf32> -> vector<16x128xf32>
    %286 = arith.mulf %285, %92 : vector<16x128xf32>
    %287 = arith.subf %286, %95 : vector<16x128xf32>
    %288 = vector.extract_strided_slice %287 {offsets = [0, 0], sizes = [16, 32], strides = [1, 1]} : vector<16x128xf32> to vector<16x32xf32>
    %289 = vector.extract_strided_slice %287 {offsets = [0, 32], sizes = [16, 32], strides = [1, 1]} : vector<16x128xf32> to vector<16x32xf32>
    %290 = vector.extract_strided_slice %287 {offsets = [0, 64], sizes = [16, 32], strides = [1, 1]} : vector<16x128xf32> to vector<16x32xf32>
    %291 = vector.extract_strided_slice %287 {offsets = [0, 96], sizes = [16, 32], strides = [1, 1]} : vector<16x128xf32> to vector<16x32xf32>
    %292 = arith.mulf %289, %271 : vector<16x32xf32>
    %293 = arith.mulf %288, %290 : vector<16x32xf32>
    %294 = arith.addf %292, %293 : vector<16x32xf32>
    %295 = math.tanh %294 : vector<16x32xf32>
    %296 = arith.mulf %291, %295 : vector<16x32xf32>
    %297 = tpu.concatenate %296, %296 in 1 : vector<16x32xf32>, vector<16x32xf32> -> vector<16x64xf32>
    %298 = arith.mulf %297, %111 : vector<16x64xf32>
    %299 = vector.extract_strided_slice %298 {offsets = [0, 0], sizes = [8, 64], strides = [1, 1]} : vector<16x64xf32> to vector<8x64xf32>
    %300 = vector.extract_strided_slice %298 {offsets = [8, 0], sizes = [8, 64], strides = [1, 1]} : vector<16x64xf32> to vector<8x64xf32>
    %301 = arith.addf %299, %300 : vector<8x64xf32>
    %c0_95 = arith.constant 0 : index
    %c0_96 = arith.constant 0 : index
    %302 = vector.load %arg10[%c0_95, %c0_96] : memref<64x32xf32, #tpu.memory_space<vmem>>, vector<64x32xf32>
    %cst_97 = arith.constant dense<0.000000e+00> : vector<8x32xf32>
    %303 = tpu.matmul %301, %302, %cst_97 {dimension_numbers = #tpu.dot_dimension_numbers<[1], [0], [0], [1], [0, 0, 1, 1], [], []>} : vector<8x64xf32>, vector<64x32xf32>, vector<8x32xf32> -> vector<8x32xf32>
    %c0_98 = arith.constant 0 : index
    %c0_99 = arith.constant 0 : index
    %304 = vector.load %arg11[%c0_98, %c0_99] : memref<1x32xf32, #tpu.memory_space<vmem>>, vector<1x32xf32>
    %305 = vector.broadcast %304 : vector<1x32xf32> to vector<8x32xf32>
    %306 = arith.addf %303, %305 : vector<8x32xf32>
    %307 = vector.extract_strided_slice %306 {offsets = [0, 0], sizes = [8, 16], strides = [1, 1]} : vector<8x32xf32> to vector<8x16xf32>
    %308 = vector.extract_strided_slice %306 {offsets = [0, 16], sizes = [8, 16], strides = [1, 1]} : vector<8x32xf32> to vector<8x16xf32>
    %c0_100 = arith.constant 0 : index
    %c0_101 = arith.constant 0 : index
    %309 = vector.load %arg2[%c0_100, %c0_101] : memref<8x16xf32, #tpu.memory_space<vmem>>, vector<8x16xf32>
    %cst_102 = arith.constant 5.000000e-01 : f32
    %310 = vector.broadcast %cst_102 : f32 to vector<8x16xf32>
    %311 = arith.mulf %310, %308 : vector<8x16xf32>
    %312 = math.exp %311 : vector<8x16xf32>
    %313 = arith.mulf %309, %312 : vector<8x16xf32>
    %314 = arith.addf %307, %313 : vector<8x16xf32>
    %315 = arith.mulf %307, %307 : vector<8x16xf32>
    %316 = arith.subf %308, %315 : vector<8x16xf32>
    %317 = math.exp %308 : vector<8x16xf32>
    %318 = arith.subf %316, %317 : vector<8x16xf32>
    %cst_103 = arith.constant 1.000000e+00 : f32
    %319 = vector.broadcast %cst_103 : f32 to vector<8x16xf32>
    %320 = arith.addf %318, %319 : vector<8x16xf32>
    %321 = tpu.iota {dimensions = array<i32: 0>} : vector<8x16xi32>
    %c2_i32 = arith.constant 2 : i32
    %322 = vector.broadcast %c2_i32 : i32 to vector<8x16xi32>
    %323 = arith.cmpi slt, %321, %322 : vector<8x16xi32>
    %cst_104 = arith.constant 0.000000e+00 : f32
    %324 = vector.broadcast %cst_104 : f32 to vector<8x16xf32>
    %325 = arith.select %323, %320, %324 : vector<8x16xi1>, vector<8x16xf32>
    %cst_105 = arith.constant dense<0.000000e+00> : vector<8xf32>
    %326 = vector.multi_reduction <add>, %325, %cst_105 [1] : vector<8x16xf32> to vector<8xf32>
    %327 = vector.shape_cast %326 : vector<8xf32> to vector<8x1xf32>
    %cst_106 = arith.constant dense<0.000000e+00> : vector<1xf32>
    %328 = vector.multi_reduction <add>, %327, %cst_106 [0] : vector<8x1xf32> to vector<1xf32>
    %329 = vector.shape_cast %328 : vector<1xf32> to vector<1x1xf32>
    %cst_107 = arith.constant -2.500000e-01 : f32
    %330 = vector.broadcast %cst_107 : f32 to vector<1x1xf32>
    %331 = arith.mulf %329, %330 : vector<1x1xf32>
    %c0_108 = arith.constant 0 : index
    %c0_109 = arith.constant 0 : index
    %332 = vector.load %arg1[%c0_108, %c0_109] : memref<64x32xf32, #tpu.memory_space<vmem>>, vector<64x32xf32>
    %c0_110 = arith.constant 0 : index
    %c0_111 = arith.constant 0 : index
    %333 = vector.load %arg3[%c0_110, %c0_111] : memref<8x32xf32, #tpu.memory_space<vmem>>, vector<8x32xf32>
    %c0_112 = arith.constant 0 : index
    %c0_113 = arith.constant 0 : index
    %334 = vector.load %arg4[%c0_112, %c0_113] : memref<8x32xf32, #tpu.memory_space<vmem>>, vector<8x32xf32>
    %c0_114 = arith.constant 0 : index
    %c0_115 = arith.constant 0 : index
    %335 = vector.load %arg12[%c0_114, %c0_115] : memref<32x128xf32, #tpu.memory_space<vmem>>, vector<32x128xf32>
    %c0_116 = arith.constant 0 : index
    %c0_117 = arith.constant 0 : index
    %336 = vector.load %arg13[%c0_116, %c0_117] : memref<16x128xf32, #tpu.memory_space<vmem>>, vector<16x128xf32>
    %c0_118 = arith.constant 0 : index
    %c0_119 = arith.constant 0 : index
    %337 = vector.load %arg14[%c0_118, %c0_119] : memref<32x128xf32, #tpu.memory_space<vmem>>, vector<32x128xf32>
    %c0_120 = arith.constant 0 : index
    %c0_121 = arith.constant 0 : index
    %338 = vector.load %arg15[%c0_120, %c0_121] : memref<1x128xf32, #tpu.memory_space<vmem>>, vector<1x128xf32>
    %c0_122 = arith.constant 0 : index
    %c0_123 = arith.constant 0 : index
    %339 = vector.load %arg16[%c0_122, %c0_123] : memref<32x128xf32, #tpu.memory_space<vmem>>, vector<32x128xf32>
    %c0_124 = arith.constant 0 : index
    %c0_125 = arith.constant 0 : index
    %340 = vector.load %arg17[%c0_124, %c0_125] : memref<1x128xf32, #tpu.memory_space<vmem>>, vector<1x128xf32>
    %341 = tpu.iota {dimensions = array<i32: 1>} : vector<8x128xi32>
    %c64_i32_126 = arith.constant 64 : i32
    %342 = vector.broadcast %c64_i32_126 : i32 to vector<8x128xi32>
    %343 = arith.cmpi sge, %341, %342 : vector<8x128xi32>
    %c96_i32_127 = arith.constant 96 : i32
    %344 = vector.broadcast %c96_i32_127 : i32 to vector<8x128xi32>
    %345 = arith.cmpi slt, %341, %344 : vector<8x128xi32>
    %346 = arith.andi %343, %345 : vector<8x128xi1>
    %cst_128 = arith.constant 2.000000e+00 : f32
    %cst_129 = arith.constant 1.000000e+00 : f32
    %347 = vector.broadcast %cst_128 : f32 to vector<8x128xf32>
    %348 = vector.broadcast %cst_129 : f32 to vector<8x128xf32>
    %349 = arith.select %346, %347, %348 : vector<8x128xi1>, vector<8x128xf32>
    %cst_130 = arith.constant 1.000000e+00 : f32
    %cst_131 = arith.constant 0.000000e+00 : f32
    %350 = vector.broadcast %cst_130 : f32 to vector<8x128xf32>
    %351 = vector.broadcast %cst_131 : f32 to vector<8x128xf32>
    %352 = arith.select %346, %350, %351 : vector<8x128xi1>, vector<8x128xf32>
    %cst_132 = arith.constant dense<0.000000e+00> : vector<64x128xf32>
    %353 = tpu.matmul %332, %335, %cst_132 {dimension_numbers = #tpu.dot_dimension_numbers<[1], [0], [0], [1], [0, 0, 1, 1], [], []>} : vector<64x32xf32>, vector<32x128xf32>, vector<64x128xf32> -> vector<64x128xf32>
    %cst_133 = arith.constant dense<0.000000e+00> : vector<8x128xf32>
    %354 = tpu.matmul %314, %336, %cst_133 {dimension_numbers = #tpu.dot_dimension_numbers<[1], [0], [0], [1], [0, 0, 1, 1], [], []>} : vector<8x16xf32>, vector<16x128xf32>, vector<8x128xf32> -> vector<8x128xf32>
    %355 = vector.broadcast %338 : vector<1x128xf32> to vector<8x128xf32>
    %356 = arith.addf %354, %355 : vector<8x128xf32>
    %357 = vector.extract_strided_slice %353 {offsets = [0, 0], sizes = [8, 128], strides = [1, 1]} : vector<64x128xf32> to vector<8x128xf32>
    %358 = arith.addf %357, %356 : vector<8x128xf32>
    %cst_134 = arith.constant dense<0.000000e+00> : vector<8x128xf32>
    %359 = tpu.matmul %333, %337, %cst_134 {dimension_numbers = #tpu.dot_dimension_numbers<[1], [0], [0], [1], [0, 0, 1, 1], [], []>} : vector<8x32xf32>, vector<32x128xf32>, vector<8x128xf32> -> vector<8x128xf32>
    %360 = arith.addf %358, %359 : vector<8x128xf32>
    %361 = arith.mulf %360, %349 : vector<8x128xf32>
    %cst_135 = arith.constant 0.000000e+00 : f32
    %362 = vector.broadcast %cst_135 : f32 to vector<8x128xf32>
    %363 = arith.subf %362, %361 : vector<8x128xf32>
    %364 = math.exp %363 : vector<8x128xf32>
    %cst_136 = arith.constant 1.000000e+00 : f32
    %365 = vector.broadcast %cst_136 : f32 to vector<8x128xf32>
    %366 = arith.addf %365, %364 : vector<8x128xf32>
    %367 = tpu.reciprocal %366 {approx = true} : vector<8x128xf32> -> vector<8x128xf32>
    %368 = arith.mulf %367, %349 : vector<8x128xf32>
    %369 = arith.subf %368, %352 : vector<8x128xf32>
    %370 = vector.extract_strided_slice %369 {offsets = [0, 0], sizes = [8, 32], strides = [1, 1]} : vector<8x128xf32> to vector<8x32xf32>
    %371 = vector.extract_strided_slice %369 {offsets = [0, 32], sizes = [8, 32], strides = [1, 1]} : vector<8x128xf32> to vector<8x32xf32>
    %372 = vector.extract_strided_slice %369 {offsets = [0, 64], sizes = [8, 32], strides = [1, 1]} : vector<8x128xf32> to vector<8x32xf32>
    %373 = vector.extract_strided_slice %369 {offsets = [0, 96], sizes = [8, 32], strides = [1, 1]} : vector<8x128xf32> to vector<8x32xf32>
    %374 = arith.mulf %371, %334 : vector<8x32xf32>
    %375 = arith.mulf %370, %372 : vector<8x32xf32>
    %376 = arith.addf %374, %375 : vector<8x32xf32>
    %377 = math.tanh %376 : vector<8x32xf32>
    %378 = arith.mulf %373, %377 : vector<8x32xf32>
    %c0_137 = arith.constant 0 : index
    %c0_138 = arith.constant 0 : index
    %379 = vector.load %arg21[%c0_137, %c0_138] : memref<64x32xf32, #tpu.memory_space<vmem>>, vector<8x32xf32>
    tpu.vector_store %arg21[%c0_137, %c0_138], %378 {strides = array<i32>} : memref<64x32xf32, #tpu.memory_space<vmem>>, vector<8x32xf32>,
    %380 = vector.extract_strided_slice %353 {offsets = [8, 0], sizes = [8, 128], strides = [1, 1]} : vector<64x128xf32> to vector<8x128xf32>
    %381 = arith.addf %380, %356 : vector<8x128xf32>
    %cst_139 = arith.constant dense<0.000000e+00> : vector<8x128xf32>
    %382 = tpu.matmul %378, %337, %cst_139 {dimension_numbers = #tpu.dot_dimension_numbers<[1], [0], [0], [1], [0, 0, 1, 1], [], []>} : vector<8x32xf32>, vector<32x128xf32>, vector<8x128xf32> -> vector<8x128xf32>
    %383 = arith.addf %381, %382 : vector<8x128xf32>
    %384 = arith.mulf %383, %349 : vector<8x128xf32>
    %cst_140 = arith.constant 0.000000e+00 : f32
    %385 = vector.broadcast %cst_140 : f32 to vector<8x128xf32>
    %386 = arith.subf %385, %384 : vector<8x128xf32>
    %387 = math.exp %386 : vector<8x128xf32>
    %cst_141 = arith.constant 1.000000e+00 : f32
    %388 = vector.broadcast %cst_141 : f32 to vector<8x128xf32>
    %389 = arith.addf %388, %387 : vector<8x128xf32>
    %390 = tpu.reciprocal %389 {approx = true} : vector<8x128xf32> -> vector<8x128xf32>
    %391 = arith.mulf %390, %349 : vector<8x128xf32>
    %392 = arith.subf %391, %352 : vector<8x128xf32>
    %393 = vector.extract_strided_slice %392 {offsets = [0, 0], sizes = [8, 32], strides = [1, 1]} : vector<8x128xf32> to vector<8x32xf32>
    %394 = vector.extract_strided_slice %392 {offsets = [0, 32], sizes = [8, 32], strides = [1, 1]} : vector<8x128xf32> to vector<8x32xf32>
    %395 = vector.extract_strided_slice %392 {offsets = [0, 64], sizes = [8, 32], strides = [1, 1]} : vector<8x128xf32> to vector<8x32xf32>
    %396 = vector.extract_strided_slice %392 {offsets = [0, 96], sizes = [8, 32], strides = [1, 1]} : vector<8x128xf32> to vector<8x32xf32>
    %397 = arith.mulf %394, %376 : vector<8x32xf32>
    %398 = arith.mulf %393, %395 : vector<8x32xf32>
    %399 = arith.addf %397, %398 : vector<8x32xf32>
    %400 = math.tanh %399 : vector<8x32xf32>
    %401 = arith.mulf %396, %400 : vector<8x32xf32>
    %c8_142 = arith.constant 8 : index
    %c0_143 = arith.constant 0 : index
    %402 = vector.load %arg21[%c8_142, %c0_143] : memref<64x32xf32, #tpu.memory_space<vmem>>, vector<8x32xf32>
    tpu.vector_store %arg21[%c8_142, %c0_143], %401 {strides = array<i32>} : memref<64x32xf32, #tpu.memory_space<vmem>>, vector<8x32xf32>,
    %403 = vector.extract_strided_slice %353 {offsets = [16, 0], sizes = [8, 128], strides = [1, 1]} : vector<64x128xf32> to vector<8x128xf32>
    %404 = arith.addf %403, %356 : vector<8x128xf32>
    %cst_144 = arith.constant dense<0.000000e+00> : vector<8x128xf32>
    %405 = tpu.matmul %401, %337, %cst_144 {dimension_numbers = #tpu.dot_dimension_numbers<[1], [0], [0], [1], [0, 0, 1, 1], [], []>} : vector<8x32xf32>, vector<32x128xf32>, vector<8x128xf32> -> vector<8x128xf32>
    %406 = arith.addf %404, %405 : vector<8x128xf32>
    %407 = arith.mulf %406, %349 : vector<8x128xf32>
    %cst_145 = arith.constant 0.000000e+00 : f32
    %408 = vector.broadcast %cst_145 : f32 to vector<8x128xf32>
    %409 = arith.subf %408, %407 : vector<8x128xf32>
    %410 = math.exp %409 : vector<8x128xf32>
    %cst_146 = arith.constant 1.000000e+00 : f32
    %411 = vector.broadcast %cst_146 : f32 to vector<8x128xf32>
    %412 = arith.addf %411, %410 : vector<8x128xf32>
    %413 = tpu.reciprocal %412 {approx = true} : vector<8x128xf32> -> vector<8x128xf32>
    %414 = arith.mulf %413, %349 : vector<8x128xf32>
    %415 = arith.subf %414, %352 : vector<8x128xf32>
    %416 = vector.extract_strided_slice %415 {offsets = [0, 0], sizes = [8, 32], strides = [1, 1]} : vector<8x128xf32> to vector<8x32xf32>
    %417 = vector.extract_strided_slice %415 {offsets = [0, 32], sizes = [8, 32], strides = [1, 1]} : vector<8x128xf32> to vector<8x32xf32>
    %418 = vector.extract_strided_slice %415 {offsets = [0, 64], sizes = [8, 32], strides = [1, 1]} : vector<8x128xf32> to vector<8x32xf32>
    %419 = vector.extract_strided_slice %415 {offsets = [0, 96], sizes = [8, 32], strides = [1, 1]} : vector<8x128xf32> to vector<8x32xf32>
    %420 = arith.mulf %417, %399 : vector<8x32xf32>
    %421 = arith.mulf %416, %418 : vector<8x32xf32>
    %422 = arith.addf %420, %421 : vector<8x32xf32>
    %423 = math.tanh %422 : vector<8x32xf32>
    %424 = arith.mulf %419, %423 : vector<8x32xf32>
    %c16_147 = arith.constant 16 : index
    %c0_148 = arith.constant 0 : index
    %425 = vector.load %arg21[%c16_147, %c0_148] : memref<64x32xf32, #tpu.memory_space<vmem>>, vector<8x32xf32>
    tpu.vector_store %arg21[%c16_147, %c0_148], %424 {strides = array<i32>} : memref<64x32xf32, #tpu.memory_space<vmem>>, vector<8x32xf32>,
    %426 = vector.extract_strided_slice %353 {offsets = [24, 0], sizes = [8, 128], strides = [1, 1]} : vector<64x128xf32> to vector<8x128xf32>
    %427 = arith.addf %426, %356 : vector<8x128xf32>
    %cst_149 = arith.constant dense<0.000000e+00> : vector<8x128xf32>
    %428 = tpu.matmul %424, %337, %cst_149 {dimension_numbers = #tpu.dot_dimension_numbers<[1], [0], [0], [1], [0, 0, 1, 1], [], []>} : vector<8x32xf32>, vector<32x128xf32>, vector<8x128xf32> -> vector<8x128xf32>
    %429 = arith.addf %427, %428 : vector<8x128xf32>
    %430 = arith.mulf %429, %349 : vector<8x128xf32>
    %cst_150 = arith.constant 0.000000e+00 : f32
    %431 = vector.broadcast %cst_150 : f32 to vector<8x128xf32>
    %432 = arith.subf %431, %430 : vector<8x128xf32>
    %433 = math.exp %432 : vector<8x128xf32>
    %cst_151 = arith.constant 1.000000e+00 : f32
    %434 = vector.broadcast %cst_151 : f32 to vector<8x128xf32>
    %435 = arith.addf %434, %433 : vector<8x128xf32>
    %436 = tpu.reciprocal %435 {approx = true} : vector<8x128xf32> -> vector<8x128xf32>
    %437 = arith.mulf %436, %349 : vector<8x128xf32>
    %438 = arith.subf %437, %352 : vector<8x128xf32>
    %439 = vector.extract_strided_slice %438 {offsets = [0, 0], sizes = [8, 32], strides = [1, 1]} : vector<8x128xf32> to vector<8x32xf32>
    %440 = vector.extract_strided_slice %438 {offsets = [0, 32], sizes = [8, 32], strides = [1, 1]} : vector<8x128xf32> to vector<8x32xf32>
    %441 = vector.extract_strided_slice %438 {offsets = [0, 64], sizes = [8, 32], strides = [1, 1]} : vector<8x128xf32> to vector<8x32xf32>
    %442 = vector.extract_strided_slice %438 {offsets = [0, 96], sizes = [8, 32], strides = [1, 1]} : vector<8x128xf32> to vector<8x32xf32>
    %443 = arith.mulf %440, %422 : vector<8x32xf32>
    %444 = arith.mulf %439, %441 : vector<8x32xf32>
    %445 = arith.addf %443, %444 : vector<8x32xf32>
    %446 = math.tanh %445 : vector<8x32xf32>
    %447 = arith.mulf %442, %446 : vector<8x32xf32>
    %c24_152 = arith.constant 24 : index
    %c0_153 = arith.constant 0 : index
    %448 = vector.load %arg21[%c24_152, %c0_153] : memref<64x32xf32, #tpu.memory_space<vmem>>, vector<8x32xf32>
    tpu.vector_store %arg21[%c24_152, %c0_153], %447 {strides = array<i32>} : memref<64x32xf32, #tpu.memory_space<vmem>>, vector<8x32xf32>,
    %449 = vector.extract_strided_slice %353 {offsets = [32, 0], sizes = [8, 128], strides = [1, 1]} : vector<64x128xf32> to vector<8x128xf32>
    %450 = arith.addf %449, %356 : vector<8x128xf32>
    %cst_154 = arith.constant dense<0.000000e+00> : vector<8x128xf32>
    %451 = tpu.matmul %447, %337, %cst_154 {dimension_numbers = #tpu.dot_dimension_numbers<[1], [0], [0], [1], [0, 0, 1, 1], [], []>} : vector<8x32xf32>, vector<32x128xf32>, vector<8x128xf32> -> vector<8x128xf32>
    %452 = arith.addf %450, %451 : vector<8x128xf32>
    %453 = arith.mulf %452, %349 : vector<8x128xf32>
    %cst_155 = arith.constant 0.000000e+00 : f32
    %454 = vector.broadcast %cst_155 : f32 to vector<8x128xf32>
    %455 = arith.subf %454, %453 : vector<8x128xf32>
    %456 = math.exp %455 : vector<8x128xf32>
    %cst_156 = arith.constant 1.000000e+00 : f32
    %457 = vector.broadcast %cst_156 : f32 to vector<8x128xf32>
    %458 = arith.addf %457, %456 : vector<8x128xf32>
    %459 = tpu.reciprocal %458 {approx = true} : vector<8x128xf32> -> vector<8x128xf32>
    %460 = arith.mulf %459, %349 : vector<8x128xf32>
    %461 = arith.subf %460, %352 : vector<8x128xf32>
    %462 = vector.extract_strided_slice %461 {offsets = [0, 0], sizes = [8, 32], strides = [1, 1]} : vector<8x128xf32> to vector<8x32xf32>
    %463 = vector.extract_strided_slice %461 {offsets = [0, 32], sizes = [8, 32], strides = [1, 1]} : vector<8x128xf32> to vector<8x32xf32>
    %464 = vector.extract_strided_slice %461 {offsets = [0, 64], sizes = [8, 32], strides = [1, 1]} : vector<8x128xf32> to vector<8x32xf32>
    %465 = vector.extract_strided_slice %461 {offsets = [0, 96], sizes = [8, 32], strides = [1, 1]} : vector<8x128xf32> to vector<8x32xf32>
    %466 = arith.mulf %463, %445 : vector<8x32xf32>
    %467 = arith.mulf %462, %464 : vector<8x32xf32>
    %468 = arith.addf %466, %467 : vector<8x32xf32>
    %469 = math.tanh %468 : vector<8x32xf32>
    %470 = arith.mulf %465, %469 : vector<8x32xf32>
    %c32_157 = arith.constant 32 : index
    %c0_158 = arith.constant 0 : index
    %471 = vector.load %arg21[%c32_157, %c0_158] : memref<64x32xf32, #tpu.memory_space<vmem>>, vector<8x32xf32>
    tpu.vector_store %arg21[%c32_157, %c0_158], %470 {strides = array<i32>} : memref<64x32xf32, #tpu.memory_space<vmem>>, vector<8x32xf32>,
    %472 = vector.extract_strided_slice %353 {offsets = [40, 0], sizes = [8, 128], strides = [1, 1]} : vector<64x128xf32> to vector<8x128xf32>
    %473 = arith.addf %472, %356 : vector<8x128xf32>
    %cst_159 = arith.constant dense<0.000000e+00> : vector<8x128xf32>
    %474 = tpu.matmul %470, %337, %cst_159 {dimension_numbers = #tpu.dot_dimension_numbers<[1], [0], [0], [1], [0, 0, 1, 1], [], []>} : vector<8x32xf32>, vector<32x128xf32>, vector<8x128xf32> -> vector<8x128xf32>
    %475 = arith.addf %473, %474 : vector<8x128xf32>
    %476 = arith.mulf %475, %349 : vector<8x128xf32>
    %cst_160 = arith.constant 0.000000e+00 : f32
    %477 = vector.broadcast %cst_160 : f32 to vector<8x128xf32>
    %478 = arith.subf %477, %476 : vector<8x128xf32>
    %479 = math.exp %478 : vector<8x128xf32>
    %cst_161 = arith.constant 1.000000e+00 : f32
    %480 = vector.broadcast %cst_161 : f32 to vector<8x128xf32>
    %481 = arith.addf %480, %479 : vector<8x128xf32>
    %482 = tpu.reciprocal %481 {approx = true} : vector<8x128xf32> -> vector<8x128xf32>
    %483 = arith.mulf %482, %349 : vector<8x128xf32>
    %484 = arith.subf %483, %352 : vector<8x128xf32>
    %485 = vector.extract_strided_slice %484 {offsets = [0, 0], sizes = [8, 32], strides = [1, 1]} : vector<8x128xf32> to vector<8x32xf32>
    %486 = vector.extract_strided_slice %484 {offsets = [0, 32], sizes = [8, 32], strides = [1, 1]} : vector<8x128xf32> to vector<8x32xf32>
    %487 = vector.extract_strided_slice %484 {offsets = [0, 64], sizes = [8, 32], strides = [1, 1]} : vector<8x128xf32> to vector<8x32xf32>
    %488 = vector.extract_strided_slice %484 {offsets = [0, 96], sizes = [8, 32], strides = [1, 1]} : vector<8x128xf32> to vector<8x32xf32>
    %489 = arith.mulf %486, %468 : vector<8x32xf32>
    %490 = arith.mulf %485, %487 : vector<8x32xf32>
    %491 = arith.addf %489, %490 : vector<8x32xf32>
    %492 = math.tanh %491 : vector<8x32xf32>
    %493 = arith.mulf %488, %492 : vector<8x32xf32>
    %c40_162 = arith.constant 40 : index
    %c0_163 = arith.constant 0 : index
    %494 = vector.load %arg21[%c40_162, %c0_163] : memref<64x32xf32, #tpu.memory_space<vmem>>, vector<8x32xf32>
    tpu.vector_store %arg21[%c40_162, %c0_163], %493 {strides = array<i32>} : memref<64x32xf32, #tpu.memory_space<vmem>>, vector<8x32xf32>,
    %495 = vector.extract_strided_slice %353 {offsets = [48, 0], sizes = [8, 128], strides = [1, 1]} : vector<64x128xf32> to vector<8x128xf32>
    %496 = arith.addf %495, %356 : vector<8x128xf32>
    %cst_164 = arith.constant dense<0.000000e+00> : vector<8x128xf32>
    %497 = tpu.matmul %493, %337, %cst_164 {dimension_numbers = #tpu.dot_dimension_numbers<[1], [0], [0], [1], [0, 0, 1, 1], [], []>} : vector<8x32xf32>, vector<32x128xf32>, vector<8x128xf32> -> vector<8x128xf32>
    %498 = arith.addf %496, %497 : vector<8x128xf32>
    %499 = arith.mulf %498, %349 : vector<8x128xf32>
    %cst_165 = arith.constant 0.000000e+00 : f32
    %500 = vector.broadcast %cst_165 : f32 to vector<8x128xf32>
    %501 = arith.subf %500, %499 : vector<8x128xf32>
    %502 = math.exp %501 : vector<8x128xf32>
    %cst_166 = arith.constant 1.000000e+00 : f32
    %503 = vector.broadcast %cst_166 : f32 to vector<8x128xf32>
    %504 = arith.addf %503, %502 : vector<8x128xf32>
    %505 = tpu.reciprocal %504 {approx = true} : vector<8x128xf32> -> vector<8x128xf32>
    %506 = arith.mulf %505, %349 : vector<8x128xf32>
    %507 = arith.subf %506, %352 : vector<8x128xf32>
    %508 = vector.extract_strided_slice %507 {offsets = [0, 0], sizes = [8, 32], strides = [1, 1]} : vector<8x128xf32> to vector<8x32xf32>
    %509 = vector.extract_strided_slice %507 {offsets = [0, 32], sizes = [8, 32], strides = [1, 1]} : vector<8x128xf32> to vector<8x32xf32>
    %510 = vector.extract_strided_slice %507 {offsets = [0, 64], sizes = [8, 32], strides = [1, 1]} : vector<8x128xf32> to vector<8x32xf32>
    %511 = vector.extract_strided_slice %507 {offsets = [0, 96], sizes = [8, 32], strides = [1, 1]} : vector<8x128xf32> to vector<8x32xf32>
    %512 = arith.mulf %509, %491 : vector<8x32xf32>
    %513 = arith.mulf %508, %510 : vector<8x32xf32>
    %514 = arith.addf %512, %513 : vector<8x32xf32>
    %515 = math.tanh %514 : vector<8x32xf32>
    %516 = arith.mulf %511, %515 : vector<8x32xf32>
    %c48_167 = arith.constant 48 : index
    %c0_168 = arith.constant 0 : index
    %517 = vector.load %arg21[%c48_167, %c0_168] : memref<64x32xf32, #tpu.memory_space<vmem>>, vector<8x32xf32>
    tpu.vector_store %arg21[%c48_167, %c0_168], %516 {strides = array<i32>} : memref<64x32xf32, #tpu.memory_space<vmem>>, vector<8x32xf32>,
    %518 = vector.extract_strided_slice %353 {offsets = [56, 0], sizes = [8, 128], strides = [1, 1]} : vector<64x128xf32> to vector<8x128xf32>
    %519 = arith.addf %518, %356 : vector<8x128xf32>
    %cst_169 = arith.constant dense<0.000000e+00> : vector<8x128xf32>
    %520 = tpu.matmul %516, %337, %cst_169 {dimension_numbers = #tpu.dot_dimension_numbers<[1], [0], [0], [1], [0, 0, 1, 1], [], []>} : vector<8x32xf32>, vector<32x128xf32>, vector<8x128xf32> -> vector<8x128xf32>
    %521 = arith.addf %519, %520 : vector<8x128xf32>
    %522 = arith.mulf %521, %349 : vector<8x128xf32>
    %cst_170 = arith.constant 0.000000e+00 : f32
    %523 = vector.broadcast %cst_170 : f32 to vector<8x128xf32>
    %524 = arith.subf %523, %522 : vector<8x128xf32>
    %525 = math.exp %524 : vector<8x128xf32>
    %cst_171 = arith.constant 1.000000e+00 : f32
    %526 = vector.broadcast %cst_171 : f32 to vector<8x128xf32>
    %527 = arith.addf %526, %525 : vector<8x128xf32>
    %528 = tpu.reciprocal %527 {approx = true} : vector<8x128xf32> -> vector<8x128xf32>
    %529 = arith.mulf %528, %349 : vector<8x128xf32>
    %530 = arith.subf %529, %352 : vector<8x128xf32>
    %531 = vector.extract_strided_slice %530 {offsets = [0, 0], sizes = [8, 32], strides = [1, 1]} : vector<8x128xf32> to vector<8x32xf32>
    %532 = vector.extract_strided_slice %530 {offsets = [0, 32], sizes = [8, 32], strides = [1, 1]} : vector<8x128xf32> to vector<8x32xf32>
    %533 = vector.extract_strided_slice %530 {offsets = [0, 64], sizes = [8, 32], strides = [1, 1]} : vector<8x128xf32> to vector<8x32xf32>
    %534 = vector.extract_strided_slice %530 {offsets = [0, 96], sizes = [8, 32], strides = [1, 1]} : vector<8x128xf32> to vector<8x32xf32>
    %535 = arith.mulf %532, %514 : vector<8x32xf32>
    %536 = arith.mulf %531, %533 : vector<8x32xf32>
    %537 = arith.addf %535, %536 : vector<8x32xf32>
    %538 = math.tanh %537 : vector<8x32xf32>
    %539 = arith.mulf %534, %538 : vector<8x32xf32>
    %c56_172 = arith.constant 56 : index
    %c0_173 = arith.constant 0 : index
    %540 = vector.load %arg21[%c56_172, %c0_173] : memref<64x32xf32, #tpu.memory_space<vmem>>, vector<8x32xf32>
    tpu.vector_store %arg21[%c56_172, %c0_173], %539 {strides = array<i32>} : memref<64x32xf32, #tpu.memory_space<vmem>>, vector<8x32xf32>,
    %c0_174 = arith.constant 0 : index
    %c0_175 = arith.constant 0 : index
    %541 = vector.load %arg21[%c0_174, %c0_175] : memref<64x32xf32, #tpu.memory_space<vmem>>, vector<64x32xf32>
    %cst_176 = arith.constant dense<0.000000e+00> : vector<64x128xf32>
    %542 = tpu.matmul %541, %339, %cst_176 {dimension_numbers = #tpu.dot_dimension_numbers<[1], [0], [0], [1], [0, 0, 1, 1], [], []>} : vector<64x32xf32>, vector<32x128xf32>, vector<64x128xf32> -> vector<64x128xf32>
    %543 = vector.broadcast %340 : vector<1x128xf32> to vector<64x128xf32>
    %544 = arith.addf %542, %543 : vector<64x128xf32>
    %c0_177 = arith.constant 0 : index
    %c0_178 = arith.constant 0 : index
    %545 = vector.load %arg18[%c0_177, %c0_178] : memref<64x128xf32, #tpu.memory_space<vmem>>, vector<64x128xf32>
    tpu.vector_store %arg18[%c0_177, %c0_178], %544 {strides = array<i32>} : memref<64x128xf32, #tpu.memory_space<vmem>>, vector<64x128xf32>,
    %546 = vector.shape_cast %331 : vector<1x1xf32> to vector<1x1xf32>
    %547 = vector.broadcast %546 : vector<1x1xf32> to vector<8x32xf32>
    %cst_179 = arith.constant 0.000000e+00 : f32
    %548 = vector.broadcast %cst_179 : f32 to vector<8x32xf32>
    %549 = tpu.concatenate %539, %537, %547, %548 in 1 : vector<8x32xf32>, vector<8x32xf32>, vector<8x32xf32>, vector<8x32xf32> -> vector<8x128xf32>
    %c0_180 = arith.constant 0 : index
    %c0_181 = arith.constant 0 : index
    %550 = vector.load %arg19[%c0_180, %c0_181] : memref<8x128xf32, #tpu.memory_space<vmem>>, vector<8x128xf32>
    tpu.vector_store %arg19[%c0_180, %c0_181], %549 {strides = array<i32>} : memref<8x128xf32, #tpu.memory_space<vmem>>, vector<8x128xf32>,
    return
  }
}

</mosaic_0001>

<llo_original>
// kernel: vae_forward.1
$region0: #{vae_forward.1}
  #allocation0 [shape = 'u32[]', space=smem, size = 0x4, offset = 0x4, fixed_abs, tag = 'smem constant byte address 0x4 - core index']
  #allocation1 [shape = 'u32[144,128]{1,0:T(1,128)}', space=vmem, size = 0x12000, scoped, tag = 'internal scratch']
  #allocation2 [shape = 'f32[128,128]{1,0:T(8,128)}', space=vmem, size = 0x10000, scoped, tag = 'scratch operand']
  #allocation3 [shape = 'f32[64,32]{1,0:T(8,128)}', space=vmem, size = 0x8000, scoped, tag = 'scratch operand']
  %s0 = inlined_call_operand.vmem [shape: f32[64,32], index: 0, kind: input, shape index: {}]
  %s1 = inlined_call_operand.vmem [shape: f32[64,32], index: 1, kind: input, shape index: {}]
  %s2 = inlined_call_operand.vmem [shape: f32[8,16], index: 2, kind: input, shape index: {}]
  %s3 = inlined_call_operand.vmem [shape: f32[8,32], index: 3, kind: input, shape index: {}, may-alias: {3,4}]
  %s4 = inlined_call_operand.vmem [shape: f32[8,32], index: 4, kind: input, shape index: {}, may-alias: {3,4}]
  %s5 = inlined_call_operand.vmem [shape: f32[2,32,128], index: 5, kind: input, shape index: {}]
  %s6 = inlined_call_operand.vmem [shape: f32[2,1,128], index: 6, kind: input, shape index: {}]
  %s7 = inlined_call_operand.vmem [shape: f32[32,256], index: 7, kind: input, shape index: {}]
  %s8 = inlined_call_operand.vmem [shape: f32[64,128], index: 8, kind: input, shape index: {}]
  %s9 = inlined_call_operand.vmem [shape: f32[1,256], index: 9, kind: input, shape index: {}]
  %s10 = inlined_call_operand.vmem [shape: f32[64,32], index: 10, kind: input, shape index: {}]
  %s11 = inlined_call_operand.vmem [shape: f32[1,32], index: 11, kind: input, shape index: {}]
  %s12 = inlined_call_operand.vmem [shape: f32[32,128], index: 12, kind: input, shape index: {}]
  %s13 = inlined_call_operand.vmem [shape: f32[16,128], index: 13, kind: input, shape index: {}]
  %s14 = inlined_call_operand.vmem [shape: f32[32,128], index: 14, kind: input, shape index: {}]
  %s15 = inlined_call_operand.vmem [shape: f32[1,128], index: 15, kind: input, shape index: {}]
  %s16 = inlined_call_operand.vmem [shape: f32[32,128], index: 16, kind: input, shape index: {}]
  %s17 = inlined_call_operand.vmem [shape: f32[1,128], index: 17, kind: input, shape index: {}]
  %s18 = inlined_call_operand.vmem [shape: f32[64,128], index: 18, kind: output, shape index: {0}]
  %s19 = inlined_call_operand.vmem [shape: f32[8,128], index: 19, kind: output, shape index: {1}]
  %20 = xla_tuple %s18, %s19
  %s21 = sld [smem:[#allocation0]]
  $region90: #{vae_forward.1} parent=0
    _
  %s23 = ssub.s32 1, %s21
  %s24 = scalar_select 0, %s23, %s21
  // Predicated region
  $region2: #{vae_forward.1} parent=0 // pred_check
    _
  $region3: #{vae_forward.1} parent=0 // pred_check_branch
    %26 = sbr.rel (0) target = $region5
  $region4: #{vae_forward.1} parent=0 // pred_region
    _
  $region5: #{vae_forward.1} parent=0 // pred_fallthru
    _
  // Predicated region
  $region6: #{vae_forward.1} parent=0 // pred_check
    _
  $region7: #{vae_forward.1} parent=0 // pred_check_branch
    %28 = sbr.rel (0) target = $region9
  $region8: #{vae_forward.1} parent=0 // pred_region
    _
  $region9: #{vae_forward.1} parent=0 // pred_fallthru
    _
  // Predicated region
  $region10: #{vae_forward.1} parent=0 // pred_check
    _
  $region11: #{vae_forward.1} parent=0 // pred_check_branch
    %30 = sbr.rel (0) target = $region13
  $region12: #{vae_forward.1} parent=0 // pred_region
    _
  $region13: #{vae_forward.1} parent=0 // pred_fallthru
    _
  // Predicated region
  $region14: #{vae_forward.1} parent=0 // pred_check
    _
  $region15: #{vae_forward.1} parent=0 // pred_check_branch
    %32 = sbr.rel (0) target = $region17
  $region16: #{vae_forward.1} parent=0 // pred_region
    _
  $region17: #{vae_forward.1} parent=0 // pred_fallthru
    _
  // Predicated region
  $region18: #{vae_forward.1} parent=0 // pred_check
    _
  $region19: #{vae_forward.1} parent=0 // pred_check_branch
    %34 = sbr.rel (0) target = $region21
  $region20: #{vae_forward.1} parent=0 // pred_region
    _
  $region21: #{vae_forward.1} parent=0 // pred_fallthru
    _
  // Predicated region
  $region22: #{vae_forward.1} parent=0 // pred_check
    _
  $region23: #{vae_forward.1} parent=0 // pred_check_branch
    %36 = sbr.rel (0) target = $region25
  $region24: #{vae_forward.1} parent=0 // pred_region
    _
  $region25: #{vae_forward.1} parent=0 // pred_fallthru
    _
  // Predicated region
  $region26: #{vae_forward.1} parent=0 // pred_check
    _
  $region27: #{vae_forward.1} parent=0 // pred_check_branch
    %38 = sbr.rel (0) target = $region29
  $region28: #{vae_forward.1} parent=0 // pred_region
    _
  $region29: #{vae_forward.1} parent=0 // pred_fallthru
    _
  // Predicated region
  $region30: #{vae_forward.1} parent=0 // pred_check
    _
  $region31: #{vae_forward.1} parent=0 // pred_check_branch
    %40 = sbr.rel (0) target = $region33
  $region32: #{vae_forward.1} parent=0 // pred_region
    _
  $region33: #{vae_forward.1} parent=0 // pred_fallthru
    _
  // Predicated region
  $region34: #{vae_forward.1} parent=0 // pred_check
    _
  $region35: #{vae_forward.1} parent=0 // pred_check_branch
    %42 = sbr.rel (0) target = $region37
  $region36: #{vae_forward.1} parent=0 // pred_region
    _
  $region37: #{vae_forward.1} parent=0 // pred_fallthru
    _
  // Predicated region
  $region38: #{vae_forward.1} parent=0 // pred_check
    _
  $region39: #{vae_forward.1} parent=0 // pred_check_branch
    %44 = sbr.rel (0) target = $region41
  $region40: #{vae_forward.1} parent=0 // pred_region
    _
  $region41: #{vae_forward.1} parent=0 // pred_fallthru
    _
  // Predicated region
  $region42: #{vae_forward.1} parent=0 // pred_check
    _
  $region43: #{vae_forward.1} parent=0 // pred_check_branch
    %46 = sbr.rel (0) target = $region45
  $region44: #{vae_forward.1} parent=0 // pred_region
    _
  $region45: #{vae_forward.1} parent=0 // pred_fallthru
    _
  // Predicated region
  $region46: #{vae_forward.1} parent=0 // pred_check
    _
  $region47: #{vae_forward.1} parent=0 // pred_check_branch
    %48 = sbr.rel (0) target = $region49
  $region48: #{vae_forward.1} parent=0 // pred_region
    _
  $region49: #{vae_forward.1} parent=0 // pred_fallthru
    _
  // Predicated region
  $region50: #{vae_forward.1} parent=0 // pred_check
    _
  $region51: #{vae_forward.1} parent=0 // pred_check_branch
    %50 = sbr.rel (0) target = $region53
  $region52: #{vae_forward.1} parent=0 // pred_region
    _
  $region53: #{vae_forward.1} parent=0 // pred_fallthru
    _
  // Predicated region
  $region54: #{vae_forward.1} parent=0 // pred_check
    _
  $region55: #{vae_forward.1} parent=0 // pred_check_branch
    %52 = sbr.rel (0) target = $region57
  $region56: #{vae_forward.1} parent=0 // pred_region
    _
  $region57: #{vae_forward.1} parent=0 // pred_fallthru
    _
  // Predicated region
  $region58: #{vae_forward.1} parent=0 // pred_check
    _
  $region59: #{vae_forward.1} parent=0 // pred_check_branch
    %54 = sbr.rel (0) target = $region61
  $region60: #{vae_forward.1} parent=0 // pred_region
    _
  $region61: #{vae_forward.1} parent=0 // pred_fallthru
    _
  // Predicated region
  $region62: #{vae_forward.1} parent=0 // pred_check
    _
  $region63: #{vae_forward.1} parent=0 // pred_check_branch
    %56 = sbr.rel (0) target = $region65
  $region64: #{vae_forward.1} parent=0 // pred_region
    _
  $region65: #{vae_forward.1} parent=0 // pred_fallthru
    _
  // Predicated region
  $region66: #{vae_forward.1} parent=0 // pred_check
    _
  $region67: #{vae_forward.1} parent=0 // pred_check_branch
    %58 = sbr.rel (0) target = $region69
  $region68: #{vae_forward.1} parent=0 // pred_region
    _
  $region69: #{vae_forward.1} parent=0 // pred_fallthru
    _
  // Predicated region
  $region70: #{vae_forward.1} parent=0 // pred_check
    _
  $region71: #{vae_forward.1} parent=0 // pred_check_branch
    %60 = sbr.rel (0) target = $region73
  $region72: #{vae_forward.1} parent=0 // pred_region
    _
  $region73: #{vae_forward.1} parent=0 // pred_fallthru
    _
  %v61 = vld [vmem:[%s0] sm:$0xff]
  %v62 = vld [vmem:[%s0 + $0x8] sm:$0xff]
  %v63 = vld [vmem:[%s0 + $0x10] sm:$0xff]
  %v64 = vld [vmem:[%s0 + $0x18] sm:$0xff]
  %v65 = vld [vmem:[%s0 + $0x20] sm:$0xff]
  %v66 = vld [vmem:[%s0 + $0x28] sm:$0xff]
  %v67 = vld [vmem:[%s0 + $0x30] sm:$0xff]
  %v68 = vld [vmem:[%s0 + $0x38] sm:$0xff]
  %v69 = vld [vmem:[%s5] sm:$0xff]
  %v70 = vld [vmem:[%s5 + $0x8] sm:$0xff]
  %v71 = vld [vmem:[%s5 + $0x10] sm:$0xff]
  %v72 = vld [vmem:[%s5 + $0x18] sm:$0xff]
  %v73 = vld [vmem:[%s6] sm:$0x1]
  %v75 = vlaneseq
  %v76 = vshrl.u32 %v75, 7
  %v77 = vsub.s32 0, %v76
  %v78 = vrot.slane %v73, %v77
  %vm80 = vcmask 261120
  %v82 = vsel %vm80, %v61, 0
  %v85 = vsel %vm80, %v62, 0
  %v88 = vsel %vm80, %v63, 0
  %v91 = vsel %vm80, %v64, 0
  %v94 = vsel %vm80, %v65, 0
  %v97 = vsel %vm80, %v66, 0
  %v100 = vsel %vm80, %v67, 0
  %v103 = vsel %vm80, %v68, 0
  %105 = vmatprep.subr.mxu0 0.0
  %106 = vmatpush1.msra.mxu0 0.0
  %107 = vmatprep.subr.mxu0 0.0
  %108 = vmatpush1.msra.mxu0 0.0
  %109 = vmatprep.subr.mxu0 0.0
  %110 = vmatpush1.msra.mxu0 0.0
  %111 = vmatprep.subr.mxu0 0.0
  %112 = vmatpush1.msra.mxu0 0.0
  %113 = vmatprep.subr.mxu0 0.0
  %114 = vmatpush1.msra.mxu0 0.0
  %115 = vmatprep.subr.mxu0 0.0
  %116 = vmatpush1.msra.mxu0 0.0
  %117 = vmatprep.subr.mxu0 0.0
  %118 = vmatpush1.msra.mxu0 0.0
  %119 = vmatprep.subr.mxu0 0.0
  %120 = vmatpush1.msra.mxu0 0.0
  %121 = vmatprep.subr.mxu0 0.0
  %122 = vmatpush1.msra.mxu0 0.0
  %123 = vmatprep.subr.mxu0 0.0
  %124 = vmatpush1.msra.mxu0 0.0
  %125 = vmatprep.subr.mxu0 0.0
  %126 = vmatpush1.msra.mxu0 0.0
  %127 = vmatprep.subr.mxu0 0.0
  %128 = vmatpush1.msra.mxu0 0.0
  %129 = vmatprep.subr.mxu0 0.0
  %130 = vmatpush1.msra.mxu0 %v72
  %131 = vmatprep.subr.mxu0 0.0
  %132 = vmatpush1.msra.mxu0 %v71
  %133 = vmatprep.subr.mxu0 0.0
  %134 = vmatpush1.msra.mxu0 %v70
  %135 = vmatprep.subr.mxu0 0.0
  %136 = vmatpush1.msra.mxu0 %v69
  %137 = vmatprep.subr.mxu0 0.0
  %138 = vmatpush2.msra.mxu0 0.0
  %139 = vmatprep.subr.mxu0 0.0
  %140 = vmatpush2.msra.mxu0 0.0
  %141 = vmatprep.subr.mxu0 0.0
  %142 = vmatpush2.msra.mxu0 0.0
  %143 = vmatprep.subr.mxu0 0.0
  %144 = vmatpush2.msra.mxu0 0.0
  %145 = vmatprep.subr.mxu0 0.0
  %146 = vmatpush2.msra.mxu0 0.0
  %147 = vmatprep.subr.mxu0 0.0
  %148 = vmatpush2.msra.mxu0 0.0
  %149 = vmatprep.subr.mxu0 0.0
  %150 = vmatpush2.msra.mxu0 0.0
  %151 = vmatprep.subr.mxu0 0.0
  %152 = vmatpush2.msra.mxu0 0.0
  %153 = vmatprep.subr.mxu0 0.0
  %154 = vmatpush2.msra.mxu0 0.0
  %155 = vmatprep.subr.mxu0 0.0
  %156 = vmatpush2.msra.mxu0 0.0
  %157 = vmatprep.subr.mxu0 0.0
  %158 = vmatpush2.msra.mxu0 0.0
  %159 = vmatprep.subr.mxu0 0.0
  %160 = vmatpush2.msra.mxu0 0.0
  %161 = vmatprep.subr.mxu0 0.0
  %162 = vmatpush2.msra.mxu0 0.0
  %163 = vmatprep.subr.mxu0 0.0
  %164 = vmatpush2.msra.mxu0 0.0
  %165 = vmatprep.subr.mxu0 0.0
  %166 = vmatpush2.msra.mxu0 0.0
  %167 = vmatprep.subr.mxu0 0.0
  %168 = vmatpush2.msra.mxu0 0.0
  %169 = vmatprep.mubr.f32.mxu0 0.0
  %170 = vmatmul.mubr.f32.gmra.mxu0 %v82
  %v171 = vpop.f32.mrf.mxu0
  %v172 = vadd.f32 %v78, %v171
  %v173 = vpop.f32.mrf.mxu0
  %174 = vmatprep.mubr.f32.mxu0 0.0
  %175 = vmatmul.mubr.f32.gmra.mxu0 %v85
  %v176 = vpop.f32.mrf.mxu0
  %v177 = vadd.f32 %v78, %v176
  %v178 = vpop.f32.mrf.mxu0
  %179 = vmatprep.mubr.f32.mxu0 0.0
  %180 = vmatmul.mubr.f32.gmra.mxu0 %v88
  %v181 = vpop.f32.mrf.mxu0
  %v182 = vadd.f32 %v78, %v181
  %v183 = vpop.f32.mrf.mxu0
  %184 = vmatprep.mubr.f32.mxu0 0.0
  %185 = vmatmul.mubr.f32.gmra.mxu0 %v91
  %v186 = vpop.f32.mrf.mxu0
  %v187 = vadd.f32 %v78, %v186
  %v188 = vpop.f32.mrf.mxu0
  %189 = vmatprep.mubr.f32.mxu0 0.0
  %190 = vmatmul.mubr.f32.gmra.mxu0 %v94
  %v191 = vpop.f32.mrf.mxu0
  %v192 = vadd.f32 %v78, %v191
  %v193 = vpop.f32.mrf.mxu0
  %194 = vmatprep.mubr.f32.mxu0 0.0
  %195 = vmatmul.mubr.f32.gmra.mxu0 %v97
  %v196 = vpop.f32.mrf.mxu0
  %v197 = vadd.f32 %v78, %v196
  %v198 = vpop.f32.mrf.mxu0
  %199 = vmatprep.mubr.f32.mxu0 0.0
  %200 = vmatmul.mubr.f32.gmra.mxu0 %v100
  %v201 = vpop.f32.mrf.mxu0
  %v202 = vadd.f32 %v78, %v201
  %v203 = vpop.f32.mrf.mxu0
  %204 = vmatprep.mubr.f32.mxu0 0.0
  %205 = vmatmul.mubr.f32.gmra.mxu0 %v103
  %v206 = vpop.f32.mrf.mxu0
  %v207 = vadd.f32 %v78, %v206
  %v208 = vpop.f32.mrf.mxu0
  %209 = vdwg.mxu0
  %v210 = vsub.f32 0.0, %v172
  %v211 = vsub.f32 0.0, %v177
  %v212 = vsub.f32 0.0, %v182
  %v213 = vsub.f32 0.0, %v187
  %v214 = vsub.f32 0.0, %v192
  %v215 = vsub.f32 0.0, %v197
  %v216 = vsub.f32 0.0, %v202
  %v217 = vsub.f32 0.0, %v207
  %v218 = vmul.f32 %v210, 1.442695
  %v219 = vpow.pop %v218
  %v220 = vmul.f32 %v211, 1.442695
  %v221 = vpow.pop %v220
  %v222 = vmul.f32 %v212, 1.442695
  %v223 = vpow.pop %v222
  %v224 = vmul.f32 %v213, 1.442695
  %v225 = vpow.pop %v224
  %v226 = vmul.f32 %v214, 1.442695
  %v227 = vpow.pop %v226
  %v228 = vmul.f32 %v215, 1.442695
  %v229 = vpow.pop %v228
  %v230 = vmul.f32 %v216, 1.442695
  %v231 = vpow.pop %v230
  %v232 = vmul.f32 %v217, 1.442695
  %v233 = vpow.pop %v232
  %v234 = vadd.f32 %v219, 1.0
  %v235 = vadd.f32 %v221, 1.0
  %v236 = vadd.f32 %v223, 1.0
  %v237 = vadd.f32 %v225, 1.0
  %v238 = vadd.f32 %v227, 1.0
  %v239 = vadd.f32 %v229, 1.0
  %v240 = vadd.f32 %v231, 1.0
  %v241 = vadd.f32 %v233, 1.0
  %v242 = vrcp.pop %v234
  %v243 = vrcp.pop %v235
  %v244 = vrcp.pop %v236
  %v245 = vrcp.pop %v237
  %v246 = vrcp.pop %v238
  %v247 = vrcp.pop %v239
  %v248 = vrcp.pop %v240
  %v249 = vrcp.pop %v241
  %v250 = vmax.f32 %v172, 0.0
  %v251 = vmax.f32 %v177, 0.0
  %v252 = vmax.f32 %v182, 0.0
  %v253 = vmax.f32 %v187, 0.0
  %v254 = vmax.f32 %v192, 0.0
  %v255 = vmax.f32 %v197, 0.0
  %v256 = vmax.f32 %v202, 0.0
  %v257 = vmax.f32 %v207, 0.0
  %266 = vrot.lane.b32.xlu0 %v250, 96
  %v267 = vpop.permute.xlu0 %266
  %268 = vrot.lane.b32.xlu0 %v251, 96
  %v269 = vpop.permute.xlu0 %268
  %270 = vrot.lane.b32.xlu0 %v252, 96
  %v271 = vpop.permute.xlu0 %270
  %272 = vrot.lane.b32.xlu0 %v253, 96
  %v273 = vpop.permute.xlu0 %272
  %274 = vrot.lane.b32.xlu0 %v254, 96
  %v275 = vpop.permute.xlu0 %274
  %276 = vrot.lane.b32.xlu0 %v255, 96
  %v277 = vpop.permute.xlu0 %276
  %278 = vrot.lane.b32.xlu0 %v256, 96
  %v279 = vpop.permute.xlu0 %278
  %280 = vrot.lane.b32.xlu0 %v257, 96
  %v281 = vpop.permute.xlu0 %280
  %v290 = vmul.f32 %v242, %v267
  %v291 = vmul.f32 %v243, %v269
  %v292 = vmul.f32 %v244, %v271
  %v293 = vmul.f32 %v245, %v273
  %v294 = vmul.f32 %v246, %v275
  %v295 = vmul.f32 %v247, %v277
  %v296 = vmul.f32 %v248, %v279
  %v297 = vmul.f32 %v249, %v281
  %v298 = vsub.f32 1.0, %v242
  %v299 = vsub.f32 1.0, %v243
  %v300 = vsub.f32 1.0, %v244
  %v301 = vsub.f32 1.0, %v245
  %v302 = vsub.f32 1.0, %v246
  %v303 = vsub.f32 1.0, %v247
  %v304 = vsub.f32 1.0, %v248
  %v305 = vsub.f32 1.0, %v249
  %314 = vrot.lane.b32.xlu0 %v172, 64
  %v315 = vpop.permute.xlu0 %314
  %316 = vrot.lane.b32.xlu0 %v177, 64
  %v317 = vpop.permute.xlu0 %316
  %318 = vrot.lane.b32.xlu0 %v182, 64
  %v319 = vpop.permute.xlu0 %318
  %320 = vrot.lane.b32.xlu0 %v187, 64
  %v321 = vpop.permute.xlu0 %320
  %322 = vrot.lane.b32.xlu0 %v192, 64
  %v323 = vpop.permute.xlu0 %322
  %324 = vrot.lane.b32.xlu0 %v197, 64
  %v325 = vpop.permute.xlu0 %324
  %326 = vrot.lane.b32.xlu0 %v202, 64
  %v327 = vpop.permute.xlu0 %326
  %328 = vrot.lane.b32.xlu0 %v207, 64
  %v329 = vpop.permute.xlu0 %328
  %v338 = vmul.f32 %v298, %v315
  %v339 = vmul.f32 %v299, %v317
  %v340 = vmul.f32 %v300, %v319
  %v341 = vmul.f32 %v301, %v321
  %v342 = vmul.f32 %v302, %v323
  %v343 = vmul.f32 %v303, %v325
  %v344 = vmul.f32 %v304, %v327
  %v345 = vmul.f32 %v305, %v329
  %v346 = vadd.f32 %v290, %v338
  %v347 = vadd.f32 %v291, %v339
  %v348 = vadd.f32 %v292, %v340
  %v349 = vadd.f32 %v293, %v341
  %v350 = vadd.f32 %v294, %v342
  %v351 = vadd.f32 %v295, %v343
  %v352 = vadd.f32 %v296, %v344
  %v353 = vadd.f32 %v297, %v345
  %s354 = scalar_lea.vmem %s5, 32
  %v355 = vld [vmem:[%s354] sm:$0xff]
  %v356 = vld [vmem:[%s354 + $0x8] sm:$0xff]
  %v357 = vld [vmem:[%s354 + $0x10] sm:$0xff]
  %v358 = vld [vmem:[%s354 + $0x18] sm:$0xff]
  %s359 = scalar_lea.vmem %s6, 1
  %v360 = vld [vmem:[%s359] sm:$0x1]
  %v362 = vlaneseq
  %v363 = vshrl.u32 %v362, 7
  %v364 = vsub.s32 0, %v363
  %v365 = vrot.slane %v360, %v364
  %v368 = vsel %vm80, %v346, 0
  %v371 = vsel %vm80, %v347, 0
  %v374 = vsel %vm80, %v348, 0
  %v377 = vsel %vm80, %v349, 0
  %v380 = vsel %vm80, %v350, 0
  %v383 = vsel %vm80, %v351, 0
  %v386 = vsel %vm80, %v352, 0
  %v389 = vsel %vm80, %v353, 0
  %391 = vmatprep.subr.mxu0 0.0
  %392 = vmatpush1.msra.mxu0 0.0
  %393 = vmatprep.subr.mxu0 0.0
  %394 = vmatpush1.msra.mxu0 0.0
  %395 = vmatprep.subr.mxu0 0.0
  %396 = vmatpush1.msra.mxu0 0.0
  %397 = vmatprep.subr.mxu0 0.0
  %398 = vmatpush1.msra.mxu0 0.0
  %399 = vmatprep.subr.mxu0 0.0
  %400 = vmatpush1.msra.mxu0 0.0
  %401 = vmatprep.subr.mxu0 0.0
  %402 = vmatpush1.msra.mxu0 0.0
  %403 = vmatprep.subr.mxu0 0.0
  %404 = vmatpush1.msra.mxu0 0.0
  %405 = vmatprep.subr.mxu0 0.0
  %406 = vmatpush1.msra.mxu0 0.0
  %407 = vmatprep.subr.mxu0 0.0
  %408 = vmatpush1.msra.mxu0 0.0
  %409 = vmatprep.subr.mxu0 0.0
  %410 = vmatpush1.msra.mxu0 0.0
  %411 = vmatprep.subr.mxu0 0.0
  %412 = vmatpush1.msra.mxu0 0.0
  %413 = vmatprep.subr.mxu0 0.0
  %414 = vmatpush1.msra.mxu0 0.0
  %415 = vmatprep.subr.mxu0 0.0
  %416 = vmatpush1.msra.mxu0 %v358
  %417 = vmatprep.subr.mxu0 0.0
  %418 = vmatpush1.msra.mxu0 %v357
  %419 = vmatprep.subr.mxu0 0.0
  %420 = vmatpush1.msra.mxu0 %v356
  %421 = vmatprep.subr.mxu0 0.0
  %422 = vmatpush1.msra.mxu0 %v355
  %423 = vmatprep.subr.mxu0 0.0
  %424 = vmatpush2.msra.mxu0 0.0
  %425 = vmatprep.subr.mxu0 0.0
  %426 = vmatpush2.msra.mxu0 0.0
  %427 = vmatprep.subr.mxu0 0.0
  %428 = vmatpush2.msra.mxu0 0.0
  %429 = vmatprep.subr.mxu0 0.0
  %430 = vmatpush2.msra.mxu0 0.0
  %431 = vmatprep.subr.mxu0 0.0
  %432 = vmatpush2.msra.mxu0 0.0
  %433 = vmatprep.subr.mxu0 0.0
  %434 = vmatpush2.msra.mxu0 0.0
  %435 = vmatprep.subr.mxu0 0.0
  %436 = vmatpush2.msra.mxu0 0.0
  %437 = vmatprep.subr.mxu0 0.0
  %438 = vmatpush2.msra.mxu0 0.0
  %439 = vmatprep.subr.mxu0 0.0
  %440 = vmatpush2.msra.mxu0 0.0
  %441 = vmatprep.subr.mxu0 0.0
  %442 = vmatpush2.msra.mxu0 0.0
  %443 = vmatprep.subr.mxu0 0.0
  %444 = vmatpush2.msra.mxu0 0.0
  %445 = vmatprep.subr.mxu0 0.0
  %446 = vmatpush2.msra.mxu0 0.0
  %447 = vmatprep.subr.mxu0 0.0
  %448 = vmatpush2.msra.mxu0 0.0
  %449 = vmatprep.subr.mxu0 0.0
  %450 = vmatpush2.msra.mxu0 0.0
  %451 = vmatprep.subr.mxu0 0.0
  %452 = vmatpush2.msra.mxu0 0.0
  %453 = vmatprep.subr.mxu0 0.0
  %454 = vmatpush2.msra.mxu0 0.0
  %455 = vmatprep.mubr.f32.mxu0 0.0
  %456 = vmatmul.mubr.f32.gmra.mxu0 %v368
  %v457 = vpop.f32.mrf.mxu0
  %v458 = vadd.f32 %v365, %v457
  %v459 = vpop.f32.mrf.mxu0
  %460 = vmatprep.mubr.f32.mxu0 0.0
  %461 = vmatmul.mubr.f32.gmra.mxu0 %v371
  %v462 = vpop.f32.mrf.mxu0
  %v463 = vadd.f32 %v365, %v462
  %v464 = vpop.f32.mrf.mxu0
  %465 = vmatprep.mubr.f32.mxu0 0.0
  %466 = vmatmul.mubr.f32.gmra.mxu0 %v374
  %v467 = vpop.f32.mrf.mxu0
  %v468 = vadd.f32 %v365, %v467
  %v469 = vpop.f32.mrf.mxu0
  %470 = vmatprep.mubr.f32.mxu0 0.0
  %471 = vmatmul.mubr.f32.gmra.mxu0 %v377
  %v472 = vpop.f32.mrf.mxu0
  %v473 = vadd.f32 %v365, %v472
  %v474 = vpop.f32.mrf.mxu0
  %475 = vmatprep.mubr.f32.mxu0 0.0
  %476 = vmatmul.mubr.f32.gmra.mxu0 %v380
  %v477 = vpop.f32.mrf.mxu0
  %v478 = vadd.f32 %v365, %v477
  %v479 = vpop.f32.mrf.mxu0
  %480 = vmatprep.mubr.f32.mxu0 0.0
  %481 = vmatmul.mubr.f32.gmra.mxu0 %v383
  %v482 = vpop.f32.mrf.mxu0
  %v483 = vadd.f32 %v365, %v482
  %v484 = vpop.f32.mrf.mxu0
  %485 = vmatprep.mubr.f32.mxu0 0.0
  %486 = vmatmul.mubr.f32.gmra.mxu0 %v386
  %v487 = vpop.f32.mrf.mxu0
  %v488 = vadd.f32 %v365, %v487
  %v489 = vpop.f32.mrf.mxu0
  %490 = vmatprep.mubr.f32.mxu0 0.0
  %491 = vmatmul.mubr.f32.gmra.mxu0 %v389
  %v492 = vpop.f32.mrf.mxu0
  %v493 = vadd.f32 %v365, %v492
  %v494 = vpop.f32.mrf.mxu0
  %495 = vdwg.mxu0
  %v496 = vsub.f32 0.0, %v458
  %v497 = vsub.f32 0.0, %v463
  %v498 = vsub.f32 0.0, %v468
  %v499 = vsub.f32 0.0, %v473
  %v500 = vsub.f32 0.0, %v478
  %v501 = vsub.f32 0.0, %v483
  %v502 = vsub.f32 0.0, %v488
  %v503 = vsub.f32 0.0, %v493
  %v504 = vmul.f32 %v496, 1.442695
  %v505 = vpow.pop %v504
  %v506 = vmul.f32 %v497, 1.442695
  %v507 = vpow.pop %v506
  %v508 = vmul.f32 %v498, 1.442695
  %v509 = vpow.pop %v508
  %v510 = vmul.f32 %v499, 1.442695
  %v511 = vpow.pop %v510
  %v512 = vmul.f32 %v500, 1.442695
  %v513 = vpow.pop %v512
  %v514 = vmul.f32 %v501, 1.442695
  %v515 = vpow.pop %v514
  %v516 = vmul.f32 %v502, 1.442695
  %v517 = vpow.pop %v516
  %v518 = vmul.f32 %v503, 1.442695
  %v519 = vpow.pop %v518
  %v520 = vadd.f32 %v505, 1.0
  %v521 = vadd.f32 %v507, 1.0
  %v522 = vadd.f32 %v509, 1.0
  %v523 = vadd.f32 %v511, 1.0
  %v524 = vadd.f32 %v513, 1.0
  %v525 = vadd.f32 %v515, 1.0
  %v526 = vadd.f32 %v517, 1.0
  %v527 = vadd.f32 %v519, 1.0
  %v528 = vrcp.pop %v520
  %v529 = vrcp.pop %v521
  %v530 = vrcp.pop %v522
  %v531 = vrcp.pop %v523
  %v532 = vrcp.pop %v524
  %v533 = vrcp.pop %v525
  %v534 = vrcp.pop %v526
  %v535 = vrcp.pop %v527
  %v536 = vmax.f32 %v458, 0.0
  %v537 = vmax.f32 %v463, 0.0
  %v538 = vmax.f32 %v468, 0.0
  %v539 = vmax.f32 %v473, 0.0
  %v540 = vmax.f32 %v478, 0.0
  %v541 = vmax.f32 %v483, 0.0
  %v542 = vmax.f32 %v488, 0.0
  %v543 = vmax.f32 %v493, 0.0
  %552 = vrot.lane.b32.xlu0 %v536, 96
  %v553 = vpop.permute.xlu0 %552
  %554 = vrot.lane.b32.xlu0 %v537, 96
  %v555 = vpop.permute.xlu0 %554
  %556 = vrot.lane.b32.xlu0 %v538, 96
  %v557 = vpop.permute.xlu0 %556
  %558 = vrot.lane.b32.xlu0 %v539, 96
  %v559 = vpop.permute.xlu0 %558
  %560 = vrot.lane.b32.xlu0 %v540, 96
  %v561 = vpop.permute.xlu0 %560
  %562 = vrot.lane.b32.xlu0 %v541, 96
  %v563 = vpop.permute.xlu0 %562
  %564 = vrot.lane.b32.xlu0 %v542, 96
  %v565 = vpop.permute.xlu0 %564
  %566 = vrot.lane.b32.xlu0 %v543, 96
  %v567 = vpop.permute.xlu0 %566
  %v576 = vmul.f32 %v528, %v553
  %v577 = vmul.f32 %v529, %v555
  %v578 = vmul.f32 %v530, %v557
  %v579 = vmul.f32 %v531, %v559
  %v580 = vmul.f32 %v532, %v561
  %v581 = vmul.f32 %v533, %v563
  %v582 = vmul.f32 %v534, %v565
  %v583 = vmul.f32 %v535, %v567
  %v584 = vsub.f32 1.0, %v528
  %v585 = vsub.f32 1.0, %v529
  %v586 = vsub.f32 1.0, %v530
  %v587 = vsub.f32 1.0, %v531
  %v588 = vsub.f32 1.0, %v532
  %v589 = vsub.f32 1.0, %v533
  %v590 = vsub.f32 1.0, %v534
  %v591 = vsub.f32 1.0, %v535
  %600 = vrot.lane.b32.xlu0 %v458, 64
  %v601 = vpop.permute.xlu0 %600
  %602 = vrot.lane.b32.xlu0 %v463, 64
  %v603 = vpop.permute.xlu0 %602
  %604 = vrot.lane.b32.xlu0 %v468, 64
  %v605 = vpop.permute.xlu0 %604
  %606 = vrot.lane.b32.xlu0 %v473, 64
  %v607 = vpop.permute.xlu0 %606
  %608 = vrot.lane.b32.xlu0 %v478, 64
  %v609 = vpop.permute.xlu0 %608
  %610 = vrot.lane.b32.xlu0 %v483, 64
  %v611 = vpop.permute.xlu0 %610
  %612 = vrot.lane.b32.xlu0 %v488, 64
  %v613 = vpop.permute.xlu0 %612
  %614 = vrot.lane.b32.xlu0 %v493, 64
  %v615 = vpop.permute.xlu0 %614
  %v624 = vmul.f32 %v584, %v601
  %v625 = vmul.f32 %v585, %v603
  %v626 = vmul.f32 %v586, %v605
  %v627 = vmul.f32 %v587, %v607
  %v628 = vmul.f32 %v588, %v609
  %v629 = vmul.f32 %v589, %v611
  %v630 = vmul.f32 %v590, %v613
  %v631 = vmul.f32 %v591, %v615
  %v632 = vadd.f32 %v576, %v624
  %v633 = vadd.f32 %v577, %v625
  %v634 = vadd.f32 %v578, %v626
  %v635 = vadd.f32 %v579, %v627
  %v636 = vadd.f32 %v580, %v628
  %v637 = vadd.f32 %v581, %v629
  %v638 = vadd.f32 %v582, %v630
  %v639 = vadd.f32 %v583, %v631
  %v640 = vld [vmem:[%s7] sm:$0xff]
  %v641 = vld [vmem:[%s7 + $0x8] sm:$0xff]
  %v642 = vld [vmem:[%s7 + $0x10] sm:$0xff]
  %v643 = vld [vmem:[%s7 + $0x18] sm:$0xff]
  %v644 = vld [vmem:[%s7 + $0x20] sm:$0xff]
  %v645 = vld [vmem:[%s7 + $0x28] sm:$0xff]
  %v646 = vld [vmem:[%s7 + $0x30] sm:$0xff]
  %v647 = vld [vmem:[%s7 + $0x38] sm:$0xff]
  %v648 = vld [vmem:[%s9] sm:$0x3]
  %v650 = vlaneseq
  %v651 = vshrl.u32 %v650, 7
  %v652 = vsub.s32 0, %v651
  %v653 = vrot.slane %v648, %v652
  %v654 = vlaneseq
  %v655 = vshrl.u32 %v654, 7
  %v656 = vsub.s32 1, %v655
  %v657 = vrot.slane %v648, %v656
  %v661 = vsel %vm80, %v632, 0
  %v664 = vsel %vm80, %v633, 0
  %v667 = vsel %vm80, %v634, 0
  %v670 = vsel %vm80, %v635, 0
  %v673 = vsel %vm80, %v636, 0
  %v676 = vsel %vm80, %v637, 0
  %v679 = vsel %vm80, %v638, 0
  %v682 = vsel %vm80, %v639, 0
  %684 = vmatprep.subr.mxu0 0.0
  %685 = vmatpush1.msra.mxu0 0.0
  %686 = vmatprep.subr.mxu0 0.0
  %687 = vmatpush1.msra.mxu0 0.0
  %688 = vmatprep.subr.mxu0 0.0
  %689 = vmatpush1.msra.mxu0 0.0
  %690 = vmatprep.subr.mxu0 0.0
  %691 = vmatpush1.msra.mxu0 0.0
  %692 = vmatprep.subr.mxu0 0.0
  %693 = vmatpush1.msra.mxu0 0.0
  %694 = vmatprep.subr.mxu0 0.0
  %695 = vmatpush1.msra.mxu0 0.0
  %696 = vmatprep.subr.mxu0 0.0
  %697 = vmatpush1.msra.mxu0 0.0
  %698 = vmatprep.subr.mxu0 0.0
  %699 = vmatpush1.msra.mxu0 0.0
  %700 = vmatprep.subr.mxu0 0.0
  %701 = vmatpush1.msra.mxu0 0.0
  %702 = vmatprep.subr.mxu0 0.0
  %703 = vmatpush1.msra.mxu0 0.0
  %704 = vmatprep.subr.mxu0 0.0
  %705 = vmatpush1.msra.mxu0 0.0
  %706 = vmatprep.subr.mxu0 0.0
  %707 = vmatpush1.msra.mxu0 0.0
  %708 = vmatprep.subr.mxu0 %v647
  %709 = vmatpush1.msra.mxu0 %v646
  %710 = vmatprep.subr.mxu0 %v645
  %711 = vmatpush1.msra.mxu0 %v644
  %712 = vmatprep.subr.mxu0 %v643
  %713 = vmatpush1.msra.mxu0 %v642
  %714 = vmatprep.subr.mxu0 %v641
  %715 = vmatpush1.msra.mxu0 %v640
  %716 = vmatprep.subr.mxu0 0.0
  %717 = vmatpush2.msra.mxu0 0.0
  %718 = vmatprep.subr.mxu0 0.0
  %719 = vmatpush2.msra.mxu0 0.0
  %720 = vmatprep.subr.mxu0 0.0
  %721 = vmatpush2.msra.mxu0 0.0
  %722 = vmatprep.subr.mxu0 0.0
  %723 = vmatpush2.msra.mxu0 0.0
  %724 = vmatprep.subr.mxu0 0.0
  %725 = vmatpush2.msra.mxu0 0.0
  %726 = vmatprep.subr.mxu0 0.0
  %727 = vmatpush2.msra.mxu0 0.0
  %728 = vmatprep.subr.mxu0 0.0
  %729 = vmatpush2.msra.mxu0 0.0
  %730 = vmatprep.subr.mxu0 0.0
  %731 = vmatpush2.msra.mxu0 0.0
  %732 = vmatprep.subr.mxu0 0.0
  %733 = vmatpush2.msra.mxu0 0.0
  %734 = vmatprep.subr.mxu0 0.0
  %735 = vmatpush2.msra.mxu0 0.0
  %736 = vmatprep.subr.mxu0 0.0
  %737 = vmatpush2.msra.mxu0 0.0
  %738 = vmatprep.subr.mxu0 0.0
  %739 = vmatpush2.msra.mxu0 0.0
  %740 = vmatprep.subr.mxu0 0.0
  %741 = vmatpush2.msra.mxu0 0.0
  %742 = vmatprep.subr.mxu0 0.0
  %743 = vmatpush2.msra.mxu0 0.0
  %744 = vmatprep.subr.mxu0 0.0
  %745 = vmatpush2.msra.mxu0 0.0
  %746 = vmatprep.subr.mxu0 0.0
  %747 = vmatpush2.msra.mxu0 0.0
  %748 = vmatprep.mubr.f32.mxu0 0.0
  %749 = vmatmul.mubr.f32.gmra.mxu0 %v661
  %v750 = vpop.f32.mrf.mxu0
  %v751 = vadd.f32 %v653, %v750
  %v752 = vpop.f32.mrf.mxu0
  %v753 = vadd.f32 %v657, %v752
  %754 = vmatprep.mubr.f32.mxu0 0.0
  %755 = vmatmul.mubr.f32.gmra.mxu0 %v664
  %v756 = vpop.f32.mrf.mxu0
  %v757 = vadd.f32 %v653, %v756
  %v758 = vpop.f32.mrf.mxu0
  %v759 = vadd.f32 %v657, %v758
  %760 = vmatprep.mubr.f32.mxu0 0.0
  %761 = vmatmul.mubr.f32.gmra.mxu0 %v667
  %v762 = vpop.f32.mrf.mxu0
  %v763 = vadd.f32 %v653, %v762
  %v764 = vpop.f32.mrf.mxu0
  %v765 = vadd.f32 %v657, %v764
  %766 = vmatprep.mubr.f32.mxu0 0.0
  %767 = vmatmul.mubr.f32.gmra.mxu0 %v670
  %v768 = vpop.f32.mrf.mxu0
  %v769 = vadd.f32 %v653, %v768
  %v770 = vpop.f32.mrf.mxu0
  %v771 = vadd.f32 %v657, %v770
  %772 = vmatprep.mubr.f32.mxu0 0.0
  %773 = vmatmul.mubr.f32.gmra.mxu0 %v673
  %v774 = vpop.f32.mrf.mxu0
  %v775 = vadd.f32 %v653, %v774
  %v776 = vpop.f32.mrf.mxu0
  %v777 = vadd.f32 %v657, %v776
  %778 = vmatprep.mubr.f32.mxu0 0.0
  %779 = vmatmul.mubr.f32.gmra.mxu0 %v676
  %v780 = vpop.f32.mrf.mxu0
  %v781 = vadd.f32 %v653, %v780
  %v782 = vpop.f32.mrf.mxu0
  %v783 = vadd.f32 %v657, %v782
  %784 = vmatprep.mubr.f32.mxu0 0.0
  %785 = vmatmul.mubr.f32.gmra.mxu0 %v679
  %v786 = vpop.f32.mrf.mxu0
  %v787 = vadd.f32 %v653, %v786
  %v788 = vpop.f32.mrf.mxu0
  %v789 = vadd.f32 %v657, %v788
  %790 = vmatprep.mubr.f32.mxu0 0.0
  %791 = vmatmul.mubr.f32.gmra.mxu0 %v682
  %v792 = vpop.f32.mrf.mxu0
  %v793 = vadd.f32 %v653, %v792
  %v794 = vpop.f32.mrf.mxu0
  %v795 = vadd.f32 %v657, %v794
  %796 = vdwg.mxu0
  %797 = vst [vmem:[#allocation2] sm:$0xff] %v751
  %798 = vst [vmem:[#allocation2 + $0x8] sm:$0xff] %v795
  %799 = vst [vmem:[#allocation2 + $0x10] sm:$0xff] %v757
  %800 = vst [vmem:[#allocation2 + $0x18] sm:$0xff] %v789
  %801 = vst [vmem:[#allocation2 + $0x20] sm:$0xff] %v763
  %802 = vst [vmem:[#allocation2 + $0x28] sm:$0xff] %v783
  %803 = vst [vmem:[#allocation2 + $0x30] sm:$0xff] %v769
  %804 = vst [vmem:[#allocation2 + $0x38] sm:$0xff] %v777
  %805 = vst [vmem:[#allocation2 + $0x40] sm:$0xff] %v775
  %806 = vst [vmem:[#allocation2 + $0x48] sm:$0xff] %v771
  %807 = vst [vmem:[#allocation2 + $0x50] sm:$0xff] %v781
  %808 = vst [vmem:[#allocation2 + $0x58] sm:$0xff] %v765
  %809 = vst [vmem:[#allocation2 + $0x60] sm:$0xff] %v787
  %810 = vst [vmem:[#allocation2 + $0x68] sm:$0xff] %v759
  %811 = vst [vmem:[#allocation2 + $0x70] sm:$0xff] %v793
  %812 = vst [vmem:[#allocation2 + $0x78] sm:$0xff] %v753
  %v813 = vlaneseq
  %v814 = vand.u32 %v813, 127
  %vm815 = vcmp.ge.s32.totalorder %v814, 64
  %vm816 = vcmp.lt.s32.totalorder %v814, 96
  %vm817 = vmand %vm815, %vm816
  %v818 = vsel %vm817, 2.0, 1.0
  %v819 = vsel %vm817, 1.0, 0.0
  %v820 = vlaneseq
  %v821 = vshrl.u32 %v820, 7
  %v822 = vadd.s32 %v821, 8
  %vm823 = vcmp.lt.s32.totalorder %v821, 8
  %vm824 = vcmp.lt.s32.totalorder %v822, 8
  %vm825 = vcmp.lt.s32.totalorder %v814, 32
  %vm826 = vmand %vm823, %vm825
  %vm827 = vmand %vm824, %vm825
  %vm828 = vcmp.ge.s32.totalorder %v821, 8
  %vm829 = vcmp.ge.s32.totalorder %v822, 8
  %vm830 = vcmp.ge.s32.totalorder %v814, 32
  %vm831 = vmand %vm828, %vm830
  %vm832 = vmand %vm829, %vm830
  %vm833 = vmor %vm826, %vm831
  %vm834 = vmor %vm827, %vm832
  %v835 = vsel %vm833, 1.0, 0.0
  %v836 = vsel %vm834, 1.0, 0.0
  %v837 = vld [vmem:[%s8] sm:$0xff]
  %v838 = vld [vmem:[%s8 + $0x8] sm:$0xff]
  %v839 = vld [vmem:[%s8 + $0x10] sm:$0xff]
  %v840 = vld [vmem:[%s8 + $0x18] sm:$0xff]
  %v841 = vld [vmem:[%s8 + $0x20] sm:$0xff]
  %v842 = vld [vmem:[%s8 + $0x28] sm:$0xff]
  %v843 = vld [vmem:[%s8 + $0x30] sm:$0xff]
  %v844 = vld [vmem:[%s8 + $0x38] sm:$0xff]
  %v845 = vld [vmem:[#allocation2] sm:$0xff]
  %v846 = vld [vmem:[#allocation2 + $0x8] sm:$0xff]
  %vm847 = vcmask 523264
  %v849 = vsel %vm847, 0.0, 0
  %851 = vmatprep.subr.mxu0 0.0
  %852 = vmatpush1.msra.mxu0 0.0
  %853 = vmatprep.subr.mxu0 0.0
  %854 = vmatpush1.msra.mxu0 0.0
  %855 = vmatprep.subr.mxu0 0.0
  %856 = vmatpush1.msra.mxu0 0.0
  %857 = vmatprep.subr.mxu0 0.0
  %858 = vmatpush1.msra.mxu0 0.0
  %859 = vmatprep.subr.mxu0 0.0
  %860 = vmatpush1.msra.mxu0 0.0
  %861 = vmatprep.subr.mxu0 0.0
  %862 = vmatpush1.msra.mxu0 0.0
  %863 = vmatprep.subr.mxu0 0.0
  %864 = vmatpush1.msra.mxu0 0.0
  %865 = vmatprep.subr.mxu0 0.0
  %866 = vmatpush1.msra.mxu0 0.0
  %867 = vmatprep.subr.mxu0 0.0
  %868 = vmatpush1.msra.mxu0 %v844
  %869 = vmatprep.subr.mxu0 0.0
  %870 = vmatpush1.msra.mxu0 %v843
  %871 = vmatprep.subr.mxu0 0.0
  %872 = vmatpush1.msra.mxu0 %v842
  %873 = vmatprep.subr.mxu0 0.0
  %874 = vmatpush1.msra.mxu0 %v841
  %875 = vmatprep.subr.mxu0 0.0
  %876 = vmatpush1.msra.mxu0 %v840
  %877 = vmatprep.subr.mxu0 0.0
  %878 = vmatpush1.msra.mxu0 %v839
  %879 = vmatprep.subr.mxu0 0.0
  %880 = vmatpush1.msra.mxu0 %v838
  %881 = vmatprep.subr.mxu0 0.0
  %882 = vmatpush1.msra.mxu0 %v837
  %883 = vmatprep.subr.mxu0 0.0
  %884 = vmatpush2.msra.mxu0 0.0
  %885 = vmatprep.subr.mxu0 0.0
  %886 = vmatpush2.msra.mxu0 0.0
  %887 = vmatprep.subr.mxu0 0.0
  %888 = vmatpush2.msra.mxu0 0.0
  %889 = vmatprep.subr.mxu0 0.0
  %890 = vmatpush2.msra.mxu0 0.0
  %891 = vmatprep.subr.mxu0 0.0
  %892 = vmatpush2.msra.mxu0 0.0
  %893 = vmatprep.subr.mxu0 0.0
  %894 = vmatpush2.msra.mxu0 0.0
  %895 = vmatprep.subr.mxu0 0.0
  %896 = vmatpush2.msra.mxu0 0.0
  %897 = vmatprep.subr.mxu0 0.0
  %898 = vmatpush2.msra.mxu0 0.0
  %899 = vmatprep.subr.mxu0 0.0
  %900 = vmatpush2.msra.mxu0 0.0
  %901 = vmatprep.subr.mxu0 0.0
  %902 = vmatpush2.msra.mxu0 0.0
  %903 = vmatprep.subr.mxu0 0.0
  %904 = vmatpush2.msra.mxu0 0.0
  %905 = vmatprep.subr.mxu0 0.0
  %906 = vmatpush2.msra.mxu0 0.0
  %907 = vmatprep.subr.mxu0 0.0
  %908 = vmatpush2.msra.mxu0 0.0
  %909 = vmatprep.subr.mxu0 0.0
  %910 = vmatpush2.msra.mxu0 0.0
  %911 = vmatprep.subr.mxu0 0.0
  %912 = vmatpush2.msra.mxu0 0.0
  %913 = vmatprep.subr.mxu0 0.0
  %914 = vmatpush2.msra.mxu0 0.0
  %915 = vmatprep.mubr.f32.mxu0 0.0
  %916 = vmatmul.mubr.f32.gmra.mxu0 %v849
  %v917 = vpop.f32.mrf.mxu0
  %v918 = vadd.f32 0.0, %v917
  %v919 = vpop.f32.mrf.mxu0
  %920 = vmatprep.mubr.f32.mxu0 0.0
  %921 = vmatmul.mubr.f32.gmra.mxu0 %v849
  %v922 = vpop.f32.mrf.mxu0
  %v923 = vadd.f32 0.0, %v922
  %v924 = vpop.f32.mrf.mxu0
  %925 = vdwg.mxu0
  %v926 = vadd.f32 %v845, %v918
  %v927 = vadd.f32 %v846, %v923
  %v928 = vmul.f32 %v926, %v818
  %v929 = vmul.f32 %v927, %v818
  %v930 = vsub.f32 0.0, %v928
  %v931 = vsub.f32 0.0, %v929
  %v932 = vmul.f32 %v930, 1.442695
  %v933 = vpow.pop %v932
  %v934 = vmul.f32 %v931, 1.442695
  %v935 = vpow.pop %v934
  %v936 = vadd.f32 %v933, 1.0
  %v937 = vadd.f32 %v935, 1.0
  %v938 = vrcp.pop %v936
  %v939 = vrcp.pop %v937
  %v940 = vmul.f32 %v938, %v818
  %v941 = vmul.f32 %v939, %v818
  %v942 = vsub.f32 %v940, %v819
  %v943 = vsub.f32 %v941, %v819
  %v944 = vmul.f32 %v942, 0.0
  %v945 = vmul.f32 %v943, 0.0
  %948 = vrot.lane.b32.xlu0 %v942, 64
  %v949 = vpop.permute.xlu0 %948
  %950 = vrot.lane.b32.xlu0 %v943, 64
  %v951 = vpop.permute.xlu0 %950
  %v954 = vmul.f32 %v942, %v949
  %v955 = vmul.f32 %v943, %v951
  %958 = vrot.lane.b32.xlu0 %v954, 32
  %v959 = vpop.permute.xlu0 %958
  %960 = vrot.lane.b32.xlu0 %v955, 32
  %v961 = vpop.permute.xlu0 %960
  %v964 = vadd.f32 %v944, %v959
  %v965 = vadd.f32 %v945, %v961
  %v966 = vtanh.pop %v964
  %v967 = vtanh.pop %v965
  %970 = vrot.lane.b32.xlu0 %v966, 64
  %v971 = vpop.permute.xlu0 %970
  %972 = vrot.lane.b32.xlu0 %v967, 64
  %v973 = vpop.permute.xlu0 %972
  %v976 = vmul.f32 %v942, %v971
  %v977 = vmul.f32 %v943, %v973
  %980 = vrot.lane.b32.xlu0 %v976, 32
  %v981 = vpop.permute.xlu0 %980
  %982 = vrot.lane.b32.xlu0 %v977, 32
  %v983 = vpop.permute.xlu0 %982
  %986 = vrot.lane.b32.xlu0 %v976, 64
  %v987 = vpop.permute.xlu0 %986
  %988 = vrot.lane.b32.xlu0 %v977, 64
  %v989 = vpop.permute.xlu0 %988
  %v992 = vsel %vm80, %v981, %v987
  %v993 = vsel %vm80, %v983, %v989
  %v994 = vmul.f32 %v992, %v835
  %v995 = vmul.f32 %v993, %v836
  %v996 = vld [vmem:[#allocation2 + $0x10] sm:$0xff]
  %v997 = vld [vmem:[#allocation2 + $0x18] sm:$0xff]
  %v999 = vsel %vm847, %v994, 0
  %v1002 = vsel %vm847, %v995, 0
  %1004 = vmatprep.subr.mxu0 0.0
  %1005 = vmatpush1.msra.mxu0 0.0
  %1006 = vmatprep.subr.mxu0 0.0
  %1007 = vmatpush1.msra.mxu0 0.0
  %1008 = vmatprep.subr.mxu0 0.0
  %1009 = vmatpush1.msra.mxu0 0.0
  %1010 = vmatprep.subr.mxu0 0.0
  %1011 = vmatpush1.msra.mxu0 0.0
  %1012 = vmatprep.subr.mxu0 0.0
  %1013 = vmatpush1.msra.mxu0 0.0
  %1014 = vmatprep.subr.mxu0 0.0
  %1015 = vmatpush1.msra.mxu0 0.0
  %1016 = vmatprep.subr.mxu0 0.0
  %1017 = vmatpush1.msra.mxu0 0.0
  %1018 = vmatprep.subr.mxu0 0.0
  %1019 = vmatpush1.msra.mxu0 0.0
  %1020 = vmatprep.subr.mxu0 0.0
  %1021 = vmatpush1.msra.mxu0 %v844
  %1022 = vmatprep.subr.mxu0 0.0
  %1023 = vmatpush1.msra.mxu0 %v843
  %1024 = vmatprep.subr.mxu0 0.0
  %1025 = vmatpush1.msra.mxu0 %v842
  %1026 = vmatprep.subr.mxu0 0.0
  %1027 = vmatpush1.msra.mxu0 %v841
  %1028 = vmatprep.subr.mxu0 0.0
  %1029 = vmatpush1.msra.mxu0 %v840
  %1030 = vmatprep.subr.mxu0 0.0
  %1031 = vmatpush1.msra.mxu0 %v839
  %1032 = vmatprep.subr.mxu0 0.0
  %1033 = vmatpush1.msra.mxu0 %v838
  %1034 = vmatprep.subr.mxu0 0.0
  %1035 = vmatpush1.msra.mxu0 %v837
  %1036 = vmatprep.subr.mxu0 0.0
  %1037 = vmatpush2.msra.mxu0 0.0
  %1038 = vmatprep.subr.mxu0 0.0
  %1039 = vmatpush2.msra.mxu0 0.0
  %1040 = vmatprep.subr.mxu0 0.0
  %1041 = vmatpush2.msra.mxu0 0.0
  %1042 = vmatprep.subr.mxu0 0.0
  %1043 = vmatpush2.msra.mxu0 0.0
  %1044 = vmatprep.subr.mxu0 0.0
  %1045 = vmatpush2.msra.mxu0 0.0
  %1046 = vmatprep.subr.mxu0 0.0
  %1047 = vmatpush2.msra.mxu0 0.0
  %1048 = vmatprep.subr.mxu0 0.0
  %1049 = vmatpush2.msra.mxu0 0.0
  %1050 = vmatprep.subr.mxu0 0.0
  %1051 = vmatpush2.msra.mxu0 0.0
  %1052 = vmatprep.subr.mxu0 0.0
  %1053 = vmatpush2.msra.mxu0 0.0
  %1054 = vmatprep.subr.mxu0 0.0
  %1055 = vmatpush2.msra.mxu0 0.0
  %1056 = vmatprep.subr.mxu0 0.0
  %1057 = vmatpush2.msra.mxu0 0.0
  %1058 = vmatprep.subr.mxu0 0.0
  %1059 = vmatpush2.msra.mxu0 0.0
  %1060 = vmatprep.subr.mxu0 0.0
  %1061 = vmatpush2.msra.mxu0 0.0
  %1062 = vmatprep.subr.mxu0 0.0
  %1063 = vmatpush2.msra.mxu0 0.0
  %1064 = vmatprep.subr.mxu0 0.0
  %1065 = vmatpush2.msra.mxu0 0.0
  %1066 = vmatprep.subr.mxu0 0.0
  %1067 = vmatpush2.msra.mxu0 0.0
  %1068 = vmatprep.mubr.f32.mxu0 0.0
  %1069 = vmatmul.mubr.f32.gmra.mxu0 %v999
  %v1070 = vpop.f32.mrf.mxu0
  %v1071 = vadd.f32 0.0, %v1070
  %v1072 = vpop.f32.mrf.mxu0
  %1073 = vmatprep.mubr.f32.mxu0 0.0
  %1074 = vmatmul.mubr.f32.gmra.mxu0 %v1002
  %v1075 = vpop.f32.mrf.mxu0
  %v1076 = vadd.f32 0.0, %v1075
  %v1077 = vpop.f32.mrf.mxu0
  %1078 = vdwg.mxu0
  %v1079 = vadd.f32 %v996, %v1071
  %v1080 = vadd.f32 %v997, %v1076
  %v1081 = vmul.f32 %v1079, %v818
  %v1082 = vmul.f32 %v1080, %v818
  %v1083 = vsub.f32 0.0, %v1081
  %v1084 = vsub.f32 0.0, %v1082
  %v1085 = vmul.f32 %v1083, 1.442695
  %v1086 = vpow.pop %v1085
  %v1087 = vmul.f32 %v1084, 1.442695
  %v1088 = vpow.pop %v1087
  %v1089 = vadd.f32 %v1086, 1.0
  %v1090 = vadd.f32 %v1088, 1.0
  %v1091 = vrcp.pop %v1089
  %v1092 = vrcp.pop %v1090
  %v1093 = vmul.f32 %v1091, %v818
  %v1094 = vmul.f32 %v1092, %v818
  %v1095 = vsub.f32 %v1093, %v819
  %v1096 = vsub.f32 %v1094, %v819
  %v1097 = vmul.f32 %v1095, %v964
  %v1098 = vmul.f32 %v1096, %v965
  %1101 = vrot.lane.b32.xlu0 %v1095, 64
  %v1102 = vpop.permute.xlu0 %1101
  %1103 = vrot.lane.b32.xlu0 %v1096, 64
  %v1104 = vpop.permute.xlu0 %1103
  %v1107 = vmul.f32 %v1095, %v1102
  %v1108 = vmul.f32 %v1096, %v1104
  %1111 = vrot.lane.b32.xlu0 %v1107, 32
  %v1112 = vpop.permute.xlu0 %1111
  %1113 = vrot.lane.b32.xlu0 %v1108, 32
  %v1114 = vpop.permute.xlu0 %1113
  %v1117 = vadd.f32 %v1097, %v1112
  %v1118 = vadd.f32 %v1098, %v1114
  %v1119 = vtanh.pop %v1117
  %v1120 = vtanh.pop %v1118
  %1123 = vrot.lane.b32.xlu0 %v1119, 64
  %v1124 = vpop.permute.xlu0 %1123
  %1125 = vrot.lane.b32.xlu0 %v1120, 64
  %v1126 = vpop.permute.xlu0 %1125
  %v1129 = vmul.f32 %v1095, %v1124
  %v1130 = vmul.f32 %v1096, %v1126
  %1133 = vrot.lane.b32.xlu0 %v1129, 32
  %v1134 = vpop.permute.xlu0 %1133
  %1135 = vrot.lane.b32.xlu0 %v1130, 32
  %v1136 = vpop.permute.xlu0 %1135
  %1139 = vrot.lane.b32.xlu0 %v1129, 64
  %v1140 = vpop.permute.xlu0 %1139
  %1141 = vrot.lane.b32.xlu0 %v1130, 64
  %v1142 = vpop.permute.xlu0 %1141
  %v1145 = vsel %vm80, %v1134, %v1140
  %v1146 = vsel %vm80, %v1136, %v1142
  %v1147 = vmul.f32 %v1145, %v835
  %v1148 = vmul.f32 %v1146, %v836
  %v1149 = vld [vmem:[#allocation2 + $0x20] sm:$0xff]
  %v1150 = vld [vmem:[#allocation2 + $0x28] sm:$0xff]
  %v1152 = vsel %vm847, %v1147, 0
  %v1155 = vsel %vm847, %v1148, 0
  %1157 = vmatprep.subr.mxu0 0.0
  %1158 = vmatpush1.msra.mxu0 0.0
  %1159 = vmatprep.subr.mxu0 0.0
  %1160 = vmatpush1.msra.mxu0 0.0
  %1161 = vmatprep.subr.mxu0 0.0
  %1162 = vmatpush1.msra.mxu0 0.0
  %1163 = vmatprep.subr.mxu0 0.0
  %1164 = vmatpush1.msra.mxu0 0.0
  %1165 = vmatprep.subr.mxu0 0.0
  %1166 = vmatpush1.msra.mxu0 0.0
  %1167 = vmatprep.subr.mxu0 0.0
  %1168 = vmatpush1.msra.mxu0 0.0
  %1169 = vmatprep.subr.mxu0 0.0
  %1170 = vmatpush1.msra.mxu0 0.0
  %1171 = vmatprep.subr.mxu0 0.0
  %1172 = vmatpush1.msra.mxu0 0.0
  %1173 = vmatprep.subr.mxu0 0.0
  %1174 = vmatpush1.msra.mxu0 %v844
  %1175 = vmatprep.subr.mxu0 0.0
  %1176 = vmatpush1.msra.mxu0 %v843
  %1177 = vmatprep.subr.mxu0 0.0
  %1178 = vmatpush1.msra.mxu0 %v842
  %1179 = vmatprep.subr.mxu0 0.0
  %1180 = vmatpush1.msra.mxu0 %v841
  %1181 = vmatprep.subr.mxu0 0.0
  %1182 = vmatpush1.msra.mxu0 %v840
  %1183 = vmatprep.subr.mxu0 0.0
  %1184 = vmatpush1.msra.mxu0 %v839
  %1185 = vmatprep.subr.mxu0 0.0
  %1186 = vmatpush1.msra.mxu0 %v838
  %1187 = vmatprep.subr.mxu0 0.0
  %1188 = vmatpush1.msra.mxu0 %v837
  %1189 = vmatprep.subr.mxu0 0.0
  %1190 = vmatpush2.msra.mxu0 0.0
  %1191 = vmatprep.subr.mxu0 0.0
  %1192 = vmatpush2.msra.mxu0 0.0
  %1193 = vmatprep.subr.mxu0 0.0
  %1194 = vmatpush2.msra.mxu0 0.0
  %1195 = vmatprep.subr.mxu0 0.0
  %1196 = vmatpush2.msra.mxu0 0.0
  %1197 = vmatprep.subr.mxu0 0.0
  %1198 = vmatpush2.msra.mxu0 0.0
  %1199 = vmatprep.subr.mxu0 0.0
  %1200 = vmatpush2.msra.mxu0 0.0
  %1201 = vmatprep.subr.mxu0 0.0
  %1202 = vmatpush2.msra.mxu0 0.0
  %1203 = vmatprep.subr.mxu0 0.0
  %1204 = vmatpush2.msra.mxu0 0.0
  %1205 = vmatprep.subr.mxu0 0.0
  %1206 = vmatpush2.msra.mxu0 0.0
  %1207 = vmatprep.subr.mxu0 0.0
  %1208 = vmatpush2.msra.mxu0 0.0
  %1209 = vmatprep.subr.mxu0 0.0
  %1210 = vmatpush2.msra.mxu0 0.0
  %1211 = vmatprep.subr.mxu0 0.0
  %1212 = vmatpush2.msra.mxu0 0.0
  %1213 = vmatprep.subr.mxu0 0.0
  %1214 = vmatpush2.msra.mxu0 0.0
  %1215 = vmatprep.subr.mxu0 0.0
  %1216 = vmatpush2.msra.mxu0 0.0
  %1217 = vmatprep.subr.mxu0 0.0
  %1218 = vmatpush2.msra.mxu0 0.0
  %1219 = vmatprep.subr.mxu0 0.0
  %1220 = vmatpush2.msra.mxu0 0.0
  %1221 = vmatprep.mubr.f32.mxu0 0.0
  %1222 = vmatmul.mubr.f32.gmra.mxu0 %v1152
  %v1223 = vpop.f32.mrf.mxu0
  %v1224 = vadd.f32 0.0, %v1223
  %v1225 = vpop.f32.mrf.mxu0
  %1226 = vmatprep.mubr.f32.mxu0 0.0
  %1227 = vmatmul.mubr.f32.gmra.mxu0 %v1155
  %v1228 = vpop.f32.mrf.mxu0
  %v1229 = vadd.f32 0.0, %v1228
  %v1230 = vpop.f32.mrf.mxu0
  %1231 = vdwg.mxu0
  %v1232 = vadd.f32 %v1149, %v1224
  %v1233 = vadd.f32 %v1150, %v1229
  %v1234 = vmul.f32 %v1232, %v818
  %v1235 = vmul.f32 %v1233, %v818
  %v1236 = vsub.f32 0.0, %v1234
  %v1237 = vsub.f32 0.0, %v1235
  %v1238 = vmul.f32 %v1236, 1.442695
  %v1239 = vpow.pop %v1238
  %v1240 = vmul.f32 %v1237, 1.442695
  %v1241 = vpow.pop %v1240
  %v1242 = vadd.f32 %v1239, 1.0
  %v1243 = vadd.f32 %v1241, 1.0
  %v1244 = vrcp.pop %v1242
  %v1245 = vrcp.pop %v1243
  %v1246 = vmul.f32 %v1244, %v818
  %v1247 = vmul.f32 %v1245, %v818
  %v1248 = vsub.f32 %v1246, %v819
  %v1249 = vsub.f32 %v1247, %v819
  %v1250 = vmul.f32 %v1248, %v1117
  %v1251 = vmul.f32 %v1249, %v1118
  %1254 = vrot.lane.b32.xlu0 %v1248, 64
  %v1255 = vpop.permute.xlu0 %1254
  %1256 = vrot.lane.b32.xlu0 %v1249, 64
  %v1257 = vpop.permute.xlu0 %1256
  %v1260 = vmul.f32 %v1248, %v1255
  %v1261 = vmul.f32 %v1249, %v1257
  %1264 = vrot.lane.b32.xlu0 %v1260, 32
  %v1265 = vpop.permute.xlu0 %1264
  %1266 = vrot.lane.b32.xlu0 %v1261, 32
  %v1267 = vpop.permute.xlu0 %1266
  %v1270 = vadd.f32 %v1250, %v1265
  %v1271 = vadd.f32 %v1251, %v1267
  %v1272 = vtanh.pop %v1270
  %v1273 = vtanh.pop %v1271
  %1276 = vrot.lane.b32.xlu0 %v1272, 64
  %v1277 = vpop.permute.xlu0 %1276
  %1278 = vrot.lane.b32.xlu0 %v1273, 64
  %v1279 = vpop.permute.xlu0 %1278
  %v1282 = vmul.f32 %v1248, %v1277
  %v1283 = vmul.f32 %v1249, %v1279
  %1286 = vrot.lane.b32.xlu0 %v1282, 32
  %v1287 = vpop.permute.xlu0 %1286
  %1288 = vrot.lane.b32.xlu0 %v1283, 32
  %v1289 = vpop.permute.xlu0 %1288
  %1292 = vrot.lane.b32.xlu0 %v1282, 64
  %v1293 = vpop.permute.xlu0 %1292
  %1294 = vrot.lane.b32.xlu0 %v1283, 64
  %v1295 = vpop.permute.xlu0 %1294
  %v1298 = vsel %vm80, %v1287, %v1293
  %v1299 = vsel %vm80, %v1289, %v1295
  %v1300 = vmul.f32 %v1298, %v835
  %v1301 = vmul.f32 %v1299, %v836
  %v1302 = vld [vmem:[#allocation2 + $0x30] sm:$0xff]
  %v1303 = vld [vmem:[#allocation2 + $0x38] sm:$0xff]
  %v1305 = vsel %vm847, %v1300, 0
  %v1308 = vsel %vm847, %v1301, 0
  %1310 = vmatprep.subr.mxu0 0.0
  %1311 = vmatpush1.msra.mxu0 0.0
  %1312 = vmatprep.subr.mxu0 0.0
  %1313 = vmatpush1.msra.mxu0 0.0
  %1314 = vmatprep.subr.mxu0 0.0
  %1315 = vmatpush1.msra.mxu0 0.0
  %1316 = vmatprep.subr.mxu0 0.0
  %1317 = vmatpush1.msra.mxu0 0.0
  %1318 = vmatprep.subr.mxu0 0.0
  %1319 = vmatpush1.msra.mxu0 0.0
  %1320 = vmatprep.subr.mxu0 0.0
  %1321 = vmatpush1.msra.mxu0 0.0
  %1322 = vmatprep.subr.mxu0 0.0
  %1323 = vmatpush1.msra.mxu0 0.0
  %1324 = vmatprep.subr.mxu0 0.0
  %1325 = vmatpush1.msra.mxu0 0.0
  %1326 = vmatprep.subr.mxu0 0.0
  %1327 = vmatpush1.msra.mxu0 %v844
  %1328 = vmatprep.subr.mxu0 0.0
  %1329 = vmatpush1.msra.mxu0 %v843
  %1330 = vmatprep.subr.mxu0 0.0
  %1331 = vmatpush1.msra.mxu0 %v842
  %1332 = vmatprep.subr.mxu0 0.0
  %1333 = vmatpush1.msra.mxu0 %v841
  %1334 = vmatprep.subr.mxu0 0.0
  %1335 = vmatpush1.msra.mxu0 %v840
  %1336 = vmatprep.subr.mxu0 0.0
  %1337 = vmatpush1.msra.mxu0 %v839
  %1338 = vmatprep.subr.mxu0 0.0
  %1339 = vmatpush1.msra.mxu0 %v838
  %1340 = vmatprep.subr.mxu0 0.0
  %1341 = vmatpush1.msra.mxu0 %v837
  %1342 = vmatprep.subr.mxu0 0.0
  %1343 = vmatpush2.msra.mxu0 0.0
  %1344 = vmatprep.subr.mxu0 0.0
  %1345 = vmatpush2.msra.mxu0 0.0
  %1346 = vmatprep.subr.mxu0 0.0
  %1347 = vmatpush2.msra.mxu0 0.0
  %1348 = vmatprep.subr.mxu0 0.0
  %1349 = vmatpush2.msra.mxu0 0.0
  %1350 = vmatprep.subr.mxu0 0.0
  %1351 = vmatpush2.msra.mxu0 0.0
  %1352 = vmatprep.subr.mxu0 0.0
  %1353 = vmatpush2.msra.mxu0 0.0
  %1354 = vmatprep.subr.mxu0 0.0
  %1355 = vmatpush2.msra.mxu0 0.0
  %1356 = vmatprep.subr.mxu0 0.0
  %1357 = vmatpush2.msra.mxu0 0.0
  %1358 = vmatprep.subr.mxu0 0.0
  %1359 = vmatpush2.msra.mxu0 0.0
  %1360 = vmatprep.subr.mxu0 0.0
  %1361 = vmatpush2.msra.mxu0 0.0
  %1362 = vmatprep.subr.mxu0 0.0
  %1363 = vmatpush2.msra.mxu0 0.0
  %1364 = vmatprep.subr.mxu0 0.0
  %1365 = vmatpush2.msra.mxu0 0.0
  %1366 = vmatprep.subr.mxu0 0.0
  %1367 = vmatpush2.msra.mxu0 0.0
  %1368 = vmatprep.subr.mxu0 0.0
  %1369 = vmatpush2.msra.mxu0 0.0
  %1370 = vmatprep.subr.mxu0 0.0
  %1371 = vmatpush2.msra.mxu0 0.0
  %1372 = vmatprep.subr.mxu0 0.0
  %1373 = vmatpush2.msra.mxu0 0.0
  %1374 = vmatprep.mubr.f32.mxu0 0.0
  %1375 = vmatmul.mubr.f32.gmra.mxu0 %v1305
  %v1376 = vpop.f32.mrf.mxu0
  %v1377 = vadd.f32 0.0, %v1376
  %v1378 = vpop.f32.mrf.mxu0
  %1379 = vmatprep.mubr.f32.mxu0 0.0
  %1380 = vmatmul.mubr.f32.gmra.mxu0 %v1308
  %v1381 = vpop.f32.mrf.mxu0
  %v1382 = vadd.f32 0.0, %v1381
  %v1383 = vpop.f32.mrf.mxu0
  %1384 = vdwg.mxu0
  %v1385 = vadd.f32 %v1302, %v1377
  %v1386 = vadd.f32 %v1303, %v1382
  %v1387 = vmul.f32 %v1385, %v818
  %v1388 = vmul.f32 %v1386, %v818
  %v1389 = vsub.f32 0.0, %v1387
  %v1390 = vsub.f32 0.0, %v1388
  %v1391 = vmul.f32 %v1389, 1.442695
  %v1392 = vpow.pop %v1391
  %v1393 = vmul.f32 %v1390, 1.442695
  %v1394 = vpow.pop %v1393
  %v1395 = vadd.f32 %v1392, 1.0
  %v1396 = vadd.f32 %v1394, 1.0
  %v1397 = vrcp.pop %v1395
  %v1398 = vrcp.pop %v1396
  %v1399 = vmul.f32 %v1397, %v818
  %v1400 = vmul.f32 %v1398, %v818
  %v1401 = vsub.f32 %v1399, %v819
  %v1402 = vsub.f32 %v1400, %v819
  %v1403 = vmul.f32 %v1401, %v1270
  %v1404 = vmul.f32 %v1402, %v1271
  %1407 = vrot.lane.b32.xlu0 %v1401, 64
  %v1408 = vpop.permute.xlu0 %1407
  %1409 = vrot.lane.b32.xlu0 %v1402, 64
  %v1410 = vpop.permute.xlu0 %1409
  %v1413 = vmul.f32 %v1401, %v1408
  %v1414 = vmul.f32 %v1402, %v1410
  %1417 = vrot.lane.b32.xlu0 %v1413, 32
  %v1418 = vpop.permute.xlu0 %1417
  %1419 = vrot.lane.b32.xlu0 %v1414, 32
  %v1420 = vpop.permute.xlu0 %1419
  %v1423 = vadd.f32 %v1403, %v1418
  %v1424 = vadd.f32 %v1404, %v1420
  %v1425 = vtanh.pop %v1423
  %v1426 = vtanh.pop %v1424
  %1429 = vrot.lane.b32.xlu0 %v1425, 64
  %v1430 = vpop.permute.xlu0 %1429
  %1431 = vrot.lane.b32.xlu0 %v1426, 64
  %v1432 = vpop.permute.xlu0 %1431
  %v1435 = vmul.f32 %v1401, %v1430
  %v1436 = vmul.f32 %v1402, %v1432
  %1439 = vrot.lane.b32.xlu0 %v1435, 32
  %v1440 = vpop.permute.xlu0 %1439
  %1441 = vrot.lane.b32.xlu0 %v1436, 32
  %v1442 = vpop.permute.xlu0 %1441
  %1445 = vrot.lane.b32.xlu0 %v1435, 64
  %v1446 = vpop.permute.xlu0 %1445
  %1447 = vrot.lane.b32.xlu0 %v1436, 64
  %v1448 = vpop.permute.xlu0 %1447
  %v1451 = vsel %vm80, %v1440, %v1446
  %v1452 = vsel %vm80, %v1442, %v1448
  %v1453 = vmul.f32 %v1451, %v835
  %v1454 = vmul.f32 %v1452, %v836
  %v1455 = vld [vmem:[#allocation2 + $0x40] sm:$0xff]
  %v1456 = vld [vmem:[#allocation2 + $0x48] sm:$0xff]
  %v1458 = vsel %vm847, %v1453, 0
  %v1461 = vsel %vm847, %v1454, 0
  %1463 = vmatprep.subr.mxu0 0.0
  %1464 = vmatpush1.msra.mxu0 0.0
  %1465 = vmatprep.subr.mxu0 0.0
  %1466 = vmatpush1.msra.mxu0 0.0
  %1467 = vmatprep.subr.mxu0 0.0
  %1468 = vmatpush1.msra.mxu0 0.0
  %1469 = vmatprep.subr.mxu0 0.0
  %1470 = vmatpush1.msra.mxu0 0.0
  %1471 = vmatprep.subr.mxu0 0.0
  %1472 = vmatpush1.msra.mxu0 0.0
  %1473 = vmatprep.subr.mxu0 0.0
  %1474 = vmatpush1.msra.mxu0 0.0
  %1475 = vmatprep.subr.mxu0 0.0
  %1476 = vmatpush1.msra.mxu0 0.0
  %1477 = vmatprep.subr.mxu0 0.0
  %1478 = vmatpush1.msra.mxu0 0.0
  %1479 = vmatprep.subr.mxu0 0.0
  %1480 = vmatpush1.msra.mxu0 %v844
  %1481 = vmatprep.subr.mxu0 0.0
  %1482 = vmatpush1.msra.mxu0 %v843
  %1483 = vmatprep.subr.mxu0 0.0
  %1484 = vmatpush1.msra.mxu0 %v842
  %1485 = vmatprep.subr.mxu0 0.0
  %1486 = vmatpush1.msra.mxu0 %v841
  %1487 = vmatprep.subr.mxu0 0.0
  %1488 = vmatpush1.msra.mxu0 %v840
  %1489 = vmatprep.subr.mxu0 0.0
  %1490 = vmatpush1.msra.mxu0 %v839
  %1491 = vmatprep.subr.mxu0 0.0
  %1492 = vmatpush1.msra.mxu0 %v838
  %1493 = vmatprep.subr.mxu0 0.0
  %1494 = vmatpush1.msra.mxu0 %v837
  %1495 = vmatprep.subr.mxu0 0.0
  %1496 = vmatpush2.msra.mxu0 0.0
  %1497 = vmatprep.subr.mxu0 0.0
  %1498 = vmatpush2.msra.mxu0 0.0
  %1499 = vmatprep.subr.mxu0 0.0
  %1500 = vmatpush2.msra.mxu0 0.0
  %1501 = vmatprep.subr.mxu0 0.0
  %1502 = vmatpush2.msra.mxu0 0.0
  %1503 = vmatprep.subr.mxu0 0.0
  %1504 = vmatpush2.msra.mxu0 0.0
  %1505 = vmatprep.subr.mxu0 0.0
  %1506 = vmatpush2.msra.mxu0 0.0
  %1507 = vmatprep.subr.mxu0 0.0
  %1508 = vmatpush2.msra.mxu0 0.0
  %1509 = vmatprep.subr.mxu0 0.0
  %1510 = vmatpush2.msra.mxu0 0.0
  %1511 = vmatprep.subr.mxu0 0.0
  %1512 = vmatpush2.msra.mxu0 0.0
  %1513 = vmatprep.subr.mxu0 0.0
  %1514 = vmatpush2.msra.mxu0 0.0
  %1515 = vmatprep.subr.mxu0 0.0
  %1516 = vmatpush2.msra.mxu0 0.0
  %1517 = vmatprep.subr.mxu0 0.0
  %1518 = vmatpush2.msra.mxu0 0.0
  %1519 = vmatprep.subr.mxu0 0.0
  %1520 = vmatpush2.msra.mxu0 0.0
  %1521 = vmatprep.subr.mxu0 0.0
  %1522 = vmatpush2.msra.mxu0 0.0
  %1523 = vmatprep.subr.mxu0 0.0
  %1524 = vmatpush2.msra.mxu0 0.0
  %1525 = vmatprep.subr.mxu0 0.0
  %1526 = vmatpush2.msra.mxu0 0.0
  %1527 = vmatprep.mubr.f32.mxu0 0.0
  %1528 = vmatmul.mubr.f32.gmra.mxu0 %v1458
  %v1529 = vpop.f32.mrf.mxu0
  %v1530 = vadd.f32 0.0, %v1529
  %v1531 = vpop.f32.mrf.mxu0
  %1532 = vmatprep.mubr.f32.mxu0 0.0
  %1533 = vmatmul.mubr.f32.gmra.mxu0 %v1461
  %v1534 = vpop.f32.mrf.mxu0
  %v1535 = vadd.f32 0.0, %v1534
  %v1536 = vpop.f32.mrf.mxu0
  %1537 = vdwg.mxu0
  %v1538 = vadd.f32 %v1455, %v1530
  %v1539 = vadd.f32 %v1456, %v1535
  %v1540 = vmul.f32 %v1538, %v818
  %v1541 = vmul.f32 %v1539, %v818
  %v1542 = vsub.f32 0.0, %v1540
  %v1543 = vsub.f32 0.0, %v1541
  %v1544 = vmul.f32 %v1542, 1.442695
  %v1545 = vpow.pop %v1544
  %v1546 = vmul.f32 %v1543, 1.442695
  %v1547 = vpow.pop %v1546
  %v1548 = vadd.f32 %v1545, 1.0
  %v1549 = vadd.f32 %v1547, 1.0
  %v1550 = vrcp.pop %v1548
  %v1551 = vrcp.pop %v1549
  %v1552 = vmul.f32 %v1550, %v818
  %v1553 = vmul.f32 %v1551, %v818
  %v1554 = vsub.f32 %v1552, %v819
  %v1555 = vsub.f32 %v1553, %v819
  %v1556 = vmul.f32 %v1554, %v1423
  %v1557 = vmul.f32 %v1555, %v1424
  %1560 = vrot.lane.b32.xlu0 %v1554, 64
  %v1561 = vpop.permute.xlu0 %1560
  %1562 = vrot.lane.b32.xlu0 %v1555, 64
  %v1563 = vpop.permute.xlu0 %1562
  %v1566 = vmul.f32 %v1554, %v1561
  %v1567 = vmul.f32 %v1555, %v1563
  %1570 = vrot.lane.b32.xlu0 %v1566, 32
  %v1571 = vpop.permute.xlu0 %1570
  %1572 = vrot.lane.b32.xlu0 %v1567, 32
  %v1573 = vpop.permute.xlu0 %1572
  %v1576 = vadd.f32 %v1556, %v1571
  %v1577 = vadd.f32 %v1557, %v1573
  %v1578 = vtanh.pop %v1576
  %v1579 = vtanh.pop %v1577
  %1582 = vrot.lane.b32.xlu0 %v1578, 64
  %v1583 = vpop.permute.xlu0 %1582
  %1584 = vrot.lane.b32.xlu0 %v1579, 64
  %v1585 = vpop.permute.xlu0 %1584
  %v1588 = vmul.f32 %v1554, %v1583
  %v1589 = vmul.f32 %v1555, %v1585
  %1592 = vrot.lane.b32.xlu0 %v1588, 32
  %v1593 = vpop.permute.xlu0 %1592
  %1594 = vrot.lane.b32.xlu0 %v1589, 32
  %v1595 = vpop.permute.xlu0 %1594
  %1598 = vrot.lane.b32.xlu0 %v1588, 64
  %v1599 = vpop.permute.xlu0 %1598
  %1600 = vrot.lane.b32.xlu0 %v1589, 64
  %v1601 = vpop.permute.xlu0 %1600
  %v1604 = vsel %vm80, %v1593, %v1599
  %v1605 = vsel %vm80, %v1595, %v1601
  %v1606 = vmul.f32 %v1604, %v835
  %v1607 = vmul.f32 %v1605, %v836
  %v1608 = vld [vmem:[#allocation2 + $0x50] sm:$0xff]
  %v1609 = vld [vmem:[#allocation2 + $0x58] sm:$0xff]
  %v1611 = vsel %vm847, %v1606, 0
  %v1614 = vsel %vm847, %v1607, 0
  %1616 = vmatprep.subr.mxu0 0.0
  %1617 = vmatpush1.msra.mxu0 0.0
  %1618 = vmatprep.subr.mxu0 0.0
  %1619 = vmatpush1.msra.mxu0 0.0
  %1620 = vmatprep.subr.mxu0 0.0
  %1621 = vmatpush1.msra.mxu0 0.0
  %1622 = vmatprep.subr.mxu0 0.0
  %1623 = vmatpush1.msra.mxu0 0.0
  %1624 = vmatprep.subr.mxu0 0.0
  %1625 = vmatpush1.msra.mxu0 0.0
  %1626 = vmatprep.subr.mxu0 0.0
  %1627 = vmatpush1.msra.mxu0 0.0
  %1628 = vmatprep.subr.mxu0 0.0
  %1629 = vmatpush1.msra.mxu0 0.0
  %1630 = vmatprep.subr.mxu0 0.0
  %1631 = vmatpush1.msra.mxu0 0.0
  %1632 = vmatprep.subr.mxu0 0.0
  %1633 = vmatpush1.msra.mxu0 %v844
  %1634 = vmatprep.subr.mxu0 0.0
  %1635 = vmatpush1.msra.mxu0 %v843
  %1636 = vmatprep.subr.mxu0 0.0
  %1637 = vmatpush1.msra.mxu0 %v842
  %1638 = vmatprep.subr.mxu0 0.0
  %1639 = vmatpush1.msra.mxu0 %v841
  %1640 = vmatprep.subr.mxu0 0.0
  %1641 = vmatpush1.msra.mxu0 %v840
  %1642 = vmatprep.subr.mxu0 0.0
  %1643 = vmatpush1.msra.mxu0 %v839
  %1644 = vmatprep.subr.mxu0 0.0
  %1645 = vmatpush1.msra.mxu0 %v838
  %1646 = vmatprep.subr.mxu0 0.0
  %1647 = vmatpush1.msra.mxu0 %v837
  %1648 = vmatprep.subr.mxu0 0.0
  %1649 = vmatpush2.msra.mxu0 0.0
  %1650 = vmatprep.subr.mxu0 0.0
  %1651 = vmatpush2.msra.mxu0 0.0
  %1652 = vmatprep.subr.mxu0 0.0
  %1653 = vmatpush2.msra.mxu0 0.0
  %1654 = vmatprep.subr.mxu0 0.0
  %1655 = vmatpush2.msra.mxu0 0.0
  %1656 = vmatprep.subr.mxu0 0.0
  %1657 = vmatpush2.msra.mxu0 0.0
  %1658 = vmatprep.subr.mxu0 0.0
  %1659 = vmatpush2.msra.mxu0 0.0
  %1660 = vmatprep.subr.mxu0 0.0
  %1661 = vmatpush2.msra.mxu0 0.0
  %1662 = vmatprep.subr.mxu0 0.0
  %1663 = vmatpush2.msra.mxu0 0.0
  %1664 = vmatprep.subr.mxu0 0.0
  %1665 = vmatpush2.msra.mxu0 0.0
  %1666 = vmatprep.subr.mxu0 0.0
  %1667 = vmatpush2.msra.mxu0 0.0
  %1668 = vmatprep.subr.mxu0 0.0
  %1669 = vmatpush2.msra.mxu0 0.0
  %1670 = vmatprep.subr.mxu0 0.0
  %1671 = vmatpush2.msra.mxu0 0.0
  %1672 = vmatprep.subr.mxu0 0.0
  %1673 = vmatpush2.msra.mxu0 0.0
  %1674 = vmatprep.subr.mxu0 0.0
  %1675 = vmatpush2.msra.mxu0 0.0
  %1676 = vmatprep.subr.mxu0 0.0
  %1677 = vmatpush2.msra.mxu0 0.0
  %1678 = vmatprep.subr.mxu0 0.0
  %1679 = vmatpush2.msra.mxu0 0.0
  %1680 = vmatprep.mubr.f32.mxu0 0.0
  %1681 = vmatmul.mubr.f32.gmra.mxu0 %v1611
  %v1682 = vpop.f32.mrf.mxu0
  %v1683 = vadd.f32 0.0, %v1682
  %v1684 = vpop.f32.mrf.mxu0
  %1685 = vmatprep.mubr.f32.mxu0 0.0
  %1686 = vmatmul.mubr.f32.gmra.mxu0 %v1614
  %v1687 = vpop.f32.mrf.mxu0
  %v1688 = vadd.f32 0.0, %v1687
  %v1689 = vpop.f32.mrf.mxu0
  %1690 = vdwg.mxu0
  %v1691 = vadd.f32 %v1608, %v1683
  %v1692 = vadd.f32 %v1609, %v1688
  %v1693 = vmul.f32 %v1691, %v818
  %v1694 = vmul.f32 %v1692, %v818
  %v1695 = vsub.f32 0.0, %v1693
  %v1696 = vsub.f32 0.0, %v1694
  %v1697 = vmul.f32 %v1695, 1.442695
  %v1698 = vpow.pop %v1697
  %v1699 = vmul.f32 %v1696, 1.442695
  %v1700 = vpow.pop %v1699
  %v1701 = vadd.f32 %v1698, 1.0
  %v1702 = vadd.f32 %v1700, 1.0
  %v1703 = vrcp.pop %v1701
  %v1704 = vrcp.pop %v1702
  %v1705 = vmul.f32 %v1703, %v818
  %v1706 = vmul.f32 %v1704, %v818
  %v1707 = vsub.f32 %v1705, %v819
  %v1708 = vsub.f32 %v1706, %v819
  %v1709 = vmul.f32 %v1707, %v1576
  %v1710 = vmul.f32 %v1708, %v1577
  %1713 = vrot.lane.b32.xlu0 %v1707, 64
  %v1714 = vpop.permute.xlu0 %1713
  %1715 = vrot.lane.b32.xlu0 %v1708, 64
  %v1716 = vpop.permute.xlu0 %1715
  %v1719 = vmul.f32 %v1707, %v1714
  %v1720 = vmul.f32 %v1708, %v1716
  %1723 = vrot.lane.b32.xlu0 %v1719, 32
  %v1724 = vpop.permute.xlu0 %1723
  %1725 = vrot.lane.b32.xlu0 %v1720, 32
  %v1726 = vpop.permute.xlu0 %1725
  %v1729 = vadd.f32 %v1709, %v1724
  %v1730 = vadd.f32 %v1710, %v1726
  %v1731 = vtanh.pop %v1729
  %v1732 = vtanh.pop %v1730
  %1735 = vrot.lane.b32.xlu0 %v1731, 64
  %v1736 = vpop.permute.xlu0 %1735
  %1737 = vrot.lane.b32.xlu0 %v1732, 64
  %v1738 = vpop.permute.xlu0 %1737
  %v1741 = vmul.f32 %v1707, %v1736
  %v1742 = vmul.f32 %v1708, %v1738
  %1745 = vrot.lane.b32.xlu0 %v1741, 32
  %v1746 = vpop.permute.xlu0 %1745
  %1747 = vrot.lane.b32.xlu0 %v1742, 32
  %v1748 = vpop.permute.xlu0 %1747
  %1751 = vrot.lane.b32.xlu0 %v1741, 64
  %v1752 = vpop.permute.xlu0 %1751
  %1753 = vrot.lane.b32.xlu0 %v1742, 64
  %v1754 = vpop.permute.xlu0 %1753
  %v1757 = vsel %vm80, %v1746, %v1752
  %v1758 = vsel %vm80, %v1748, %v1754
  %v1759 = vmul.f32 %v1757, %v835
  %v1760 = vmul.f32 %v1758, %v836
  %v1761 = vld [vmem:[#allocation2 + $0x60] sm:$0xff]
  %v1762 = vld [vmem:[#allocation2 + $0x68] sm:$0xff]
  %v1764 = vsel %vm847, %v1759, 0
  %v1767 = vsel %vm847, %v1760, 0
  %1769 = vmatprep.subr.mxu0 0.0
  %1770 = vmatpush1.msra.mxu0 0.0
  %1771 = vmatprep.subr.mxu0 0.0
  %1772 = vmatpush1.msra.mxu0 0.0
  %1773 = vmatprep.subr.mxu0 0.0
  %1774 = vmatpush1.msra.mxu0 0.0
  %1775 = vmatprep.subr.mxu0 0.0
  %1776 = vmatpush1.msra.mxu0 0.0
  %1777 = vmatprep.subr.mxu0 0.0
  %1778 = vmatpush1.msra.mxu0 0.0
  %1779 = vmatprep.subr.mxu0 0.0
  %1780 = vmatpush1.msra.mxu0 0.0
  %1781 = vmatprep.subr.mxu0 0.0
  %1782 = vmatpush1.msra.mxu0 0.0
  %1783 = vmatprep.subr.mxu0 0.0
  %1784 = vmatpush1.msra.mxu0 0.0
  %1785 = vmatprep.subr.mxu0 0.0
  %1786 = vmatpush1.msra.mxu0 %v844
  %1787 = vmatprep.subr.mxu0 0.0
  %1788 = vmatpush1.msra.mxu0 %v843
  %1789 = vmatprep.subr.mxu0 0.0
  %1790 = vmatpush1.msra.mxu0 %v842
  %1791 = vmatprep.subr.mxu0 0.0
  %1792 = vmatpush1.msra.mxu0 %v841
  %1793 = vmatprep.subr.mxu0 0.0
  %1794 = vmatpush1.msra.mxu0 %v840
  %1795 = vmatprep.subr.mxu0 0.0
  %1796 = vmatpush1.msra.mxu0 %v839
  %1797 = vmatprep.subr.mxu0 0.0
  %1798 = vmatpush1.msra.mxu0 %v838
  %1799 = vmatprep.subr.mxu0 0.0
  %1800 = vmatpush1.msra.mxu0 %v837
  %1801 = vmatprep.subr.mxu0 0.0
  %1802 = vmatpush2.msra.mxu0 0.0
  %1803 = vmatprep.subr.mxu0 0.0
  %1804 = vmatpush2.msra.mxu0 0.0
  %1805 = vmatprep.subr.mxu0 0.0
  %1806 = vmatpush2.msra.mxu0 0.0
  %1807 = vmatprep.subr.mxu0 0.0
  %1808 = vmatpush2.msra.mxu0 0.0
  %1809 = vmatprep.subr.mxu0 0.0
  %1810 = vmatpush2.msra.mxu0 0.0
  %1811 = vmatprep.subr.mxu0 0.0
  %1812 = vmatpush2.msra.mxu0 0.0
  %1813 = vmatprep.subr.mxu0 0.0
  %1814 = vmatpush2.msra.mxu0 0.0
  %1815 = vmatprep.subr.mxu0 0.0
  %1816 = vmatpush2.msra.mxu0 0.0
  %1817 = vmatprep.subr.mxu0 0.0
  %1818 = vmatpush2.msra.mxu0 0.0
  %1819 = vmatprep.subr.mxu0 0.0
  %1820 = vmatpush2.msra.mxu0 0.0
  %1821 = vmatprep.subr.mxu0 0.0
  %1822 = vmatpush2.msra.mxu0 0.0
  %1823 = vmatprep.subr.mxu0 0.0
  %1824 = vmatpush2.msra.mxu0 0.0
  %1825 = vmatprep.subr.mxu0 0.0
  %1826 = vmatpush2.msra.mxu0 0.0
  %1827 = vmatprep.subr.mxu0 0.0
  %1828 = vmatpush2.msra.mxu0 0.0
  %1829 = vmatprep.subr.mxu0 0.0
  %1830 = vmatpush2.msra.mxu0 0.0
  %1831 = vmatprep.subr.mxu0 0.0
  %1832 = vmatpush2.msra.mxu0 0.0
  %1833 = vmatprep.mubr.f32.mxu0 0.0
  %1834 = vmatmul.mubr.f32.gmra.mxu0 %v1764
  %v1835 = vpop.f32.mrf.mxu0
  %v1836 = vadd.f32 0.0, %v1835
  %v1837 = vpop.f32.mrf.mxu0
  %1838 = vmatprep.mubr.f32.mxu0 0.0
  %1839 = vmatmul.mubr.f32.gmra.mxu0 %v1767
  %v1840 = vpop.f32.mrf.mxu0
  %v1841 = vadd.f32 0.0, %v1840
  %v1842 = vpop.f32.mrf.mxu0
  %1843 = vdwg.mxu0
  %v1844 = vadd.f32 %v1761, %v1836
  %v1845 = vadd.f32 %v1762, %v1841
  %v1846 = vmul.f32 %v1844, %v818
  %v1847 = vmul.f32 %v1845, %v818
  %v1848 = vsub.f32 0.0, %v1846
  %v1849 = vsub.f32 0.0, %v1847
  %v1850 = vmul.f32 %v1848, 1.442695
  %v1851 = vpow.pop %v1850
  %v1852 = vmul.f32 %v1849, 1.442695
  %v1853 = vpow.pop %v1852
  %v1854 = vadd.f32 %v1851, 1.0
  %v1855 = vadd.f32 %v1853, 1.0
  %v1856 = vrcp.pop %v1854
  %v1857 = vrcp.pop %v1855
  %v1858 = vmul.f32 %v1856, %v818
  %v1859 = vmul.f32 %v1857, %v818
  %v1860 = vsub.f32 %v1858, %v819
  %v1861 = vsub.f32 %v1859, %v819
  %v1862 = vmul.f32 %v1860, %v1729
  %v1863 = vmul.f32 %v1861, %v1730
  %1866 = vrot.lane.b32.xlu0 %v1860, 64
  %v1867 = vpop.permute.xlu0 %1866
  %1868 = vrot.lane.b32.xlu0 %v1861, 64
  %v1869 = vpop.permute.xlu0 %1868
  %v1872 = vmul.f32 %v1860, %v1867
  %v1873 = vmul.f32 %v1861, %v1869
  %1876 = vrot.lane.b32.xlu0 %v1872, 32
  %v1877 = vpop.permute.xlu0 %1876
  %1878 = vrot.lane.b32.xlu0 %v1873, 32
  %v1879 = vpop.permute.xlu0 %1878
  %v1882 = vadd.f32 %v1862, %v1877
  %v1883 = vadd.f32 %v1863, %v1879
  %v1884 = vtanh.pop %v1882
  %v1885 = vtanh.pop %v1883
  %1888 = vrot.lane.b32.xlu0 %v1884, 64
  %v1889 = vpop.permute.xlu0 %1888
  %1890 = vrot.lane.b32.xlu0 %v1885, 64
  %v1891 = vpop.permute.xlu0 %1890
  %v1894 = vmul.f32 %v1860, %v1889
  %v1895 = vmul.f32 %v1861, %v1891
  %1898 = vrot.lane.b32.xlu0 %v1894, 32
  %v1899 = vpop.permute.xlu0 %1898
  %1900 = vrot.lane.b32.xlu0 %v1895, 32
  %v1901 = vpop.permute.xlu0 %1900
  %1904 = vrot.lane.b32.xlu0 %v1894, 64
  %v1905 = vpop.permute.xlu0 %1904
  %1906 = vrot.lane.b32.xlu0 %v1895, 64
  %v1907 = vpop.permute.xlu0 %1906
  %v1910 = vsel %vm80, %v1899, %v1905
  %v1911 = vsel %vm80, %v1901, %v1907
  %v1912 = vmul.f32 %v1910, %v835
  %v1913 = vmul.f32 %v1911, %v836
  %v1914 = vld [vmem:[#allocation2 + $0x70] sm:$0xff]
  %v1915 = vld [vmem:[#allocation2 + $0x78] sm:$0xff]
  %v1917 = vsel %vm847, %v1912, 0
  %v1920 = vsel %vm847, %v1913, 0
  %1922 = vmatprep.subr.mxu0 0.0
  %1923 = vmatpush1.msra.mxu0 0.0
  %1924 = vmatprep.subr.mxu0 0.0
  %1925 = vmatpush1.msra.mxu0 0.0
  %1926 = vmatprep.subr.mxu0 0.0
  %1927 = vmatpush1.msra.mxu0 0.0
  %1928 = vmatprep.subr.mxu0 0.0
  %1929 = vmatpush1.msra.mxu0 0.0
  %1930 = vmatprep.subr.mxu0 0.0
  %1931 = vmatpush1.msra.mxu0 0.0
  %1932 = vmatprep.subr.mxu0 0.0
  %1933 = vmatpush1.msra.mxu0 0.0
  %1934 = vmatprep.subr.mxu0 0.0
  %1935 = vmatpush1.msra.mxu0 0.0
  %1936 = vmatprep.subr.mxu0 0.0
  %1937 = vmatpush1.msra.mxu0 0.0
  %1938 = vmatprep.subr.mxu0 0.0
  %1939 = vmatpush1.msra.mxu0 %v844
  %1940 = vmatprep.subr.mxu0 0.0
  %1941 = vmatpush1.msra.mxu0 %v843
  %1942 = vmatprep.subr.mxu0 0.0
  %1943 = vmatpush1.msra.mxu0 %v842
  %1944 = vmatprep.subr.mxu0 0.0
  %1945 = vmatpush1.msra.mxu0 %v841
  %1946 = vmatprep.subr.mxu0 0.0
  %1947 = vmatpush1.msra.mxu0 %v840
  %1948 = vmatprep.subr.mxu0 0.0
  %1949 = vmatpush1.msra.mxu0 %v839
  %1950 = vmatprep.subr.mxu0 0.0
  %1951 = vmatpush1.msra.mxu0 %v838
  %1952 = vmatprep.subr.mxu0 0.0
  %1953 = vmatpush1.msra.mxu0 %v837
  %1954 = vmatprep.subr.mxu0 0.0
  %1955 = vmatpush2.msra.mxu0 0.0
  %1956 = vmatprep.subr.mxu0 0.0
  %1957 = vmatpush2.msra.mxu0 0.0
  %1958 = vmatprep.subr.mxu0 0.0
  %1959 = vmatpush2.msra.mxu0 0.0
  %1960 = vmatprep.subr.mxu0 0.0
  %1961 = vmatpush2.msra.mxu0 0.0
  %1962 = vmatprep.subr.mxu0 0.0
  %1963 = vmatpush2.msra.mxu0 0.0
  %1964 = vmatprep.subr.mxu0 0.0
  %1965 = vmatpush2.msra.mxu0 0.0
  %1966 = vmatprep.subr.mxu0 0.0
  %1967 = vmatpush2.msra.mxu0 0.0
  %1968 = vmatprep.subr.mxu0 0.0
  %1969 = vmatpush2.msra.mxu0 0.0
  %1970 = vmatprep.subr.mxu0 0.0
  %1971 = vmatpush2.msra.mxu0 0.0
  %1972 = vmatprep.subr.mxu0 0.0
  %1973 = vmatpush2.msra.mxu0 0.0
  %1974 = vmatprep.subr.mxu0 0.0
  %1975 = vmatpush2.msra.mxu0 0.0
  %1976 = vmatprep.subr.mxu0 0.0
  %1977 = vmatpush2.msra.mxu0 0.0
  %1978 = vmatprep.subr.mxu0 0.0
  %1979 = vmatpush2.msra.mxu0 0.0
  %1980 = vmatprep.subr.mxu0 0.0
  %1981 = vmatpush2.msra.mxu0 0.0
  %1982 = vmatprep.subr.mxu0 0.0
  %1983 = vmatpush2.msra.mxu0 0.0
  %1984 = vmatprep.subr.mxu0 0.0
  %1985 = vmatpush2.msra.mxu0 0.0
  %1986 = vmatprep.mubr.f32.mxu0 0.0
  %1987 = vmatmul.mubr.f32.gmra.mxu0 %v1917
  %v1988 = vpop.f32.mrf.mxu0
  %v1989 = vadd.f32 0.0, %v1988
  %v1990 = vpop.f32.mrf.mxu0
  %1991 = vmatprep.mubr.f32.mxu0 0.0
  %1992 = vmatmul.mubr.f32.gmra.mxu0 %v1920
  %v1993 = vpop.f32.mrf.mxu0
  %v1994 = vadd.f32 0.0, %v1993
  %v1995 = vpop.f32.mrf.mxu0
  %1996 = vdwg.mxu0
  %v1997 = vadd.f32 %v1914, %v1989
  %v1998 = vadd.f32 %v1915, %v1994
  %v1999 = vmul.f32 %v1997, %v818
  %v2000 = vmul.f32 %v1998, %v818
  %v2001 = vsub.f32 0.0, %v1999
  %v2002 = vsub.f32 0.0, %v2000
  %v2003 = vmul.f32 %v2001, 1.442695
  %v2004 = vpow.pop %v2003
  %v2005 = vmul.f32 %v2002, 1.442695
  %v2006 = vpow.pop %v2005
  %v2007 = vadd.f32 %v2004, 1.0
  %v2008 = vadd.f32 %v2006, 1.0
  %v2009 = vrcp.pop %v2007
  %v2010 = vrcp.pop %v2008
  %v2011 = vmul.f32 %v2009, %v818
  %v2012 = vmul.f32 %v2010, %v818
  %v2013 = vsub.f32 %v2011, %v819
  %v2014 = vsub.f32 %v2012, %v819
  %v2015 = vmul.f32 %v2013, %v1882
  %v2016 = vmul.f32 %v2014, %v1883
  %2019 = vrot.lane.b32.xlu0 %v2013, 64
  %v2020 = vpop.permute.xlu0 %2019
  %2021 = vrot.lane.b32.xlu0 %v2014, 64
  %v2022 = vpop.permute.xlu0 %2021
  %v2025 = vmul.f32 %v2013, %v2020
  %v2026 = vmul.f32 %v2014, %v2022
  %2029 = vrot.lane.b32.xlu0 %v2025, 32
  %v2030 = vpop.permute.xlu0 %2029
  %2031 = vrot.lane.b32.xlu0 %v2026, 32
  %v2032 = vpop.permute.xlu0 %2031
  %v2035 = vadd.f32 %v2015, %v2030
  %v2036 = vadd.f32 %v2016, %v2032
  %v2037 = vtanh.pop %v2035
  %v2038 = vtanh.pop %v2036
  %2041 = vrot.lane.b32.xlu0 %v2037, 64
  %v2042 = vpop.permute.xlu0 %2041
  %2043 = vrot.lane.b32.xlu0 %v2038, 64
  %v2044 = vpop.permute.xlu0 %2043
  %v2047 = vmul.f32 %v2013, %v2042
  %v2048 = vmul.f32 %v2014, %v2044
  %2051 = vrot.lane.b32.xlu0 %v2047, 32
  %v2052 = vpop.permute.xlu0 %2051
  %2053 = vrot.lane.b32.xlu0 %v2048, 32
  %v2054 = vpop.permute.xlu0 %2053
  %2057 = vrot.lane.b32.xlu0 %v2047, 64
  %v2058 = vpop.permute.xlu0 %2057
  %2059 = vrot.lane.b32.xlu0 %v2048, 64
  %v2060 = vpop.permute.xlu0 %2059
  %v2063 = vsel %vm80, %v2052, %v2058
  %v2064 = vsel %vm80, %v2054, %v2060
  %v2065 = vmul.f32 %v2063, %v835
  %v2066 = vmul.f32 %v2064, %v836
  %v2067 = vadd.f32 %v2065, %v2066
  %v2068 = vld [vmem:[%s10] sm:$0xff]
  %v2069 = vld [vmem:[%s10 + $0x8] sm:$0xff]
  %v2070 = vld [vmem:[%s10 + $0x10] sm:$0xff]
  %v2071 = vld [vmem:[%s10 + $0x18] sm:$0xff]
  %v2072 = vld [vmem:[%s10 + $0x20] sm:$0xff]
  %v2073 = vld [vmem:[%s10 + $0x28] sm:$0xff]
  %v2074 = vld [vmem:[%s10 + $0x30] sm:$0xff]
  %v2075 = vld [vmem:[%s10 + $0x38] sm:$0xff]
  %v2076 = vld [vmem:[%s11] sm:$0x1]
  %v2078 = vlaneseq
  %v2079 = vshrl.u32 %v2078, 7
  %v2080 = vsub.s32 0, %v2079
  %v2081 = vrot.slane %v2076, %v2080
  %v2084 = vsel %vm847, %v2067, 0
  %2086 = vmatprep.subr.mxu0 0.0
  %2087 = vmatpush1.msra.mxu0 0.0
  %2088 = vmatprep.subr.mxu0 0.0
  %2089 = vmatpush1.msra.mxu0 0.0
  %2090 = vmatprep.subr.mxu0 0.0
  %2091 = vmatpush1.msra.mxu0 0.0
  %2092 = vmatprep.subr.mxu0 0.0
  %2093 = vmatpush1.msra.mxu0 0.0
  %2094 = vmatprep.subr.mxu0 0.0
  %2095 = vmatpush1.msra.mxu0 0.0
  %2096 = vmatprep.subr.mxu0 0.0
  %2097 = vmatpush1.msra.mxu0 0.0
  %2098 = vmatprep.subr.mxu0 0.0
  %2099 = vmatpush1.msra.mxu0 0.0
  %2100 = vmatprep.subr.mxu0 0.0
  %2101 = vmatpush1.msra.mxu0 0.0
  %2102 = vmatprep.subr.mxu0 0.0
  %2103 = vmatpush1.msra.mxu0 %v2075
  %2104 = vmatprep.subr.mxu0 0.0
  %2105 = vmatpush1.msra.mxu0 %v2074
  %2106 = vmatprep.subr.mxu0 0.0
  %2107 = vmatpush1.msra.mxu0 %v2073
  %2108 = vmatprep.subr.mxu0 0.0
  %2109 = vmatpush1.msra.mxu0 %v2072
  %2110 = vmatprep.subr.mxu0 0.0
  %2111 = vmatpush1.msra.mxu0 %v2071
  %2112 = vmatprep.subr.mxu0 0.0
  %2113 = vmatpush1.msra.mxu0 %v2070
  %2114 = vmatprep.subr.mxu0 0.0
  %2115 = vmatpush1.msra.mxu0 %v2069
  %2116 = vmatprep.subr.mxu0 0.0
  %2117 = vmatpush1.msra.mxu0 %v2068
  %2118 = vmatprep.subr.mxu0 0.0
  %2119 = vmatpush2.msra.mxu0 0.0
  %2120 = vmatprep.subr.mxu0 0.0
  %2121 = vmatpush2.msra.mxu0 0.0
  %2122 = vmatprep.subr.mxu0 0.0
  %2123 = vmatpush2.msra.mxu0 0.0
  %2124 = vmatprep.subr.mxu0 0.0
  %2125 = vmatpush2.msra.mxu0 0.0
  %2126 = vmatprep.subr.mxu0 0.0
  %2127 = vmatpush2.msra.mxu0 0.0
  %2128 = vmatprep.subr.mxu0 0.0
  %2129 = vmatpush2.msra.mxu0 0.0
  %2130 = vmatprep.subr.mxu0 0.0
  %2131 = vmatpush2.msra.mxu0 0.0
  %2132 = vmatprep.subr.mxu0 0.0
  %2133 = vmatpush2.msra.mxu0 0.0
  %2134 = vmatprep.subr.mxu0 0.0
  %2135 = vmatpush2.msra.mxu0 0.0
  %2136 = vmatprep.subr.mxu0 0.0
  %2137 = vmatpush2.msra.mxu0 0.0
  %2138 = vmatprep.subr.mxu0 0.0
  %2139 = vmatpush2.msra.mxu0 0.0
  %2140 = vmatprep.subr.mxu0 0.0
  %2141 = vmatpush2.msra.mxu0 0.0
  %2142 = vmatprep.subr.mxu0 0.0
  %2143 = vmatpush2.msra.mxu0 0.0
  %2144 = vmatprep.subr.mxu0 0.0
  %2145 = vmatpush2.msra.mxu0 0.0
  %2146 = vmatprep.subr.mxu0 0.0
  %2147 = vmatpush2.msra.mxu0 0.0
  %2148 = vmatprep.subr.mxu0 0.0
  %2149 = vmatpush2.msra.mxu0 0.0
  %2150 = vmatprep.mubr.f32.mxu0 0.0
  %2151 = vmatmul.mubr.f32.gmra.mxu0 %v2084
  %v2152 = vpop.f32.mrf.mxu0
  %v2153 = vadd.f32 %v2081, %v2152
  %v2154 = vpop.f32.mrf.mxu0
  %2155 = vdwg.mxu0
  %v2156 = vld [vmem:[%s2] sm:$0xff]
  %v2157 = vmul.f32 %v2153, 0.5
  %v2158 = vmul.f32 %v2157, 1.442695
  %v2159 = vpow.pop %v2158
  %2161 = vrot.lane.b32.xlu0 %v2159, 112
  %v2162 = vpop.permute.xlu0 %2161
  %v2164 = vmul.f32 %v2156, %v2162
  %v2165 = vadd.f32 %v2153, %v2164
  %v2166 = vmul.f32 %v2153, %v2153
  %2168 = vrot.lane.b32.xlu0 %v2166, 16
  %v2169 = vpop.permute.xlu0 %2168
  %v2171 = vsub.f32 %v2153, %v2169
  %v2172 = vmul.f32 %v2153, 1.442695
  %v2173 = vpow.pop %v2172
  %v2174 = vsub.f32 %v2171, %v2173
  %v2175 = vadd.f32 %v2174, 1.0
  %vm2176 = vcmp.lt.s32.totalorder %v821, 2
  %v2177 = vsel %vm2176, %v2175, 0.0
  %2179 = vrot.lane.b32.xlu0 %v2177, 112
  %v2180 = vpop.permute.xlu0 %2179
  %vm2182 = vcmask 130048
  %v2183 = vsel %vm2182, %v2180, 0.0
  %2184 = vadd.xlane.f32.xlu0 %v2183
  %v2185 = vpop.xlane.xlu0 %2184
  %v2186 = vrot.slane %v2185, 4
  %v2187 = vadd.f32 %v2185, %v2186
  %v2188 = vrot.slane %v2187, 2
  %v2189 = vadd.f32 %v2187, %v2188
  %v2190 = vrot.slane %v2189, 1
  %v2191 = vadd.f32 %v2189, %v2190
  %v2192 = vmul.f32 %v2191, -0.25
  %v2193 = vld [vmem:[%s1] sm:$0xff]
  %v2194 = vld [vmem:[%s1 + $0x8] sm:$0xff]
  %v2195 = vld [vmem:[%s1 + $0x10] sm:$0xff]
  %v2196 = vld [vmem:[%s1 + $0x18] sm:$0xff]
  %v2197 = vld [vmem:[%s1 + $0x20] sm:$0xff]
  %v2198 = vld [vmem:[%s1 + $0x28] sm:$0xff]
  %v2199 = vld [vmem:[%s1 + $0x30] sm:$0xff]
  %v2200 = vld [vmem:[%s1 + $0x38] sm:$0xff]
  %v2201 = vld [vmem:[%s3] sm:$0xff]
  %v2202 = vld [vmem:[%s4] sm:$0xff]
  %v2203 = vld [vmem:[%s12] sm:$0xff]
  %v2204 = vld [vmem:[%s12 + $0x8] sm:$0xff]
  %v2205 = vld [vmem:[%s12 + $0x10] sm:$0xff]
  %v2206 = vld [vmem:[%s12 + $0x18] sm:$0xff]
  %v2207 = vld [vmem:[%s13] sm:$0xff]
  %v2208 = vld [vmem:[%s13 + $0x8] sm:$0xff]
  %v2209 = vld [vmem:[%s14] sm:$0xff]
  %v2210 = vld [vmem:[%s14 + $0x8] sm:$0xff]
  %v2211 = vld [vmem:[%s14 + $0x10] sm:$0xff]
  %v2212 = vld [vmem:[%s14 + $0x18] sm:$0xff]
  %v2213 = vld [vmem:[%s15] sm:$0x1]
  %v2214 = vld [vmem:[%s16] sm:$0xff]
  %v2215 = vld [vmem:[%s16 + $0x8] sm:$0xff]
  %v2216 = vld [vmem:[%s16 + $0x10] sm:$0xff]
  %v2217 = vld [vmem:[%s16 + $0x18] sm:$0xff]
  %v2218 = vld [vmem:[%s17] sm:$0x1]
  %v2220 = vsel %vm80, %v2193, 0
  %v2223 = vsel %vm80, %v2194, 0
  %v2226 = vsel %vm80, %v2195, 0
  %v2229 = vsel %vm80, %v2196, 0
  %v2232 = vsel %vm80, %v2197, 0
  %v2235 = vsel %vm80, %v2198, 0
  %v2238 = vsel %vm80, %v2199, 0
  %v2241 = vsel %vm80, %v2200, 0
  %2243 = vmatprep.subr.mxu0 0.0
  %2244 = vmatpush1.msra.mxu0 0.0
  %2245 = vmatprep.subr.mxu0 0.0
  %2246 = vmatpush1.msra.mxu0 0.0
  %2247 = vmatprep.subr.mxu0 0.0
  %2248 = vmatpush1.msra.mxu0 0.0
  %2249 = vmatprep.subr.mxu0 0.0
  %2250 = vmatpush1.msra.mxu0 0.0
  %2251 = vmatprep.subr.mxu0 0.0
  %2252 = vmatpush1.msra.mxu0 0.0
  %2253 = vmatprep.subr.mxu0 0.0
  %2254 = vmatpush1.msra.mxu0 0.0
  %2255 = vmatprep.subr.mxu0 0.0
  %2256 = vmatpush1.msra.mxu0 0.0
  %2257 = vmatprep.subr.mxu0 0.0
  %2258 = vmatpush1.msra.mxu0 0.0
  %2259 = vmatprep.subr.mxu0 0.0
  %2260 = vmatpush1.msra.mxu0 0.0
  %2261 = vmatprep.subr.mxu0 0.0
  %2262 = vmatpush1.msra.mxu0 0.0
  %2263 = vmatprep.subr.mxu0 0.0
  %2264 = vmatpush1.msra.mxu0 0.0
  %2265 = vmatprep.subr.mxu0 0.0
  %2266 = vmatpush1.msra.mxu0 0.0
  %2267 = vmatprep.subr.mxu0 0.0
  %2268 = vmatpush1.msra.mxu0 %v2206
  %2269 = vmatprep.subr.mxu0 0.0
  %2270 = vmatpush1.msra.mxu0 %v2205
  %2271 = vmatprep.subr.mxu0 0.0
  %2272 = vmatpush1.msra.mxu0 %v2204
  %2273 = vmatprep.subr.mxu0 0.0
  %2274 = vmatpush1.msra.mxu0 %v2203
  %2275 = vmatprep.subr.mxu0 0.0
  %2276 = vmatpush2.msra.mxu0 0.0
  %2277 = vmatprep.subr.mxu0 0.0
  %2278 = vmatpush2.msra.mxu0 0.0
  %2279 = vmatprep.subr.mxu0 0.0
  %2280 = vmatpush2.msra.mxu0 0.0
  %2281 = vmatprep.subr.mxu0 0.0
  %2282 = vmatpush2.msra.mxu0 0.0
  %2283 = vmatprep.subr.mxu0 0.0
  %2284 = vmatpush2.msra.mxu0 0.0
  %2285 = vmatprep.subr.mxu0 0.0
  %2286 = vmatpush2.msra.mxu0 0.0
  %2287 = vmatprep.subr.mxu0 0.0
  %2288 = vmatpush2.msra.mxu0 0.0
  %2289 = vmatprep.subr.mxu0 0.0
  %2290 = vmatpush2.msra.mxu0 0.0
  %2291 = vmatprep.subr.mxu0 0.0
  %2292 = vmatpush2.msra.mxu0 0.0
  %2293 = vmatprep.subr.mxu0 0.0
  %2294 = vmatpush2.msra.mxu0 0.0
  %2295 = vmatprep.subr.mxu0 0.0
  %2296 = vmatpush2.msra.mxu0 0.0
  %2297 = vmatprep.subr.mxu0 0.0
  %2298 = vmatpush2.msra.mxu0 0.0
  %2299 = vmatprep.subr.mxu0 0.0
  %2300 = vmatpush2.msra.mxu0 0.0
  %2301 = vmatprep.subr.mxu0 0.0
  %2302 = vmatpush2.msra.mxu0 0.0
  %2303 = vmatprep.subr.mxu0 0.0
  %2304 = vmatpush2.msra.mxu0 0.0
  %2305 = vmatprep.subr.mxu0 0.0
  %2306 = vmatpush2.msra.mxu0 0.0
  %2307 = vmatprep.mubr.f32.mxu0 0.0
  %2308 = vmatmul.mubr.f32.gmra.mxu0 %v2220
  %v2309 = vpop.f32.mrf.mxu0
  %v2310 = vadd.f32 0.0, %v2309
  %v2311 = vpop.f32.mrf.mxu0
  %2312 = vmatprep.mubr.f32.mxu0 0.0
  %2313 = vmatmul.mubr.f32.gmra.mxu0 %v2223
  %v2314 = vpop.f32.mrf.mxu0
  %v2315 = vadd.f32 0.0, %v2314
  %v2316 = vpop.f32.mrf.mxu0
  %2317 = vmatprep.mubr.f32.mxu0 0.0
  %2318 = vmatmul.mubr.f32.gmra.mxu0 %v2226
  %v2319 = vpop.f32.mrf.mxu0
  %v2320 = vadd.f32 0.0, %v2319
  %v2321 = vpop.f32.mrf.mxu0
  %2322 = vmatprep.mubr.f32.mxu0 0.0
  %2323 = vmatmul.mubr.f32.gmra.mxu0 %v2229
  %v2324 = vpop.f32.mrf.mxu0
  %v2325 = vadd.f32 0.0, %v2324
  %v2326 = vpop.f32.mrf.mxu0
  %2327 = vmatprep.mubr.f32.mxu0 0.0
  %2328 = vmatmul.mubr.f32.gmra.mxu0 %v2232
  %v2329 = vpop.f32.mrf.mxu0
  %v2330 = vadd.f32 0.0, %v2329
  %v2331 = vpop.f32.mrf.mxu0
  %2332 = vmatprep.mubr.f32.mxu0 0.0
  %2333 = vmatmul.mubr.f32.gmra.mxu0 %v2235
  %v2334 = vpop.f32.mrf.mxu0
  %v2335 = vadd.f32 0.0, %v2334
  %v2336 = vpop.f32.mrf.mxu0
  %2337 = vmatprep.mubr.f32.mxu0 0.0
  %2338 = vmatmul.mubr.f32.gmra.mxu0 %v2238
  %v2339 = vpop.f32.mrf.mxu0
  %v2340 = vadd.f32 0.0, %v2339
  %v2341 = vpop.f32.mrf.mxu0
  %2342 = vmatprep.mubr.f32.mxu0 0.0
  %2343 = vmatmul.mubr.f32.gmra.mxu0 %v2241
  %v2344 = vpop.f32.mrf.mxu0
  %v2345 = vadd.f32 0.0, %v2344
  %v2346 = vpop.f32.mrf.mxu0
  %2347 = vdwg.mxu0
  %v2349 = vlaneseq
  %v2350 = vshrl.u32 %v2349, 7
  %v2351 = vsub.s32 0, %v2350
  %v2352 = vrot.slane %v2213, %v2351
  %v2355 = vsel %vm2182, %v2165, 0
  %2357 = vmatprep.subr.mxu0 0.0
  %2358 = vmatpush1.msra.mxu0 0.0
  %2359 = vmatprep.subr.mxu0 0.0
  %2360 = vmatpush1.msra.mxu0 0.0
  %2361 = vmatprep.subr.mxu0 0.0
  %2362 = vmatpush1.msra.mxu0 0.0
  %2363 = vmatprep.subr.mxu0 0.0
  %2364 = vmatpush1.msra.mxu0 0.0
  %2365 = vmatprep.subr.mxu0 0.0
  %2366 = vmatpush1.msra.mxu0 0.0
  %2367 = vmatprep.subr.mxu0 0.0
  %2368 = vmatpush1.msra.mxu0 0.0
  %2369 = vmatprep.subr.mxu0 0.0
  %2370 = vmatpush1.msra.mxu0 0.0
  %2371 = vmatprep.subr.mxu0 0.0
  %2372 = vmatpush1.msra.mxu0 0.0
  %2373 = vmatprep.subr.mxu0 0.0
  %2374 = vmatpush1.msra.mxu0 0.0
  %2375 = vmatprep.subr.mxu0 0.0
  %2376 = vmatpush1.msra.mxu0 0.0
  %2377 = vmatprep.subr.mxu0 0.0
  %2378 = vmatpush1.msra.mxu0 0.0
  %2379 = vmatprep.subr.mxu0 0.0
  %2380 = vmatpush1.msra.mxu0 0.0
  %2381 = vmatprep.subr.mxu0 0.0
  %2382 = vmatpush1.msra.mxu0 0.0
  %2383 = vmatprep.subr.mxu0 0.0
  %2384 = vmatpush1.msra.mxu0 0.0
  %2385 = vmatprep.subr.mxu0 0.0
  %2386 = vmatpush1.msra.mxu0 %v2208
  %2387 = vmatprep.subr.mxu0 0.0
  %2388 = vmatpush1.msra.mxu0 %v2207
  %2389 = vmatprep.subr.mxu0 0.0
  %2390 = vmatpush2.msra.mxu0 0.0
  %2391 = vmatprep.subr.mxu0 0.0
  %2392 = vmatpush2.msra.mxu0 0.0
  %2393 = vmatprep.subr.mxu0 0.0
  %2394 = vmatpush2.msra.mxu0 0.0
  %2395 = vmatprep.subr.mxu0 0.0
  %2396 = vmatpush2.msra.mxu0 0.0
  %2397 = vmatprep.subr.mxu0 0.0
  %2398 = vmatpush2.msra.mxu0 0.0
  %2399 = vmatprep.subr.mxu0 0.0
  %2400 = vmatpush2.msra.mxu0 0.0
  %2401 = vmatprep.subr.mxu0 0.0
  %2402 = vmatpush2.msra.mxu0 0.0
  %2403 = vmatprep.subr.mxu0 0.0
  %2404 = vmatpush2.msra.mxu0 0.0
  %2405 = vmatprep.subr.mxu0 0.0
  %2406 = vmatpush2.msra.mxu0 0.0
  %2407 = vmatprep.subr.mxu0 0.0
  %2408 = vmatpush2.msra.mxu0 0.0
  %2409 = vmatprep.subr.mxu0 0.0
  %2410 = vmatpush2.msra.mxu0 0.0
  %2411 = vmatprep.subr.mxu0 0.0
  %2412 = vmatpush2.msra.mxu0 0.0
  %2413 = vmatprep.subr.mxu0 0.0
  %2414 = vmatpush2.msra.mxu0 0.0
  %2415 = vmatprep.subr.mxu0 0.0
  %2416 = vmatpush2.msra.mxu0 0.0
  %2417 = vmatprep.subr.mxu0 0.0
  %2418 = vmatpush2.msra.mxu0 0.0
  %2419 = vmatprep.subr.mxu0 0.0
  %2420 = vmatpush2.msra.mxu0 0.0
  %2421 = vmatprep.mubr.f32.mxu0 0.0
  %2422 = vmatmul.mubr.f32.gmra.mxu0 %v2355
  %v2423 = vpop.f32.mrf.mxu0
  %v2424 = vadd.f32 %v2352, %v2423
  %v2425 = vpop.f32.mrf.mxu0
  %2426 = vdwg.mxu0
  %v2427 = vadd.f32 %v2310, %v2424
  %v2429 = vsel %vm80, %v2201, 0
  %2431 = vmatprep.subr.mxu0 0.0
  %2432 = vmatpush1.msra.mxu0 0.0
  %2433 = vmatprep.subr.mxu0 0.0
  %2434 = vmatpush1.msra.mxu0 0.0
  %2435 = vmatprep.subr.mxu0 0.0
  %2436 = vmatpush1.msra.mxu0 0.0
  %2437 = vmatprep.subr.mxu0 0.0
  %2438 = vmatpush1.msra.mxu0 0.0
  %2439 = vmatprep.subr.mxu0 0.0
  %2440 = vmatpush1.msra.mxu0 0.0
  %2441 = vmatprep.subr.mxu0 0.0
  %2442 = vmatpush1.msra.mxu0 0.0
  %2443 = vmatprep.subr.mxu0 0.0
  %2444 = vmatpush1.msra.mxu0 0.0
  %2445 = vmatprep.subr.mxu0 0.0
  %2446 = vmatpush1.msra.mxu0 0.0
  %2447 = vmatprep.subr.mxu0 0.0
  %2448 = vmatpush1.msra.mxu0 0.0
  %2449 = vmatprep.subr.mxu0 0.0
  %2450 = vmatpush1.msra.mxu0 0.0
  %2451 = vmatprep.subr.mxu0 0.0
  %2452 = vmatpush1.msra.mxu0 0.0
  %2453 = vmatprep.subr.mxu0 0.0
  %2454 = vmatpush1.msra.mxu0 0.0
  %2455 = vmatprep.subr.mxu0 0.0
  %2456 = vmatpush1.msra.mxu0 %v2212
  %2457 = vmatprep.subr.mxu0 0.0
  %2458 = vmatpush1.msra.mxu0 %v2211
  %2459 = vmatprep.subr.mxu0 0.0
  %2460 = vmatpush1.msra.mxu0 %v2210
  %2461 = vmatprep.subr.mxu0 0.0
  %2462 = vmatpush1.msra.mxu0 %v2209
  %2463 = vmatprep.subr.mxu0 0.0
  %2464 = vmatpush2.msra.mxu0 0.0
  %2465 = vmatprep.subr.mxu0 0.0
  %2466 = vmatpush2.msra.mxu0 0.0
  %2467 = vmatprep.subr.mxu0 0.0
  %2468 = vmatpush2.msra.mxu0 0.0
  %2469 = vmatprep.subr.mxu0 0.0
  %2470 = vmatpush2.msra.mxu0 0.0
  %2471 = vmatprep.subr.mxu0 0.0
  %2472 = vmatpush2.msra.mxu0 0.0
  %2473 = vmatprep.subr.mxu0 0.0
  %2474 = vmatpush2.msra.mxu0 0.0
  %2475 = vmatprep.subr.mxu0 0.0
  %2476 = vmatpush2.msra.mxu0 0.0
  %2477 = vmatprep.subr.mxu0 0.0
  %2478 = vmatpush2.msra.mxu0 0.0
  %2479 = vmatprep.subr.mxu0 0.0
  %2480 = vmatpush2.msra.mxu0 0.0
  %2481 = vmatprep.subr.mxu0 0.0
  %2482 = vmatpush2.msra.mxu0 0.0
  %2483 = vmatprep.subr.mxu0 0.0
  %2484 = vmatpush2.msra.mxu0 0.0
  %2485 = vmatprep.subr.mxu0 0.0
  %2486 = vmatpush2.msra.mxu0 0.0
  %2487 = vmatprep.subr.mxu0 0.0
  %2488 = vmatpush2.msra.mxu0 0.0
  %2489 = vmatprep.subr.mxu0 0.0
  %2490 = vmatpush2.msra.mxu0 0.0
  %2491 = vmatprep.subr.mxu0 0.0
  %2492 = vmatpush2.msra.mxu0 0.0
  %2493 = vmatprep.subr.mxu0 0.0
  %2494 = vmatpush2.msra.mxu0 0.0
  %2495 = vmatprep.mubr.f32.mxu0 0.0
  %2496 = vmatmul.mubr.f32.gmra.mxu0 %v2429
  %v2497 = vpop.f32.mrf.mxu0
  %v2498 = vadd.f32 0.0, %v2497
  %v2499 = vpop.f32.mrf.mxu0
  %2500 = vdwg.mxu0
  %v2501 = vadd.f32 %v2427, %v2498
  %v2502 = vmul.f32 %v2501, %v818
  %v2503 = vsub.f32 0.0, %v2502
  %v2504 = vmul.f32 %v2503, 1.442695
  %v2505 = vpow.pop %v2504
  %v2506 = vadd.f32 %v2505, 1.0
  %v2507 = vrcp.pop %v2506
  %v2508 = vmul.f32 %v2507, %v818
  %v2509 = vsub.f32 %v2508, %v819
  %2511 = vrot.lane.b32.xlu0 %v2202, 32
  %v2512 = vpop.permute.xlu0 %2511
  %v2514 = vmul.f32 %v2509, %v2512
  %2516 = vrot.lane.b32.xlu0 %v2509, 64
  %v2517 = vpop.permute.xlu0 %2516
  %v2519 = vmul.f32 %v2509, %v2517
  %2521 = vrot.lane.b32.xlu0 %v2519, 32
  %v2522 = vpop.permute.xlu0 %2521
  %v2524 = vadd.f32 %v2514, %v2522
  %v2525 = vtanh.pop %v2524
  %2527 = vrot.lane.b32.xlu0 %v2525, 64
  %v2528 = vpop.permute.xlu0 %2527
  %v2530 = vmul.f32 %v2509, %v2528
  %2532 = vrot.lane.b32.xlu0 %v2530, 32
  %v2533 = vpop.permute.xlu0 %2532
  %2535 = vst.msk [vmem:[#allocation3] sm:$0xff] %vm80, %v2533
  %v2536 = vadd.f32 %v2315, %v2424
  %v2537 = vsel %vm80, %v2533, 0
  %2539 = vmatprep.subr.mxu0 0.0
  %2540 = vmatpush1.msra.mxu0 0.0
  %2541 = vmatprep.subr.mxu0 0.0
  %2542 = vmatpush1.msra.mxu0 0.0
  %2543 = vmatprep.subr.mxu0 0.0
  %2544 = vmatpush1.msra.mxu0 0.0
  %2545 = vmatprep.subr.mxu0 0.0
  %2546 = vmatpush1.msra.mxu0 0.0
  %2547 = vmatprep.subr.mxu0 0.0
  %2548 = vmatpush1.msra.mxu0 0.0
  %2549 = vmatprep.subr.mxu0 0.0
  %2550 = vmatpush1.msra.mxu0 0.0
  %2551 = vmatprep.subr.mxu0 0.0
  %2552 = vmatpush1.msra.mxu0 0.0
  %2553 = vmatprep.subr.mxu0 0.0
  %2554 = vmatpush1.msra.mxu0 0.0
  %2555 = vmatprep.subr.mxu0 0.0
  %2556 = vmatpush1.msra.mxu0 0.0
  %2557 = vmatprep.subr.mxu0 0.0
  %2558 = vmatpush1.msra.mxu0 0.0
  %2559 = vmatprep.subr.mxu0 0.0
  %2560 = vmatpush1.msra.mxu0 0.0
  %2561 = vmatprep.subr.mxu0 0.0
  %2562 = vmatpush1.msra.mxu0 0.0
  %2563 = vmatprep.subr.mxu0 0.0
  %2564 = vmatpush1.msra.mxu0 %v2212
  %2565 = vmatprep.subr.mxu0 0.0
  %2566 = vmatpush1.msra.mxu0 %v2211
  %2567 = vmatprep.subr.mxu0 0.0
  %2568 = vmatpush1.msra.mxu0 %v2210
  %2569 = vmatprep.subr.mxu0 0.0
  %2570 = vmatpush1.msra.mxu0 %v2209
  %2571 = vmatprep.subr.mxu0 0.0
  %2572 = vmatpush2.msra.mxu0 0.0
  %2573 = vmatprep.subr.mxu0 0.0
  %2574 = vmatpush2.msra.mxu0 0.0
  %2575 = vmatprep.subr.mxu0 0.0
  %2576 = vmatpush2.msra.mxu0 0.0
  %2577 = vmatprep.subr.mxu0 0.0
  %2578 = vmatpush2.msra.mxu0 0.0
  %2579 = vmatprep.subr.mxu0 0.0
  %2580 = vmatpush2.msra.mxu0 0.0
  %2581 = vmatprep.subr.mxu0 0.0
  %2582 = vmatpush2.msra.mxu0 0.0
  %2583 = vmatprep.subr.mxu0 0.0
  %2584 = vmatpush2.msra.mxu0 0.0
  %2585 = vmatprep.subr.mxu0 0.0
  %2586 = vmatpush2.msra.mxu0 0.0
  %2587 = vmatprep.subr.mxu0 0.0
  %2588 = vmatpush2.msra.mxu0 0.0
  %2589 = vmatprep.subr.mxu0 0.0
  %2590 = vmatpush2.msra.mxu0 0.0
  %2591 = vmatprep.subr.mxu0 0.0
  %2592 = vmatpush2.msra.mxu0 0.0
  %2593 = vmatprep.subr.mxu0 0.0
  %2594 = vmatpush2.msra.mxu0 0.0
  %2595 = vmatprep.subr.mxu0 0.0
  %2596 = vmatpush2.msra.mxu0 0.0
  %2597 = vmatprep.subr.mxu0 0.0
  %2598 = vmatpush2.msra.mxu0 0.0
  %2599 = vmatprep.subr.mxu0 0.0
  %2600 = vmatpush2.msra.mxu0 0.0
  %2601 = vmatprep.subr.mxu0 0.0
  %2602 = vmatpush2.msra.mxu0 0.0
  %2603 = vmatprep.mubr.f32.mxu0 0.0
  %2604 = vmatmul.mubr.f32.gmra.mxu0 %v2537
  %v2605 = vpop.f32.mrf.mxu0
  %v2606 = vadd.f32 0.0, %v2605
  %v2607 = vpop.f32.mrf.mxu0
  %2608 = vdwg.mxu0
  %v2609 = vadd.f32 %v2536, %v2606
  %v2610 = vmul.f32 %v2609, %v818
  %v2611 = vsub.f32 0.0, %v2610
  %v2612 = vmul.f32 %v2611, 1.442695
  %v2613 = vpow.pop %v2612
  %v2614 = vadd.f32 %v2613, 1.0
  %v2615 = vrcp.pop %v2614
  %v2616 = vmul.f32 %v2615, %v818
  %v2617 = vsub.f32 %v2616, %v819
  %v2618 = vmul.f32 %v2617, %v2524
  %2620 = vrot.lane.b32.xlu0 %v2617, 64
  %v2621 = vpop.permute.xlu0 %2620
  %v2623 = vmul.f32 %v2617, %v2621
  %2625 = vrot.lane.b32.xlu0 %v2623, 32
  %v2626 = vpop.permute.xlu0 %2625
  %v2628 = vadd.f32 %v2618, %v2626
  %v2629 = vtanh.pop %v2628
  %2631 = vrot.lane.b32.xlu0 %v2629, 64
  %v2632 = vpop.permute.xlu0 %2631
  %v2634 = vmul.f32 %v2617, %v2632
  %2636 = vrot.lane.b32.xlu0 %v2634, 32
  %v2637 = vpop.permute.xlu0 %2636
  %2639 = vst.msk [vmem:[#allocation3 + $0x8] sm:$0xff] %vm80, %v2637
  %v2640 = vadd.f32 %v2320, %v2424
  %v2641 = vsel %vm80, %v2637, 0
  %2643 = vmatprep.subr.mxu0 0.0
  %2644 = vmatpush1.msra.mxu0 0.0
  %2645 = vmatprep.subr.mxu0 0.0
  %2646 = vmatpush1.msra.mxu0 0.0
  %2647 = vmatprep.subr.mxu0 0.0
  %2648 = vmatpush1.msra.mxu0 0.0
  %2649 = vmatprep.subr.mxu0 0.0
  %2650 = vmatpush1.msra.mxu0 0.0
  %2651 = vmatprep.subr.mxu0 0.0
  %2652 = vmatpush1.msra.mxu0 0.0
  %2653 = vmatprep.subr.mxu0 0.0
  %2654 = vmatpush1.msra.mxu0 0.0
  %2655 = vmatprep.subr.mxu0 0.0
  %2656 = vmatpush1.msra.mxu0 0.0
  %2657 = vmatprep.subr.mxu0 0.0
  %2658 = vmatpush1.msra.mxu0 0.0
  %2659 = vmatprep.subr.mxu0 0.0
  %2660 = vmatpush1.msra.mxu0 0.0
  %2661 = vmatprep.subr.mxu0 0.0
  %2662 = vmatpush1.msra.mxu0 0.0
  %2663 = vmatprep.subr.mxu0 0.0
  %2664 = vmatpush1.msra.mxu0 0.0
  %2665 = vmatprep.subr.mxu0 0.0
  %2666 = vmatpush1.msra.mxu0 0.0
  %2667 = vmatprep.subr.mxu0 0.0
  %2668 = vmatpush1.msra.mxu0 %v2212
  %2669 = vmatprep.subr.mxu0 0.0
  %2670 = vmatpush1.msra.mxu0 %v2211
  %2671 = vmatprep.subr.mxu0 0.0
  %2672 = vmatpush1.msra.mxu0 %v2210
  %2673 = vmatprep.subr.mxu0 0.0
  %2674 = vmatpush1.msra.mxu0 %v2209
  %2675 = vmatprep.subr.mxu0 0.0
  %2676 = vmatpush2.msra.mxu0 0.0
  %2677 = vmatprep.subr.mxu0 0.0
  %2678 = vmatpush2.msra.mxu0 0.0
  %2679 = vmatprep.subr.mxu0 0.0
  %2680 = vmatpush2.msra.mxu0 0.0
  %2681 = vmatprep.subr.mxu0 0.0
  %2682 = vmatpush2.msra.mxu0 0.0
  %2683 = vmatprep.subr.mxu0 0.0
  %2684 = vmatpush2.msra.mxu0 0.0
  %2685 = vmatprep.subr.mxu0 0.0
  %2686 = vmatpush2.msra.mxu0 0.0
  %2687 = vmatprep.subr.mxu0 0.0
  %2688 = vmatpush2.msra.mxu0 0.0
  %2689 = vmatprep.subr.mxu0 0.0
  %2690 = vmatpush2.msra.mxu0 0.0
  %2691 = vmatprep.subr.mxu0 0.0
  %2692 = vmatpush2.msra.mxu0 0.0
  %2693 = vmatprep.subr.mxu0 0.0
  %2694 = vmatpush2.msra.mxu0 0.0
  %2695 = vmatprep.subr.mxu0 0.0
  %2696 = vmatpush2.msra.mxu0 0.0
  %2697 = vmatprep.subr.mxu0 0.0
  %2698 = vmatpush2.msra.mxu0 0.0
  %2699 = vmatprep.subr.mxu0 0.0
  %2700 = vmatpush2.msra.mxu0 0.0
  %2701 = vmatprep.subr.mxu0 0.0
  %2702 = vmatpush2.msra.mxu0 0.0
  %2703 = vmatprep.subr.mxu0 0.0
  %2704 = vmatpush2.msra.mxu0 0.0
  %2705 = vmatprep.subr.mxu0 0.0
  %2706 = vmatpush2.msra.mxu0 0.0
  %2707 = vmatprep.mubr.f32.mxu0 0.0
  %2708 = vmatmul.mubr.f32.gmra.mxu0 %v2641
  %v2709 = vpop.f32.mrf.mxu0
  %v2710 = vadd.f32 0.0, %v2709
  %v2711 = vpop.f32.mrf.mxu0
  %2712 = vdwg.mxu0
  %v2713 = vadd.f32 %v2640, %v2710
  %v2714 = vmul.f32 %v2713, %v818
  %v2715 = vsub.f32 0.0, %v2714
  %v2716 = vmul.f32 %v2715, 1.442695
  %v2717 = vpow.pop %v2716
  %v2718 = vadd.f32 %v2717, 1.0
  %v2719 = vrcp.pop %v2718
  %v2720 = vmul.f32 %v2719, %v818
  %v2721 = vsub.f32 %v2720, %v819
  %v2722 = vmul.f32 %v2721, %v2628
  %2724 = vrot.lane.b32.xlu0 %v2721, 64
  %v2725 = vpop.permute.xlu0 %2724
  %v2727 = vmul.f32 %v2721, %v2725
  %2729 = vrot.lane.b32.xlu0 %v2727, 32
  %v2730 = vpop.permute.xlu0 %2729
  %v2732 = vadd.f32 %v2722, %v2730
  %v2733 = vtanh.pop %v2732
  %2735 = vrot.lane.b32.xlu0 %v2733, 64
  %v2736 = vpop.permute.xlu0 %2735
  %v2738 = vmul.f32 %v2721, %v2736
  %2740 = vrot.lane.b32.xlu0 %v2738, 32
  %v2741 = vpop.permute.xlu0 %2740
  %2743 = vst.msk [vmem:[#allocation3 + $0x10] sm:$0xff] %vm80, %v2741
  %v2744 = vadd.f32 %v2325, %v2424
  %v2745 = vsel %vm80, %v2741, 0
  %2747 = vmatprep.subr.mxu0 0.0
  %2748 = vmatpush1.msra.mxu0 0.0
  %2749 = vmatprep.subr.mxu0 0.0
  %2750 = vmatpush1.msra.mxu0 0.0
  %2751 = vmatprep.subr.mxu0 0.0
  %2752 = vmatpush1.msra.mxu0 0.0
  %2753 = vmatprep.subr.mxu0 0.0
  %2754 = vmatpush1.msra.mxu0 0.0
  %2755 = vmatprep.subr.mxu0 0.0
  %2756 = vmatpush1.msra.mxu0 0.0
  %2757 = vmatprep.subr.mxu0 0.0
  %2758 = vmatpush1.msra.mxu0 0.0
  %2759 = vmatprep.subr.mxu0 0.0
  %2760 = vmatpush1.msra.mxu0 0.0
  %2761 = vmatprep.subr.mxu0 0.0
  %2762 = vmatpush1.msra.mxu0 0.0
  %2763 = vmatprep.subr.mxu0 0.0
  %2764 = vmatpush1.msra.mxu0 0.0
  %2765 = vmatprep.subr.mxu0 0.0
  %2766 = vmatpush1.msra.mxu0 0.0
  %2767 = vmatprep.subr.mxu0 0.0
  %2768 = vmatpush1.msra.mxu0 0.0
  %2769 = vmatprep.subr.mxu0 0.0
  %2770 = vmatpush1.msra.mxu0 0.0
  %2771 = vmatprep.subr.mxu0 0.0
  %2772 = vmatpush1.msra.mxu0 %v2212
  %2773 = vmatprep.subr.mxu0 0.0
  %2774 = vmatpush1.msra.mxu0 %v2211
  %2775 = vmatprep.subr.mxu0 0.0
  %2776 = vmatpush1.msra.mxu0 %v2210
  %2777 = vmatprep.subr.mxu0 0.0
  %2778 = vmatpush1.msra.mxu0 %v2209
  %2779 = vmatprep.subr.mxu0 0.0
  %2780 = vmatpush2.msra.mxu0 0.0
  %2781 = vmatprep.subr.mxu0 0.0
  %2782 = vmatpush2.msra.mxu0 0.0
  %2783 = vmatprep.subr.mxu0 0.0
  %2784 = vmatpush2.msra.mxu0 0.0
  %2785 = vmatprep.subr.mxu0 0.0
  %2786 = vmatpush2.msra.mxu0 0.0
  %2787 = vmatprep.subr.mxu0 0.0
  %2788 = vmatpush2.msra.mxu0 0.0
  %2789 = vmatprep.subr.mxu0 0.0
  %2790 = vmatpush2.msra.mxu0 0.0
  %2791 = vmatprep.subr.mxu0 0.0
  %2792 = vmatpush2.msra.mxu0 0.0
  %2793 = vmatprep.subr.mxu0 0.0
  %2794 = vmatpush2.msra.mxu0 0.0
  %2795 = vmatprep.subr.mxu0 0.0
  %2796 = vmatpush2.msra.mxu0 0.0
  %2797 = vmatprep.subr.mxu0 0.0
  %2798 = vmatpush2.msra.mxu0 0.0
  %2799 = vmatprep.subr.mxu0 0.0
  %2800 = vmatpush2.msra.mxu0 0.0
  %2801 = vmatprep.subr.mxu0 0.0
  %2802 = vmatpush2.msra.mxu0 0.0
  %2803 = vmatprep.subr.mxu0 0.0
  %2804 = vmatpush2.msra.mxu0 0.0
  %2805 = vmatprep.subr.mxu0 0.0
  %2806 = vmatpush2.msra.mxu0 0.0
  %2807 = vmatprep.subr.mxu0 0.0
  %2808 = vmatpush2.msra.mxu0 0.0
  %2809 = vmatprep.subr.mxu0 0.0
  %2810 = vmatpush2.msra.mxu0 0.0
  %2811 = vmatprep.mubr.f32.mxu0 0.0
  %2812 = vmatmul.mubr.f32.gmra.mxu0 %v2745
  %v2813 = vpop.f32.mrf.mxu0
  %v2814 = vadd.f32 0.0, %v2813
  %v2815 = vpop.f32.mrf.mxu0
  %2816 = vdwg.mxu0
  %v2817 = vadd.f32 %v2744, %v2814
  %v2818 = vmul.f32 %v2817, %v818
  %v2819 = vsub.f32 0.0, %v2818
  %v2820 = vmul.f32 %v2819, 1.442695
  %v2821 = vpow.pop %v2820
  %v2822 = vadd.f32 %v2821, 1.0
  %v2823 = vrcp.pop %v2822
  %v2824 = vmul.f32 %v2823, %v818
  %v2825 = vsub.f32 %v2824, %v819
  %v2826 = vmul.f32 %v2825, %v2732
  %2828 = vrot.lane.b32.xlu0 %v2825, 64
  %v2829 = vpop.permute.xlu0 %2828
  %v2831 = vmul.f32 %v2825, %v2829
  %2833 = vrot.lane.b32.xlu0 %v2831, 32
  %v2834 = vpop.permute.xlu0 %2833
  %v2836 = vadd.f32 %v2826, %v2834
  %v2837 = vtanh.pop %v2836
  %2839 = vrot.lane.b32.xlu0 %v2837, 64
  %v2840 = vpop.permute.xlu0 %2839
  %v2842 = vmul.f32 %v2825, %v2840
  %2844 = vrot.lane.b32.xlu0 %v2842, 32
  %v2845 = vpop.permute.xlu0 %2844
  %2847 = vst.msk [vmem:[#allocation3 + $0x18] sm:$0xff] %vm80, %v2845
  %v2848 = vadd.f32 %v2330, %v2424
  %v2849 = vsel %vm80, %v2845, 0
  %2851 = vmatprep.subr.mxu0 0.0
  %2852 = vmatpush1.msra.mxu0 0.0
  %2853 = vmatprep.subr.mxu0 0.0
  %2854 = vmatpush1.msra.mxu0 0.0
  %2855 = vmatprep.subr.mxu0 0.0
  %2856 = vmatpush1.msra.mxu0 0.0
  %2857 = vmatprep.subr.mxu0 0.0
  %2858 = vmatpush1.msra.mxu0 0.0
  %2859 = vmatprep.subr.mxu0 0.0
  %2860 = vmatpush1.msra.mxu0 0.0
  %2861 = vmatprep.subr.mxu0 0.0
  %2862 = vmatpush1.msra.mxu0 0.0
  %2863 = vmatprep.subr.mxu0 0.0
  %2864 = vmatpush1.msra.mxu0 0.0
  %2865 = vmatprep.subr.mxu0 0.0
  %2866 = vmatpush1.msra.mxu0 0.0
  %2867 = vmatprep.subr.mxu0 0.0
  %2868 = vmatpush1.msra.mxu0 0.0
  %2869 = vmatprep.subr.mxu0 0.0
  %2870 = vmatpush1.msra.mxu0 0.0
  %2871 = vmatprep.subr.mxu0 0.0
  %2872 = vmatpush1.msra.mxu0 0.0
  %2873 = vmatprep.subr.mxu0 0.0
  %2874 = vmatpush1.msra.mxu0 0.0
  %2875 = vmatprep.subr.mxu0 0.0
  %2876 = vmatpush1.msra.mxu0 %v2212
  %2877 = vmatprep.subr.mxu0 0.0
  %2878 = vmatpush1.msra.mxu0 %v2211
  %2879 = vmatprep.subr.mxu0 0.0
  %2880 = vmatpush1.msra.mxu0 %v2210
  %2881 = vmatprep.subr.mxu0 0.0
  %2882 = vmatpush1.msra.mxu0 %v2209
  %2883 = vmatprep.subr.mxu0 0.0
  %2884 = vmatpush2.msra.mxu0 0.0
  %2885 = vmatprep.subr.mxu0 0.0
  %2886 = vmatpush2.msra.mxu0 0.0
  %2887 = vmatprep.subr.mxu0 0.0
  %2888 = vmatpush2.msra.mxu0 0.0
  %2889 = vmatprep.subr.mxu0 0.0
  %2890 = vmatpush2.msra.mxu0 0.0
  %2891 = vmatprep.subr.mxu0 0.0
  %2892 = vmatpush2.msra.mxu0 0.0
  %2893 = vmatprep.subr.mxu0 0.0
  %2894 = vmatpush2.msra.mxu0 0.0
  %2895 = vmatprep.subr.mxu0 0.0
  %2896 = vmatpush2.msra.mxu0 0.0
  %2897 = vmatprep.subr.mxu0 0.0
  %2898 = vmatpush2.msra.mxu0 0.0
  %2899 = vmatprep.subr.mxu0 0.0
  %2900 = vmatpush2.msra.mxu0 0.0
  %2901 = vmatprep.subr.mxu0 0.0
  %2902 = vmatpush2.msra.mxu0 0.0
  %2903 = vmatprep.subr.mxu0 0.0
  %2904 = vmatpush2.msra.mxu0 0.0
  %2905 = vmatprep.subr.mxu0 0.0
  %2906 = vmatpush2.msra.mxu0 0.0
  %2907 = vmatprep.subr.mxu0 0.0
  %2908 = vmatpush2.msra.mxu0 0.0
  %2909 = vmatprep.subr.mxu0 0.0
  %2910 = vmatpush2.msra.mxu0 0.0
  %2911 = vmatprep.subr.mxu0 0.0
  %2912 = vmatpush2.msra.mxu0 0.0
  %2913 = vmatprep.subr.mxu0 0.0
  %2914 = vmatpush2.msra.mxu0 0.0
  %2915 = vmatprep.mubr.f32.mxu0 0.0
  %2916 = vmatmul.mubr.f32.gmra.mxu0 %v2849
  %v2917 = vpop.f32.mrf.mxu0
  %v2918 = vadd.f32 0.0, %v2917
  %v2919 = vpop.f32.mrf.mxu0
  %2920 = vdwg.mxu0
  %v2921 = vadd.f32 %v2848, %v2918
  %v2922 = vmul.f32 %v2921, %v818
  %v2923 = vsub.f32 0.0, %v2922
  %v2924 = vmul.f32 %v2923, 1.442695
  %v2925 = vpow.pop %v2924
  %v2926 = vadd.f32 %v2925, 1.0
  %v2927 = vrcp.pop %v2926
  %v2928 = vmul.f32 %v2927, %v818
  %v2929 = vsub.f32 %v2928, %v819
  %v2930 = vmul.f32 %v2929, %v2836
  %2932 = vrot.lane.b32.xlu0 %v2929, 64
  %v2933 = vpop.permute.xlu0 %2932
  %v2935 = vmul.f32 %v2929, %v2933
  %2937 = vrot.lane.b32.xlu0 %v2935, 32
  %v2938 = vpop.permute.xlu0 %2937
  %v2940 = vadd.f32 %v2930, %v2938
  %v2941 = vtanh.pop %v2940
  %2943 = vrot.lane.b32.xlu0 %v2941, 64
  %v2944 = vpop.permute.xlu0 %2943
  %v2946 = vmul.f32 %v2929, %v2944
  %2948 = vrot.lane.b32.xlu0 %v2946, 32
  %v2949 = vpop.permute.xlu0 %2948
  %2951 = vst.msk [vmem:[#allocation3 + $0x20] sm:$0xff] %vm80, %v2949
  %v2952 = vadd.f32 %v2335, %v2424
  %v2953 = vsel %vm80, %v2949, 0
  %2955 = vmatprep.subr.mxu0 0.0
  %2956 = vmatpush1.msra.mxu0 0.0
  %2957 = vmatprep.subr.mxu0 0.0
  %2958 = vmatpush1.msra.mxu0 0.0
  %2959 = vmatprep.subr.mxu0 0.0
  %2960 = vmatpush1.msra.mxu0 0.0
  %2961 = vmatprep.subr.mxu0 0.0
  %2962 = vmatpush1.msra.mxu0 0.0
  %2963 = vmatprep.subr.mxu0 0.0
  %2964 = vmatpush1.msra.mxu0 0.0
  %2965 = vmatprep.subr.mxu0 0.0
  %2966 = vmatpush1.msra.mxu0 0.0
  %2967 = vmatprep.subr.mxu0 0.0
  %2968 = vmatpush1.msra.mxu0 0.0
  %2969 = vmatprep.subr.mxu0 0.0
  %2970 = vmatpush1.msra.mxu0 0.0
  %2971 = vmatprep.subr.mxu0 0.0
  %2972 = vmatpush1.msra.mxu0 0.0
  %2973 = vmatprep.subr.mxu0 0.0
  %2974 = vmatpush1.msra.mxu0 0.0
  %2975 = vmatprep.subr.mxu0 0.0
  %2976 = vmatpush1.msra.mxu0 0.0
  %2977 = vmatprep.subr.mxu0 0.0
  %2978 = vmatpush1.msra.mxu0 0.0
  %2979 = vmatprep.subr.mxu0 0.0
  %2980 = vmatpush1.msra.mxu0 %v2212
  %2981 = vmatprep.subr.mxu0 0.0
  %2982 = vmatpush1.msra.mxu0 %v2211
  %2983 = vmatprep.subr.mxu0 0.0
  %2984 = vmatpush1.msra.mxu0 %v2210
  %2985 = vmatprep.subr.mxu0 0.0
  %2986 = vmatpush1.msra.mxu0 %v2209
  %2987 = vmatprep.subr.mxu0 0.0
  %2988 = vmatpush2.msra.mxu0 0.0
  %2989 = vmatprep.subr.mxu0 0.0
  %2990 = vmatpush2.msra.mxu0 0.0
  %2991 = vmatprep.subr.mxu0 0.0
  %2992 = vmatpush2.msra.mxu0 0.0
  %2993 = vmatprep.subr.mxu0 0.0
  %2994 = vmatpush2.msra.mxu0 0.0
  %2995 = vmatprep.subr.mxu0 0.0
  %2996 = vmatpush2.msra.mxu0 0.0
  %2997 = vmatprep.subr.mxu0 0.0
  %2998 = vmatpush2.msra.mxu0 0.0
  %2999 = vmatprep.subr.mxu0 0.0
  %3000 = vmatpush2.msra.mxu0 0.0
  %3001 = vmatprep.subr.mxu0 0.0
  %3002 = vmatpush2.msra.mxu0 0.0
  %3003 = vmatprep.subr.mxu0 0.0
  %3004 = vmatpush2.msra.mxu0 0.0
  %3005 = vmatprep.subr.mxu0 0.0
  %3006 = vmatpush2.msra.mxu0 0.0
  %3007 = vmatprep.subr.mxu0 0.0
  %3008 = vmatpush2.msra.mxu0 0.0
  %3009 = vmatprep.subr.mxu0 0.0
  %3010 = vmatpush2.msra.mxu0 0.0
  %3011 = vmatprep.subr.mxu0 0.0
  %3012 = vmatpush2.msra.mxu0 0.0
  %3013 = vmatprep.subr.mxu0 0.0
  %3014 = vmatpush2.msra.mxu0 0.0
  %3015 = vmatprep.subr.mxu0 0.0
  %3016 = vmatpush2.msra.mxu0 0.0
  %3017 = vmatprep.subr.mxu0 0.0
  %3018 = vmatpush2.msra.mxu0 0.0
  %3019 = vmatprep.mubr.f32.mxu0 0.0
  %3020 = vmatmul.mubr.f32.gmra.mxu0 %v2953
  %v3021 = vpop.f32.mrf.mxu0
  %v3022 = vadd.f32 0.0, %v3021
  %v3023 = vpop.f32.mrf.mxu0
  %3024 = vdwg.mxu0
  %v3025 = vadd.f32 %v2952, %v3022
  %v3026 = vmul.f32 %v3025, %v818
  %v3027 = vsub.f32 0.0, %v3026
  %v3028 = vmul.f32 %v3027, 1.442695
  %v3029 = vpow.pop %v3028
  %v3030 = vadd.f32 %v3029, 1.0
  %v3031 = vrcp.pop %v3030
  %v3032 = vmul.f32 %v3031, %v818
  %v3033 = vsub.f32 %v3032, %v819
  %v3034 = vmul.f32 %v3033, %v2940
  %3036 = vrot.lane.b32.xlu0 %v3033, 64
  %v3037 = vpop.permute.xlu0 %3036
  %v3039 = vmul.f32 %v3033, %v3037
  %3041 = vrot.lane.b32.xlu0 %v3039, 32
  %v3042 = vpop.permute.xlu0 %3041
  %v3044 = vadd.f32 %v3034, %v3042
  %v3045 = vtanh.pop %v3044
  %3047 = vrot.lane.b32.xlu0 %v3045, 64
  %v3048 = vpop.permute.xlu0 %3047
  %v3050 = vmul.f32 %v3033, %v3048
  %3052 = vrot.lane.b32.xlu0 %v3050, 32
  %v3053 = vpop.permute.xlu0 %3052
  %3055 = vst.msk [vmem:[#allocation3 + $0x28] sm:$0xff] %vm80, %v3053
  %v3056 = vadd.f32 %v2340, %v2424
  %v3057 = vsel %vm80, %v3053, 0
  %3059 = vmatprep.subr.mxu0 0.0
  %3060 = vmatpush1.msra.mxu0 0.0
  %3061 = vmatprep.subr.mxu0 0.0
  %3062 = vmatpush1.msra.mxu0 0.0
  %3063 = vmatprep.subr.mxu0 0.0
  %3064 = vmatpush1.msra.mxu0 0.0
  %3065 = vmatprep.subr.mxu0 0.0
  %3066 = vmatpush1.msra.mxu0 0.0
  %3067 = vmatprep.subr.mxu0 0.0
  %3068 = vmatpush1.msra.mxu0 0.0
  %3069 = vmatprep.subr.mxu0 0.0
  %3070 = vmatpush1.msra.mxu0 0.0
  %3071 = vmatprep.subr.mxu0 0.0
  %3072 = vmatpush1.msra.mxu0 0.0
  %3073 = vmatprep.subr.mxu0 0.0
  %3074 = vmatpush1.msra.mxu0 0.0
  %3075 = vmatprep.subr.mxu0 0.0
  %3076 = vmatpush1.msra.mxu0 0.0
  %3077 = vmatprep.subr.mxu0 0.0
  %3078 = vmatpush1.msra.mxu0 0.0
  %3079 = vmatprep.subr.mxu0 0.0
  %3080 = vmatpush1.msra.mxu0 0.0
  %3081 = vmatprep.subr.mxu0 0.0
  %3082 = vmatpush1.msra.mxu0 0.0
  %3083 = vmatprep.subr.mxu0 0.0
  %3084 = vmatpush1.msra.mxu0 %v2212
  %3085 = vmatprep.subr.mxu0 0.0
  %3086 = vmatpush1.msra.mxu0 %v2211
  %3087 = vmatprep.subr.mxu0 0.0
  %3088 = vmatpush1.msra.mxu0 %v2210
  %3089 = vmatprep.subr.mxu0 0.0
  %3090 = vmatpush1.msra.mxu0 %v2209
  %3091 = vmatprep.subr.mxu0 0.0
  %3092 = vmatpush2.msra.mxu0 0.0
  %3093 = vmatprep.subr.mxu0 0.0
  %3094 = vmatpush2.msra.mxu0 0.0
  %3095 = vmatprep.subr.mxu0 0.0
  %3096 = vmatpush2.msra.mxu0 0.0
  %3097 = vmatprep.subr.mxu0 0.0
  %3098 = vmatpush2.msra.mxu0 0.0
  %3099 = vmatprep.subr.mxu0 0.0
  %3100 = vmatpush2.msra.mxu0 0.0
  %3101 = vmatprep.subr.mxu0 0.0
  %3102 = vmatpush2.msra.mxu0 0.0
  %3103 = vmatprep.subr.mxu0 0.0
  %3104 = vmatpush2.msra.mxu0 0.0
  %3105 = vmatprep.subr.mxu0 0.0
  %3106 = vmatpush2.msra.mxu0 0.0
  %3107 = vmatprep.subr.mxu0 0.0
  %3108 = vmatpush2.msra.mxu0 0.0
  %3109 = vmatprep.subr.mxu0 0.0
  %3110 = vmatpush2.msra.mxu0 0.0
  %3111 = vmatprep.subr.mxu0 0.0
  %3112 = vmatpush2.msra.mxu0 0.0
  %3113 = vmatprep.subr.mxu0 0.0
  %3114 = vmatpush2.msra.mxu0 0.0
  %3115 = vmatprep.subr.mxu0 0.0
  %3116 = vmatpush2.msra.mxu0 0.0
  %3117 = vmatprep.subr.mxu0 0.0
  %3118 = vmatpush2.msra.mxu0 0.0
  %3119 = vmatprep.subr.mxu0 0.0
  %3120 = vmatpush2.msra.mxu0 0.0
  %3121 = vmatprep.subr.mxu0 0.0
  %3122 = vmatpush2.msra.mxu0 0.0
  %3123 = vmatprep.mubr.f32.mxu0 0.0
  %3124 = vmatmul.mubr.f32.gmra.mxu0 %v3057
  %v3125 = vpop.f32.mrf.mxu0
  %v3126 = vadd.f32 0.0, %v3125
  %v3127 = vpop.f32.mrf.mxu0
  %3128 = vdwg.mxu0
  %v3129 = vadd.f32 %v3056, %v3126
  %v3130 = vmul.f32 %v3129, %v818
  %v3131 = vsub.f32 0.0, %v3130
  %v3132 = vmul.f32 %v3131, 1.442695
  %v3133 = vpow.pop %v3132
  %v3134 = vadd.f32 %v3133, 1.0
  %v3135 = vrcp.pop %v3134
  %v3136 = vmul.f32 %v3135, %v818
  %v3137 = vsub.f32 %v3136, %v819
  %v3138 = vmul.f32 %v3137, %v3044
  %3140 = vrot.lane.b32.xlu0 %v3137, 64
  %v3141 = vpop.permute.xlu0 %3140
  %v3143 = vmul.f32 %v3137, %v3141
  %3145 = vrot.lane.b32.xlu0 %v3143, 32
  %v3146 = vpop.permute.xlu0 %3145
  %v3148 = vadd.f32 %v3138, %v3146
  %v3149 = vtanh.pop %v3148
  %3151 = vrot.lane.b32.xlu0 %v3149, 64
  %v3152 = vpop.permute.xlu0 %3151
  %v3154 = vmul.f32 %v3137, %v3152
  %3156 = vrot.lane.b32.xlu0 %v3154, 32
  %v3157 = vpop.permute.xlu0 %3156
  %3159 = vst.msk [vmem:[#allocation3 + $0x30] sm:$0xff] %vm80, %v3157
  %v3160 = vadd.f32 %v2345, %v2424
  %v3161 = vsel %vm80, %v3157, 0
  %3163 = vmatprep.subr.mxu0 0.0
  %3164 = vmatpush1.msra.mxu0 0.0
  %3165 = vmatprep.subr.mxu0 0.0
  %3166 = vmatpush1.msra.mxu0 0.0
  %3167 = vmatprep.subr.mxu0 0.0
  %3168 = vmatpush1.msra.mxu0 0.0
  %3169 = vmatprep.subr.mxu0 0.0
  %3170 = vmatpush1.msra.mxu0 0.0
  %3171 = vmatprep.subr.mxu0 0.0
  %3172 = vmatpush1.msra.mxu0 0.0
  %3173 = vmatprep.subr.mxu0 0.0
  %3174 = vmatpush1.msra.mxu0 0.0
  %3175 = vmatprep.subr.mxu0 0.0
  %3176 = vmatpush1.msra.mxu0 0.0
  %3177 = vmatprep.subr.mxu0 0.0
  %3178 = vmatpush1.msra.mxu0 0.0
  %3179 = vmatprep.subr.mxu0 0.0
  %3180 = vmatpush1.msra.mxu0 0.0
  %3181 = vmatprep.subr.mxu0 0.0
  %3182 = vmatpush1.msra.mxu0 0.0
  %3183 = vmatprep.subr.mxu0 0.0
  %3184 = vmatpush1.msra.mxu0 0.0
  %3185 = vmatprep.subr.mxu0 0.0
  %3186 = vmatpush1.msra.mxu0 0.0
  %3187 = vmatprep.subr.mxu0 0.0
  %3188 = vmatpush1.msra.mxu0 %v2212
  %3189 = vmatprep.subr.mxu0 0.0
  %3190 = vmatpush1.msra.mxu0 %v2211
  %3191 = vmatprep.subr.mxu0 0.0
  %3192 = vmatpush1.msra.mxu0 %v2210
  %3193 = vmatprep.subr.mxu0 0.0
  %3194 = vmatpush1.msra.mxu0 %v2209
  %3195 = vmatprep.subr.mxu0 0.0
  %3196 = vmatpush2.msra.mxu0 0.0
  %3197 = vmatprep.subr.mxu0 0.0
  %3198 = vmatpush2.msra.mxu0 0.0
  %3199 = vmatprep.subr.mxu0 0.0
  %3200 = vmatpush2.msra.mxu0 0.0
  %3201 = vmatprep.subr.mxu0 0.0
  %3202 = vmatpush2.msra.mxu0 0.0
  %3203 = vmatprep.subr.mxu0 0.0
  %3204 = vmatpush2.msra.mxu0 0.0
  %3205 = vmatprep.subr.mxu0 0.0
  %3206 = vmatpush2.msra.mxu0 0.0
  %3207 = vmatprep.subr.mxu0 0.0
  %3208 = vmatpush2.msra.mxu0 0.0
  %3209 = vmatprep.subr.mxu0 0.0
  %3210 = vmatpush2.msra.mxu0 0.0
  %3211 = vmatprep.subr.mxu0 0.0
  %3212 = vmatpush2.msra.mxu0 0.0
  %3213 = vmatprep.subr.mxu0 0.0
  %3214 = vmatpush2.msra.mxu0 0.0
  %3215 = vmatprep.subr.mxu0 0.0
  %3216 = vmatpush2.msra.mxu0 0.0
  %3217 = vmatprep.subr.mxu0 0.0
  %3218 = vmatpush2.msra.mxu0 0.0
  %3219 = vmatprep.subr.mxu0 0.0
  %3220 = vmatpush2.msra.mxu0 0.0
  %3221 = vmatprep.subr.mxu0 0.0
  %3222 = vmatpush2.msra.mxu0 0.0
  %3223 = vmatprep.subr.mxu0 0.0
  %3224 = vmatpush2.msra.mxu0 0.0
  %3225 = vmatprep.subr.mxu0 0.0
  %3226 = vmatpush2.msra.mxu0 0.0
  %3227 = vmatprep.mubr.f32.mxu0 0.0
  %3228 = vmatmul.mubr.f32.gmra.mxu0 %v3161
  %v3229 = vpop.f32.mrf.mxu0
  %v3230 = vadd.f32 0.0, %v3229
  %v3231 = vpop.f32.mrf.mxu0
  %3232 = vdwg.mxu0
  %v3233 = vadd.f32 %v3160, %v3230
  %v3234 = vmul.f32 %v3233, %v818
  %v3235 = vsub.f32 0.0, %v3234
  %v3236 = vmul.f32 %v3235, 1.442695
  %v3237 = vpow.pop %v3236
  %v3238 = vadd.f32 %v3237, 1.0
  %v3239 = vrcp.pop %v3238
  %v3240 = vmul.f32 %v3239, %v818
  %v3241 = vsub.f32 %v3240, %v819
  %v3242 = vmul.f32 %v3241, %v3148
  %3244 = vrot.lane.b32.xlu0 %v3241, 64
  %v3245 = vpop.permute.xlu0 %3244
  %v3247 = vmul.f32 %v3241, %v3245
  %3249 = vrot.lane.b32.xlu0 %v3247, 32
  %v3250 = vpop.permute.xlu0 %3249
  %v3252 = vadd.f32 %v3242, %v3250
  %v3253 = vtanh.pop %v3252
  %3255 = vrot.lane.b32.xlu0 %v3253, 64
  %v3256 = vpop.permute.xlu0 %3255
  %v3258 = vmul.f32 %v3241, %v3256
  %3260 = vrot.lane.b32.xlu0 %v3258, 32
  %v3261 = vpop.permute.xlu0 %3260
  %3263 = vst.msk [vmem:[#allocation3 + $0x38] sm:$0xff] %vm80, %v3261
  %v3264 = vld [vmem:[#allocation3] sm:$0xff]
  %v3265 = vld [vmem:[#allocation3 + $0x8] sm:$0xff]
  %v3266 = vld [vmem:[#allocation3 + $0x10] sm:$0xff]
  %v3267 = vld [vmem:[#allocation3 + $0x18] sm:$0xff]
  %v3268 = vld [vmem:[#allocation3 + $0x20] sm:$0xff]
  %v3269 = vld [vmem:[#allocation3 + $0x28] sm:$0xff]
  %v3270 = vld [vmem:[#allocation3 + $0x30] sm:$0xff]
  %v3271 = vld [vmem:[#allocation3 + $0x38] sm:$0xff]
  %v3273 = vlaneseq
  %v3274 = vshrl.u32 %v3273, 7
  %v3275 = vsub.s32 0, %v3274
  %v3276 = vrot.slane %v2218, %v3275
  %v3279 = vsel %vm80, %v3264, 0
  %v3282 = vsel %vm80, %v3265, 0
  %v3285 = vsel %vm80, %v3266, 0
  %v3288 = vsel %vm80, %v3267, 0
  %v3291 = vsel %vm80, %v3268, 0
  %v3294 = vsel %vm80, %v3269, 0
  %v3297 = vsel %vm80, %v3270, 0
  %v3300 = vsel %vm80, %v3271, 0
  %3302 = vmatprep.subr.mxu0 0.0
  %3303 = vmatpush1.msra.mxu0 0.0
  %3304 = vmatprep.subr.mxu0 0.0
  %3305 = vmatpush1.msra.mxu0 0.0
  %3306 = vmatprep.subr.mxu0 0.0
  %3307 = vmatpush1.msra.mxu0 0.0
  %3308 = vmatprep.subr.mxu0 0.0
  %3309 = vmatpush1.msra.mxu0 0.0
  %3310 = vmatprep.subr.mxu0 0.0
  %3311 = vmatpush1.msra.mxu0 0.0
  %3312 = vmatprep.subr.mxu0 0.0
  %3313 = vmatpush1.msra.mxu0 0.0
  %3314 = vmatprep.subr.mxu0 0.0
  %3315 = vmatpush1.msra.mxu0 0.0
  %3316 = vmatprep.subr.mxu0 0.0
  %3317 = vmatpush1.msra.mxu0 0.0
  %3318 = vmatprep.subr.mxu0 0.0
  %3319 = vmatpush1.msra.mxu0 0.0
  %3320 = vmatprep.subr.mxu0 0.0
  %3321 = vmatpush1.msra.mxu0 0.0
  %3322 = vmatprep.subr.mxu0 0.0
  %3323 = vmatpush1.msra.mxu0 0.0
  %3324 = vmatprep.subr.mxu0 0.0
  %3325 = vmatpush1.msra.mxu0 0.0
  %3326 = vmatprep.subr.mxu0 0.0
  %3327 = vmatpush1.msra.mxu0 %v2217
  %3328 = vmatprep.subr.mxu0 0.0
  %3329 = vmatpush1.msra.mxu0 %v2216
  %3330 = vmatprep.subr.mxu0 0.0
  %3331 = vmatpush1.msra.mxu0 %v2215
  %3332 = vmatprep.subr.mxu0 0.0
  %3333 = vmatpush1.msra.mxu0 %v2214
  %3334 = vmatprep.subr.mxu0 0.0
  %3335 = vmatpush2.msra.mxu0 0.0
  %3336 = vmatprep.subr.mxu0 0.0
  %3337 = vmatpush2.msra.mxu0 0.0
  %3338 = vmatprep.subr.mxu0 0.0
  %3339 = vmatpush2.msra.mxu0 0.0
  %3340 = vmatprep.subr.mxu0 0.0
  %3341 = vmatpush2.msra.mxu0 0.0
  %3342 = vmatprep.subr.mxu0 0.0
  %3343 = vmatpush2.msra.mxu0 0.0
  %3344 = vmatprep.subr.mxu0 0.0
  %3345 = vmatpush2.msra.mxu0 0.0
  %3346 = vmatprep.subr.mxu0 0.0
  %3347 = vmatpush2.msra.mxu0 0.0
  %3348 = vmatprep.subr.mxu0 0.0
  %3349 = vmatpush2.msra.mxu0 0.0
  %3350 = vmatprep.subr.mxu0 0.0
  %3351 = vmatpush2.msra.mxu0 0.0
  %3352 = vmatprep.subr.mxu0 0.0
  %3353 = vmatpush2.msra.mxu0 0.0
  %3354 = vmatprep.subr.mxu0 0.0
  %3355 = vmatpush2.msra.mxu0 0.0
  %3356 = vmatprep.subr.mxu0 0.0
  %3357 = vmatpush2.msra.mxu0 0.0
  %3358 = vmatprep.subr.mxu0 0.0
  %3359 = vmatpush2.msra.mxu0 0.0
  %3360 = vmatprep.subr.mxu0 0.0
  %3361 = vmatpush2.msra.mxu0 0.0
  %3362 = vmatprep.subr.mxu0 0.0
  %3363 = vmatpush2.msra.mxu0 0.0
  %3364 = vmatprep.subr.mxu0 0.0
  %3365 = vmatpush2.msra.mxu0 0.0
  %3366 = vmatprep.mubr.f32.mxu0 0.0
  %3367 = vmatmul.mubr.f32.gmra.mxu0 %v3279
  %v3368 = vpop.f32.mrf.mxu0
  %v3369 = vadd.f32 %v3276, %v3368
  %v3370 = vpop.f32.mrf.mxu0
  %3371 = vmatprep.mubr.f32.mxu0 0.0
  %3372 = vmatmul.mubr.f32.gmra.mxu0 %v3282
  %v3373 = vpop.f32.mrf.mxu0
  %v3374 = vadd.f32 %v3276, %v3373
  %v3375 = vpop.f32.mrf.mxu0
  %3376 = vmatprep.mubr.f32.mxu0 0.0
  %3377 = vmatmul.mubr.f32.gmra.mxu0 %v3285
  %v3378 = vpop.f32.mrf.mxu0
  %v3379 = vadd.f32 %v3276, %v3378
  %v3380 = vpop.f32.mrf.mxu0
  %3381 = vmatprep.mubr.f32.mxu0 0.0
  %3382 = vmatmul.mubr.f32.gmra.mxu0 %v3288
  %v3383 = vpop.f32.mrf.mxu0
  %v3384 = vadd.f32 %v3276, %v3383
  %v3385 = vpop.f32.mrf.mxu0
  %3386 = vmatprep.mubr.f32.mxu0 0.0
  %3387 = vmatmul.mubr.f32.gmra.mxu0 %v3291
  %v3388 = vpop.f32.mrf.mxu0
  %v3389 = vadd.f32 %v3276, %v3388
  %v3390 = vpop.f32.mrf.mxu0
  %3391 = vmatprep.mubr.f32.mxu0 0.0
  %3392 = vmatmul.mubr.f32.gmra.mxu0 %v3294
  %v3393 = vpop.f32.mrf.mxu0
  %v3394 = vadd.f32 %v3276, %v3393
  %v3395 = vpop.f32.mrf.mxu0
  %3396 = vmatprep.mubr.f32.mxu0 0.0
  %3397 = vmatmul.mubr.f32.gmra.mxu0 %v3297
  %v3398 = vpop.f32.mrf.mxu0
  %v3399 = vadd.f32 %v3276, %v3398
  %v3400 = vpop.f32.mrf.mxu0
  %3401 = vmatprep.mubr.f32.mxu0 0.0
  %3402 = vmatmul.mubr.f32.gmra.mxu0 %v3300
  %v3403 = vpop.f32.mrf.mxu0
  %v3404 = vadd.f32 %v3276, %v3403
  %v3405 = vpop.f32.mrf.mxu0
  %3406 = vdwg.mxu0
  %3407 = vst [vmem:[%s18] sm:$0xff] %v3369
  %3408 = vst [vmem:[%s18 + $0x8] sm:$0xff] %v3374
  %3409 = vst [vmem:[%s18 + $0x10] sm:$0xff] %v3379
  %3410 = vst [vmem:[%s18 + $0x18] sm:$0xff] %v3384
  %3411 = vst [vmem:[%s18 + $0x20] sm:$0xff] %v3389
  %3412 = vst [vmem:[%s18 + $0x28] sm:$0xff] %v3394
  %3413 = vst [vmem:[%s18 + $0x30] sm:$0xff] %v3399
  %3414 = vst [vmem:[%s18 + $0x38] sm:$0xff] %v3404
  %v3415 = vsel %vm80, %v3261, %v3252
  %v3416 = vsel %vm847, %v3415, %v2192
  %vm3417 = vcmask 785408
  %v3418 = vsel %vm3417, %v3416, 0.0
  %3419 = vst [vmem:[%s19] sm:$0xff] %v3418
  // Predicated region
  $region74: #{vae_forward.1} parent=0 // pred_check
    _
  $region75: #{vae_forward.1} parent=0 // pred_check_branch
    %3421 = sbr.rel (0) target = $region77
  $region76: #{vae_forward.1} parent=0 // pred_region
    _
  $region77: #{vae_forward.1} parent=0 // pred_fallthru
    _
  // Predicated region
  $region78: #{vae_forward.1} parent=0 // pred_check
    _
  $region79: #{vae_forward.1} parent=0 // pred_check_branch
    %3423 = sbr.rel (0) target = $region81
  $region80: #{vae_forward.1} parent=0 // pred_region
    _
  $region81: #{vae_forward.1} parent=0 // pred_fallthru
    _
  // Predicated region
  $region82: #{vae_forward.1} parent=0 // pred_check
    _
  $region83: #{vae_forward.1} parent=0 // pred_check_branch
    %3425 = sbr.rel (0) target = $region85
  $region84: #{vae_forward.1} parent=0 // pred_region
    _
  $region85: #{vae_forward.1} parent=0 // pred_fallthru
    _
  // Predicated region
  $region86: #{vae_forward.1} parent=0 // pred_check
    _
  $region87: #{vae_forward.1} parent=0 // pred_check_branch
    %3427 = sbr.rel (0) target = $region89
  $region88: #{vae_forward.1} parent=0 // pred_region
    _
  $region89: #{vae_forward.1} parent=0 // pred_fallthru
    _

</llo_original>
